<compile_context>
chip_gen: v5e
topology: v5e:2x2
jax: 0.10.0
libtpu: 0.0.40
codegen_flags: <defaults>
</compile_context>

<pallas_src>
import functools

import numpy as np
import jax
import jax.numpy as jnp
from jax import lax
from jax.experimental import pallas as pl
from jax.experimental.pallas import tpu as pltpu  # noqa: F401  (TPU backend)

EPS = 1e-5
SLOPE = 0.2
LANE = 128


def _round_up(x, m):
    return ((x + m - 1) // m) * m


# ---------------------------------------------------------------------------
# Fused Pallas kernel: entire discriminator forward in one call
# ---------------------------------------------------------------------------
def _disc_fused_kernel(p0_ref, w0_ref, b0_ref,
                       g1_ref, w1_ref, gm1_ref, bt1_ref,
                       g2_ref, w2_ref, gm2_ref, bt2_ref,
                       g3_ref, w3_ref,
                       o_ref, *, cfg1, cfg2, cfg3):
    # ---- Layer 0: conv as one MXU matmul (K pre-padded to 128) + bias + LReLU
    y0 = jnp.dot(p0_ref[...], w0_ref[...], preferred_element_type=jnp.float32)
    y0 = y0 + b0_ref[...]
    act = jnp.where(y0 >= 0, y0, SLOPE * y0)          # f32, padded lanes are 0

    def conv_taps(act_f32, g_ref, w_ref, n_taps, m_blk, c_out):
        """Conv as in-kernel im2col (one-hot gather matmul) + per-tap matmuls."""
        c_in = act_f32.shape[1]
        a16 = act_f32.astype(jnp.bfloat16)
        # Row gather (im2col incl. zero padding) via one-hot matmul -> exact.
        patches = jnp.dot(g_ref[...], a16, preferred_element_type=jnp.float32)
        acc = jnp.zeros((m_blk, c_out), jnp.float32)
        for t in range(n_taps):                       # static unroll (<=16)
            acc = acc + jnp.dot(
                patches[t * m_blk:(t + 1) * m_blk, :].astype(jnp.bfloat16),
                w_ref[t * c_in:(t + 1) * c_in, :],
                preferred_element_type=jnp.float32)
        return acc

    def bn_lrelu(y, m_real, gm_ref, bt_ref):
        # nn.BatchNorm2d training-mode forward: batch stats, biased variance.
        ys = y if m_real == y.shape[0] else y[:m_real, :]
        mean = jnp.mean(ys, axis=0, keepdims=True)
        var = jnp.mean((ys - mean) ** 2, axis=0, keepdims=True)
        y = (y - mean) * lax.rsqrt(var + EPS) * gm_ref[...] + bt_ref[...]
        return jnp.where(y >= 0, y, SLOPE * y)

    n_taps1, m_blk1, m_real1, c1 = cfg1
    n_taps2, m_blk2, m_real2, c2 = cfg2
    n_taps3, m_blk3, _m_real3, c3 = cfg3

    y1 = conv_taps(act, g1_ref, w1_ref, n_taps1, m_blk1, c1)
    act = bn_lrelu(y1, m_real1, gm1_ref, bt1_ref)

    y2 = conv_taps(act, g2_ref, w2_ref, n_taps2, m_blk2, c2)
    act = bn_lrelu(y2, m_real2, gm2_ref, bt2_ref)

    y3 = conv_taps(act, g3_ref, w3_ref, n_taps3, m_blk3, c3)   # no BN / no act
    o_ref[...] = y3.astype(o_ref.dtype)


# ---------------------------------------------------------------------------
# Static packing: weights -> [K, C_out] bf16, one-hot gather matrices, padding
# ---------------------------------------------------------------------------
def _tap_selection(n, h, w, k, s, p, m_in_pad):
    """One-hot row-selection matrices (stacked over kernel taps) for a conv."""
    ho = (h + 2 * p - k) // s + 1
    wo = (w + 2 * p - k) // s + 1
    m_out = n * ho * wo
    m_blk = _round_up(m_out, 8)
    taps, g_blocks = [], []
    for ki in range(k):
        for kj in range(k):
            g = np.zeros((m_blk, m_in_pad), np.float32)
            valid = False
            for nn in range(n):
                for oh in range(ho):
                    ih = oh * s - p + ki
                    if ih < 0 or ih >= h:
                        continue
                    for ow in range(wo):
                        iw = ow * s - p + kj
                        if iw < 0 or iw >= w:
                            continue
                        g[nn * ho * wo + oh * wo + ow,
                          nn * h * w + ih * w + iw] = 1.0
                        valid = True
            if valid:                       # drop taps that only read padding
                taps.append((ki, kj))
                g_blocks.append(g)
    return taps, np.concatenate(g_blocks, axis=0), ho, wo, m_out, m_blk


def pack_params(params, n, h, w, strides=(2, 2, 2, 1), pads=(1, 1, 1, 1)):
    """One-time packing of PyTorch-layout params into kernel operands."""
    assert len(params) == 4, "kernel is specialized to the default 4 layers"

    w0 = np.asarray(params[0]["w"])                    # [64, 3, 4, 4]
    c0_out, c_in0, k0, _ = w0.shape
    k0_flat = k0 * k0 * c_in0                          # 48
    k0_pad = _round_up(k0_flat, LANE)                  # 128
    c0_pad = _round_up(c0_out, LANE)                   # 128
    w0_2d = np.transpose(w0, (2, 3, 1, 0)).reshape(k0_flat, c0_out)
    w0_p = np.zeros((k0_pad, c0_pad), np.float32)
    w0_p[:k0_flat, :c0_out] = w0_2d
    b0_p = np.zeros((1, c0_pad), np.float32)
    b0_p[0, :c0_out] = np.asarray(params[0]["b"])

    ho = (h + 2 * pads[0] - k0) // strides[0] + 1
    wo = (w + 2 * pads[0] - k0) // strides[0] + 1
    m_prev = n * ho * wo
    m_prev_blk = _round_up(m_prev, 8)
    c_prev_pad, c_prev_real = c0_pad, c0_out
    h_prev, w_prev = ho, wo

    packed = dict(
        w0=jnp.asarray(w0_p, jnp.bfloat16),
        b0=jnp.asarray(b0_p, jnp.float32),
        k0=k0, s0=strides[0], p0=pads[0],
        k0_flat=k0_flat, k0_pad=k0_pad,
        m0=m_prev, m0_blk=m_prev_blk,
    )

    layers = []
    for li in range(1, len(params)):
        wl = np.asarray(params[li]["w"])               # [C_out, C_in, k, k]
        c_out, c_in, k, _ = wl.shape
        assert c_in == c_prev_real
        s, p = strides[li], pads[li]
        c_out_pad = _round_up(c_out, LANE)
        taps, g, ho, wo, m_out, m_blk = _tap_selection(
            n, h_prev, w_prev, k, s, p, m_prev_blk)
        wblocks = np.zeros((len(taps) * c_prev_pad, c_out_pad), np.float32)
        for t, (ki, kj) in enumerate(taps):
            wblocks[t * c_prev_pad:t * c_prev_pad + c_in, :c_out] = \
                wl[:, :, ki, kj].T
        use_bn = (li != len(params) - 1)
        gm = np.zeros((1, c_out_pad), np.float32)
        bt = np.zeros((1, c_out_pad), np.float32)
        if use_bn:
            gm[0, :c_out] = np.asarray(params[li]["gamma"])
            bt[0, :c_out] = np.asarray(params[li]["beta"])
        layers.append(dict(
            g=jnp.asarray(g, jnp.bfloat16),
            w=jnp.asarray(wblocks, jnp.bfloat16),
            gamma=jnp.asarray(gm, jnp.float32),
            beta=jnp.asarray(bt, jnp.float32),
            cfg=(len(taps), m_blk, m_out, c_out_pad),
        ))
        h_prev, w_prev = ho, wo
        m_prev, m_prev_blk = m_out, m_blk
        c_prev_pad, c_prev_real = c_out_pad, c_out

    packed["layers"] = layers
    packed["out_spatial"] = (h_prev, w_prev)
    packed["out_m"] = m_prev
    packed["out_c"] = c_prev_real
    return packed


# ---------------------------------------------------------------------------
# Wrapper: layer-0 im2col (tiny, 3 channels) + single fused pallas_call
# ---------------------------------------------------------------------------
def _im2col_l0(x_nhwc, k, stride, pad):
    n, h, w, c = x_nhwc.shape
    xp = jnp.pad(x_nhwc, ((0, 0), (pad, pad), (pad, pad), (0, 0)))
    ho = (h + 2 * pad - k) // stride + 1
    wo = (w + 2 * pad - k) // stride + 1
    pats = []
    for ki in range(k):
        for kj in range(k):
            pats.append(xp[:, ki:ki + stride * (ho - 1) + 1:stride,
                            kj:kj + stride * (wo - 1) + 1:stride, :])
    pats = jnp.stack(pats, axis=3)                     # [N, Ho, Wo, k*k, C]
    return pats.reshape(n * ho * wo, k * k * c)


def discriminator_forward(x_nchw, packed):
    n = x_nchw.shape[0]
    x = jnp.transpose(x_nchw, (0, 2, 3, 1)).astype(jnp.float32)   # NCHW->NHWC

    patches = _im2col_l0(x, packed["k0"], packed["s0"], packed["p0"])
    m0, k0_flat = patches.shape
    assert m0 == packed["m0"] and k0_flat == packed["k0_flat"]
    patches = jnp.pad(patches, ((0, packed["m0_blk"] - m0),
                                (0, packed["k0_pad"] - k0_flat)))
    patches = patches.astype(jnp.bfloat16)

    L = packed["layers"]
    cfg1, cfg2, cfg3 = L[0]["cfg"], L[1]["cfg"], L[2]["cfg"]
    kernel = functools.partial(_disc_fused_kernel,
                               cfg1=cfg1, cfg2=cfg2, cfg3=cfg3)

    # Single no-grid pallas_call: every operand is a whole-array VMEM block
    # (total ~2 MiB), activations never touch HBM between layers.
    out = pl.pallas_call(
        kernel,
        out_shape=jax.ShapeDtypeStruct((cfg3[1], cfg3[3]), jnp.float32),
    )(patches, packed["w0"], packed["b0"],
      L[0]["g"], L[0]["w"], L[0]["gamma"], L[0]["beta"],
      L[1]["g"], L[1]["w"], L[1]["gamma"], L[1]["beta"],
      L[2]["g"], L[2]["w"])

    hf, wf = packed["out_spatial"]
    out = out[:packed["out_m"], :packed["out_c"]]      # drop row/lane padding
    out = out.reshape(n, hf, wf, packed["out_c"])
    return jnp.transpose(out, (0, 3, 1, 2))            # NHWC -> NCHW


# ---------------------------------------------------------------------------
# Parameters (deterministic, matching the module's __init__ shapes)
# ---------------------------------------------------------------------------
def init_params(key, im_channels=3, conv_channels=(64, 128, 256),
                kernels=(4, 4, 4, 4)):
    dims = [im_channels] + list(conv_channels) + [1]
    params = []
    for i in range(len(dims) - 1):
        key, k1, k2, k3, k4 = jax.random.split(key, 5)
        w = 0.05 * jax.random.normal(
            k1, (dims[i + 1], dims[i], kernels[i], kernels[i]), jnp.float32)
        b = (0.05 * jax.random.normal(k2, (dims[i + 1],), jnp.float32)
             if i == 0 else None)
        gamma = 1.0 + 0.1 * jax.random.normal(k3, (dims[i + 1],), jnp.float32)
        beta = 0.1 * jax.random.normal(k4, (dims[i + 1],), jnp.float32)
        params.append(dict(w=w, b=b, gamma=gamma, beta=beta))
    return params


# ---------------------------------------------------------------------------
# Pure-JAX reference (correctness check only)
# ---------------------------------------------------------------------------
def _reference_forward(x_nchw, params, strides=(2, 2, 2, 1), pads=(1, 1, 1, 1)):
    n_layers = len(params)
    out = x_nchw.astype(jnp.float32)
    for i, p in enumerate(params):
        out = lax.conv_general_dilated(
            out, p["w"], (strides[i], strides[i]),
            [(pads[i], pads[i]), (pads[i], pads[i])],
            dimension_numbers=("NCHW", "OIHW", "NCHW"))
        if i == 0:
            out = out + p["b"][None, :, None, None]
        if i != 0 and i != n_layers - 1:
            mean = jnp.mean(out, axis=(0, 2, 3), keepdims=True)
            var = jnp.mean((out - mean) ** 2, axis=(0, 2, 3), keepdims=True)
            out = (out - mean) * lax.rsqrt(var + EPS)
            out = out * p["gamma"][None, :, None, None] + p["beta"][None, :, None, None]
        if i != n_layers - 1:
            out = jnp.where(out >= 0, out, SLOPE * out)
    return out


if __name__ == "__main__":
    key = jax.random.PRNGKey(0)
    kp, kx = jax.random.split(key)
    params = init_params(kp)

    N, C, H, W = 2, 3, 16, 16
    x = jax.random.normal(kx, (N, C, H, W), jnp.float32)

    packed = pack_params(params, N, H, W)              # one-time packing
    fwd = jax.jit(lambda xx: discriminator_forward(xx, packed))

    out = jax.block_until_ready(fwd(x))
    ref = jax.block_until_ready(_reference_forward(x, params))

    assert out.shape == (N, 1, 1, 1), out.shape
    max_err = float(jnp.max(jnp.abs(out - ref)))
    assert jnp.allclose(out, ref, atol=5e-2, rtol=5e-2), f"max abs err {max_err}"

    print("KERNEL_OK")
</pallas_src>

<mosaic_0001>
module attributes {stable_mosaic.version = 11 : i64} {
  func.func @_disc_fused_kernel(%arg0: memref<128x128xbf16, #tpu.memory_space<vmem>>, %arg1: memref<128x128xbf16, #tpu.memory_space<vmem>>, %arg2: memref<1x128xf32, #tpu.memory_space<vmem>>, %arg3: memref<512x128xbf16, #tpu.memory_space<vmem>>, %arg4: memref<2048x128xbf16, #tpu.memory_space<vmem>>, %arg5: memref<1x128xf32, #tpu.memory_space<vmem>>, %arg6: memref<1x128xf32, #tpu.memory_space<vmem>>, %arg7: memref<128x32xbf16, #tpu.memory_space<vmem>>, %arg8: memref<2048x256xbf16, #tpu.memory_space<vmem>>, %arg9: memref<1x256xf32, #tpu.memory_space<vmem>>, %arg10: memref<1x256xf32, #tpu.memory_space<vmem>>, %arg11: memref<32x8xbf16, #tpu.memory_space<vmem>>, %arg12: memref<1024x128xbf16, #tpu.memory_space<vmem>>, %arg13: memref<8x128xf32, #tpu.memory_space<vmem>>) attributes {dimension_semantics = [], scalar_prefetch = 0 : i64, scratch_operands = 0 : i64, tpu.core_type = #tpu.core_type<tc>} {
    %c0 = arith.constant 0 : index
    %c0_0 = arith.constant 0 : index
    %0 = vector.load %arg0[%c0, %c0_0] : memref<128x128xbf16, #tpu.memory_space<vmem>>, vector<128x128xbf16>
    %c0_1 = arith.constant 0 : index
    %c0_2 = arith.constant 0 : index
    %1 = vector.load %arg1[%c0_1, %c0_2] : memref<128x128xbf16, #tpu.memory_space<vmem>>, vector<128x128xbf16>
    %cst = arith.constant dense<0.000000e+00> : vector<128x128xf32>
    %2 = tpu.matmul %0, %1, %cst {dimension_numbers = #tpu.dot_dimension_numbers<[1], [0], [0], [1], [0, 0, 1, 1], [], []>} : vector<128x128xbf16>, vector<128x128xbf16>, vector<128x128xf32> -> vector<128x128xf32>
    %c0_3 = arith.constant 0 : index
    %c0_4 = arith.constant 0 : index
    %3 = vector.load %arg2[%c0_3, %c0_4] : memref<1x128xf32, #tpu.memory_space<vmem>>, vector<1x128xf32>
    %4 = vector.broadcast %3 : vector<1x128xf32> to vector<128x128xf32>
    %5 = arith.addf %2, %4 : vector<128x128xf32>
    %cst_5 = arith.constant 0.000000e+00 : f32
    %6 = vector.broadcast %cst_5 : f32 to vector<128x128xf32>
    %7 = arith.cmpf oge, %5, %6 : vector<128x128xf32>
    %cst_6 = arith.constant 2.000000e-01 : f32
    %8 = vector.broadcast %cst_6 : f32 to vector<128x128xf32>
    %9 = arith.mulf %8, %5 : vector<128x128xf32>
    %10 = arith.select %7, %5, %9 : vector<128x128xi1>, vector<128x128xf32>
    %11 = arith.truncf %10 : vector<128x128xf32> to vector<128x128xbf16>
    %c0_7 = arith.constant 0 : index
    %c0_8 = arith.constant 0 : index
    %12 = vector.load %arg3[%c0_7, %c0_8] : memref<512x128xbf16, #tpu.memory_space<vmem>>, vector<512x128xbf16>
    %cst_9 = arith.constant dense<0.000000e+00> : vector<512x128xf32>
    %13 = tpu.matmul %12, %11, %cst_9 {dimension_numbers = #tpu.dot_dimension_numbers<[1], [0], [0], [1], [0, 0, 1, 1], [], []>} : vector<512x128xbf16>, vector<128x128xbf16>, vector<512x128xf32> -> vector<512x128xf32>
    %cst_10 = arith.constant 0.000000e+00 : f32
    %14 = vector.broadcast %cst_10 : f32 to vector<32x128xf32>
    %15 = vector.extract_strided_slice %13 {offsets = [0, 0], sizes = [32, 128], strides = [1, 1]} : vector<512x128xf32> to vector<32x128xf32>
    %16 = arith.truncf %15 : vector<32x128xf32> to vector<32x128xbf16>
    %c0_11 = arith.constant 0 : index
    %c0_12 = arith.constant 0 : index
    %17 = vector.load %arg4[%c0_11, %c0_12] : memref<2048x128xbf16, #tpu.memory_space<vmem>>, vector<128x128xbf16>
    %cst_13 = arith.constant dense<0.000000e+00> : vector<32x128xf32>
    %18 = tpu.matmul %16, %17, %cst_13 {dimension_numbers = #tpu.dot_dimension_numbers<[1], [0], [0], [1], [0, 0, 1, 1], [], []>} : vector<32x128xbf16>, vector<128x128xbf16>, vector<32x128xf32> -> vector<32x128xf32>
    %19 = arith.addf %14, %18 : vector<32x128xf32>
    %20 = vector.extract_strided_slice %13 {offsets = [32, 0], sizes = [32, 128], strides = [1, 1]} : vector<512x128xf32> to vector<32x128xf32>
    %21 = arith.truncf %20 : vector<32x128xf32> to vector<32x128xbf16>
    %c128 = arith.constant 128 : index
    %c0_14 = arith.constant 0 : index
    %22 = vector.load %arg4[%c128, %c0_14] : memref<2048x128xbf16, #tpu.memory_space<vmem>>, vector<128x128xbf16>
    %cst_15 = arith.constant dense<0.000000e+00> : vector<32x128xf32>
    %23 = tpu.matmul %21, %22, %cst_15 {dimension_numbers = #tpu.dot_dimension_numbers<[1], [0], [0], [1], [0, 0, 1, 1], [], []>} : vector<32x128xbf16>, vector<128x128xbf16>, vector<32x128xf32> -> vector<32x128xf32>
    %24 = arith.addf %19, %23 : vector<32x128xf32>
    %25 = vector.extract_strided_slice %13 {offsets = [64, 0], sizes = [32, 128], strides = [1, 1]} : vector<512x128xf32> to vector<32x128xf32>
    %26 = arith.truncf %25 : vector<32x128xf32> to vector<32x128xbf16>
    %c256 = arith.constant 256 : index
    %c0_16 = arith.constant 0 : index
    %27 = vector.load %arg4[%c256, %c0_16] : memref<2048x128xbf16, #tpu.memory_space<vmem>>, vector<128x128xbf16>
    %cst_17 = arith.constant dense<0.000000e+00> : vector<32x128xf32>
    %28 = tpu.matmul %26, %27, %cst_17 {dimension_numbers = #tpu.dot_dimension_numbers<[1], [0], [0], [1], [0, 0, 1, 1], [], []>} : vector<32x128xbf16>, vector<128x128xbf16>, vector<32x128xf32> -> vector<32x128xf32>
    %29 = arith.addf %24, %28 : vector<32x128xf32>
    %30 = vector.extract_strided_slice %13 {offsets = [96, 0], sizes = [32, 128], strides = [1, 1]} : vector<512x128xf32> to vector<32x128xf32>
    %31 = arith.truncf %30 : vector<32x128xf32> to vector<32x128xbf16>
    %c384 = arith.constant 384 : index
    %c0_18 = arith.constant 0 : index
    %32 = vector.load %arg4[%c384, %c0_18] : memref<2048x128xbf16, #tpu.memory_space<vmem>>, vector<128x128xbf16>
    %cst_19 = arith.constant dense<0.000000e+00> : vector<32x128xf32>
    %33 = tpu.matmul %31, %32, %cst_19 {dimension_numbers = #tpu.dot_dimension_numbers<[1], [0], [0], [1], [0, 0, 1, 1], [], []>} : vector<32x128xbf16>, vector<128x128xbf16>, vector<32x128xf32> -> vector<32x128xf32>
    %34 = arith.addf %29, %33 : vector<32x128xf32>
    %35 = vector.extract_strided_slice %13 {offsets = [128, 0], sizes = [32, 128], strides = [1, 1]} : vector<512x128xf32> to vector<32x128xf32>
    %36 = arith.truncf %35 : vector<32x128xf32> to vector<32x128xbf16>
    %c512 = arith.constant 512 : index
    %c0_20 = arith.constant 0 : index
    %37 = vector.load %arg4[%c512, %c0_20] : memref<2048x128xbf16, #tpu.memory_space<vmem>>, vector<128x128xbf16>
    %cst_21 = arith.constant dense<0.000000e+00> : vector<32x128xf32>
    %38 = tpu.matmul %36, %37, %cst_21 {dimension_numbers = #tpu.dot_dimension_numbers<[1], [0], [0], [1], [0, 0, 1, 1], [], []>} : vector<32x128xbf16>, vector<128x128xbf16>, vector<32x128xf32> -> vector<32x128xf32>
    %39 = arith.addf %34, %38 : vector<32x128xf32>
    %40 = vector.extract_strided_slice %13 {offsets = [160, 0], sizes = [32, 128], strides = [1, 1]} : vector<512x128xf32> to vector<32x128xf32>
    %41 = arith.truncf %40 : vector<32x128xf32> to vector<32x128xbf16>
    %c640 = arith.constant 640 : index
    %c0_22 = arith.constant 0 : index
    %42 = vector.load %arg4[%c640, %c0_22] : memref<2048x128xbf16, #tpu.memory_space<vmem>>, vector<128x128xbf16>
    %cst_23 = arith.constant dense<0.000000e+00> : vector<32x128xf32>
    %43 = tpu.matmul %41, %42, %cst_23 {dimension_numbers = #tpu.dot_dimension_numbers<[1], [0], [0], [1], [0, 0, 1, 1], [], []>} : vector<32x128xbf16>, vector<128x128xbf16>, vector<32x128xf32> -> vector<32x128xf32>
    %44 = arith.addf %39, %43 : vector<32x128xf32>
    %45 = vector.extract_strided_slice %13 {offsets = [192, 0], sizes = [32, 128], strides = [1, 1]} : vector<512x128xf32> to vector<32x128xf32>
    %46 = arith.truncf %45 : vector<32x128xf32> to vector<32x128xbf16>
    %c768 = arith.constant 768 : index
    %c0_24 = arith.constant 0 : index
    %47 = vector.load %arg4[%c768, %c0_24] : memref<2048x128xbf16, #tpu.memory_space<vmem>>, vector<128x128xbf16>
    %cst_25 = arith.constant dense<0.000000e+00> : vector<32x128xf32>
    %48 = tpu.matmul %46, %47, %cst_25 {dimension_numbers = #tpu.dot_dimension_numbers<[1], [0], [0], [1], [0, 0, 1, 1], [], []>} : vector<32x128xbf16>, vector<128x128xbf16>, vector<32x128xf32> -> vector<32x128xf32>
    %49 = arith.addf %44, %48 : vector<32x128xf32>
    %50 = vector.extract_strided_slice %13 {offsets = [224, 0], sizes = [32, 128], strides = [1, 1]} : vector<512x128xf32> to vector<32x128xf32>
    %51 = arith.truncf %50 : vector<32x128xf32> to vector<32x128xbf16>
    %c896 = arith.constant 896 : index
    %c0_26 = arith.constant 0 : index
    %52 = vector.load %arg4[%c896, %c0_26] : memref<2048x128xbf16, #tpu.memory_space<vmem>>, vector<128x128xbf16>
    %cst_27 = arith.constant dense<0.000000e+00> : vector<32x128xf32>
    %53 = tpu.matmul %51, %52, %cst_27 {dimension_numbers = #tpu.dot_dimension_numbers<[1], [0], [0], [1], [0, 0, 1, 1], [], []>} : vector<32x128xbf16>, vector<128x128xbf16>, vector<32x128xf32> -> vector<32x128xf32>
    %54 = arith.addf %49, %53 : vector<32x128xf32>
    %55 = vector.extract_strided_slice %13 {offsets = [256, 0], sizes = [32, 128], strides = [1, 1]} : vector<512x128xf32> to vector<32x128xf32>
    %56 = arith.truncf %55 : vector<32x128xf32> to vector<32x128xbf16>
    %c1024 = arith.constant 1024 : index
    %c0_28 = arith.constant 0 : index
    %57 = vector.load %arg4[%c1024, %c0_28] : memref<2048x128xbf16, #tpu.memory_space<vmem>>, vector<128x128xbf16>
    %cst_29 = arith.constant dense<0.000000e+00> : vector<32x128xf32>
    %58 = tpu.matmul %56, %57, %cst_29 {dimension_numbers = #tpu.dot_dimension_numbers<[1], [0], [0], [1], [0, 0, 1, 1], [], []>} : vector<32x128xbf16>, vector<128x128xbf16>, vector<32x128xf32> -> vector<32x128xf32>
    %59 = arith.addf %54, %58 : vector<32x128xf32>
    %60 = vector.extract_strided_slice %13 {offsets = [288, 0], sizes = [32, 128], strides = [1, 1]} : vector<512x128xf32> to vector<32x128xf32>
    %61 = arith.truncf %60 : vector<32x128xf32> to vector<32x128xbf16>
    %c1152 = arith.constant 1152 : index
    %c0_30 = arith.constant 0 : index
    %62 = vector.load %arg4[%c1152, %c0_30] : memref<2048x128xbf16, #tpu.memory_space<vmem>>, vector<128x128xbf16>
    %cst_31 = arith.constant dense<0.000000e+00> : vector<32x128xf32>
    %63 = tpu.matmul %61, %62, %cst_31 {dimension_numbers = #tpu.dot_dimension_numbers<[1], [0], [0], [1], [0, 0, 1, 1], [], []>} : vector<32x128xbf16>, vector<128x128xbf16>, vector<32x128xf32> -> vector<32x128xf32>
    %64 = arith.addf %59, %63 : vector<32x128xf32>
    %65 = vector.extract_strided_slice %13 {offsets = [320, 0], sizes = [32, 128], strides = [1, 1]} : vector<512x128xf32> to vector<32x128xf32>
    %66 = arith.truncf %65 : vector<32x128xf32> to vector<32x128xbf16>
    %c1280 = arith.constant 1280 : index
    %c0_32 = arith.constant 0 : index
    %67 = vector.load %arg4[%c1280, %c0_32] : memref<2048x128xbf16, #tpu.memory_space<vmem>>, vector<128x128xbf16>
    %cst_33 = arith.constant dense<0.000000e+00> : vector<32x128xf32>
    %68 = tpu.matmul %66, %67, %cst_33 {dimension_numbers = #tpu.dot_dimension_numbers<[1], [0], [0], [1], [0, 0, 1, 1], [], []>} : vector<32x128xbf16>, vector<128x128xbf16>, vector<32x128xf32> -> vector<32x128xf32>
    %69 = arith.addf %64, %68 : vector<32x128xf32>
    %70 = vector.extract_strided_slice %13 {offsets = [352, 0], sizes = [32, 128], strides = [1, 1]} : vector<512x128xf32> to vector<32x128xf32>
    %71 = arith.truncf %70 : vector<32x128xf32> to vector<32x128xbf16>
    %c1408 = arith.constant 1408 : index
    %c0_34 = arith.constant 0 : index
    %72 = vector.load %arg4[%c1408, %c0_34] : memref<2048x128xbf16, #tpu.memory_space<vmem>>, vector<128x128xbf16>
    %cst_35 = arith.constant dense<0.000000e+00> : vector<32x128xf32>
    %73 = tpu.matmul %71, %72, %cst_35 {dimension_numbers = #tpu.dot_dimension_numbers<[1], [0], [0], [1], [0, 0, 1, 1], [], []>} : vector<32x128xbf16>, vector<128x128xbf16>, vector<32x128xf32> -> vector<32x128xf32>
    %74 = arith.addf %69, %73 : vector<32x128xf32>
    %75 = vector.extract_strided_slice %13 {offsets = [384, 0], sizes = [32, 128], strides = [1, 1]} : vector<512x128xf32> to vector<32x128xf32>
    %76 = arith.truncf %75 : vector<32x128xf32> to vector<32x128xbf16>
    %c1536 = arith.constant 1536 : index
    %c0_36 = arith.constant 0 : index
    %77 = vector.load %arg4[%c1536, %c0_36] : memref<2048x128xbf16, #tpu.memory_space<vmem>>, vector<128x128xbf16>
    %cst_37 = arith.constant dense<0.000000e+00> : vector<32x128xf32>
    %78 = tpu.matmul %76, %77, %cst_37 {dimension_numbers = #tpu.dot_dimension_numbers<[1], [0], [0], [1], [0, 0, 1, 1], [], []>} : vector<32x128xbf16>, vector<128x128xbf16>, vector<32x128xf32> -> vector<32x128xf32>
    %79 = arith.addf %74, %78 : vector<32x128xf32>
    %80 = vector.extract_strided_slice %13 {offsets = [416, 0], sizes = [32, 128], strides = [1, 1]} : vector<512x128xf32> to vector<32x128xf32>
    %81 = arith.truncf %80 : vector<32x128xf32> to vector<32x128xbf16>
    %c1664 = arith.constant 1664 : index
    %c0_38 = arith.constant 0 : index
    %82 = vector.load %arg4[%c1664, %c0_38] : memref<2048x128xbf16, #tpu.memory_space<vmem>>, vector<128x128xbf16>
    %cst_39 = arith.constant dense<0.000000e+00> : vector<32x128xf32>
    %83 = tpu.matmul %81, %82, %cst_39 {dimension_numbers = #tpu.dot_dimension_numbers<[1], [0], [0], [1], [0, 0, 1, 1], [], []>} : vector<32x128xbf16>, vector<128x128xbf16>, vector<32x128xf32> -> vector<32x128xf32>
    %84 = arith.addf %79, %83 : vector<32x128xf32>
    %85 = vector.extract_strided_slice %13 {offsets = [448, 0], sizes = [32, 128], strides = [1, 1]} : vector<512x128xf32> to vector<32x128xf32>
    %86 = arith.truncf %85 : vector<32x128xf32> to vector<32x128xbf16>
    %c1792 = arith.constant 1792 : index
    %c0_40 = arith.constant 0 : index
    %87 = vector.load %arg4[%c1792, %c0_40] : memref<2048x128xbf16, #tpu.memory_space<vmem>>, vector<128x128xbf16>
    %cst_41 = arith.constant dense<0.000000e+00> : vector<32x128xf32>
    %88 = tpu.matmul %86, %87, %cst_41 {dimension_numbers = #tpu.dot_dimension_numbers<[1], [0], [0], [1], [0, 0, 1, 1], [], []>} : vector<32x128xbf16>, vector<128x128xbf16>, vector<32x128xf32> -> vector<32x128xf32>
    %89 = arith.addf %84, %88 : vector<32x128xf32>
    %90 = vector.extract_strided_slice %13 {offsets = [480, 0], sizes = [32, 128], strides = [1, 1]} : vector<512x128xf32> to vector<32x128xf32>
    %91 = arith.truncf %90 : vector<32x128xf32> to vector<32x128xbf16>
    %c1920 = arith.constant 1920 : index
    %c0_42 = arith.constant 0 : index
    %92 = vector.load %arg4[%c1920, %c0_42] : memref<2048x128xbf16, #tpu.memory_space<vmem>>, vector<128x128xbf16>
    %cst_43 = arith.constant dense<0.000000e+00> : vector<32x128xf32>
    %93 = tpu.matmul %91, %92, %cst_43 {dimension_numbers = #tpu.dot_dimension_numbers<[1], [0], [0], [1], [0, 0, 1, 1], [], []>} : vector<32x128xbf16>, vector<128x128xbf16>, vector<32x128xf32> -> vector<32x128xf32>
    %94 = arith.addf %89, %93 : vector<32x128xf32>
    %cst_44 = arith.constant dense<0.000000e+00> : vector<128xf32>
    %95 = vector.multi_reduction <add>, %94, %cst_44 [0] : vector<32x128xf32> to vector<128xf32>
    %96 = vector.shape_cast %95 : vector<128xf32> to vector<1x128xf32>
    %cst_45 = arith.constant 3.200000e+01 : f32
    %97 = vector.broadcast %cst_45 : f32 to vector<1x128xf32>
    %98 = arith.divf %96, %97 : vector<1x128xf32>
    %99 = vector.broadcast %98 : vector<1x128xf32> to vector<32x128xf32>
    %100 = arith.subf %94, %99 : vector<32x128xf32>
    %101 = arith.mulf %100, %100 : vector<32x128xf32>
    %cst_46 = arith.constant dense<0.000000e+00> : vector<128xf32>
    %102 = vector.multi_reduction <add>, %101, %cst_46 [0] : vector<32x128xf32> to vector<128xf32>
    %103 = vector.shape_cast %102 : vector<128xf32> to vector<1x128xf32>
    %cst_47 = arith.constant 3.200000e+01 : f32
    %104 = vector.broadcast %cst_47 : f32 to vector<1x128xf32>
    %105 = arith.divf %103, %104 : vector<1x128xf32>
    %106 = vector.broadcast %98 : vector<1x128xf32> to vector<32x128xf32>
    %107 = arith.subf %94, %106 : vector<32x128xf32>
    %cst_48 = arith.constant 9.99999974E-6 : f32
    %108 = vector.broadcast %cst_48 : f32 to vector<1x128xf32>
    %109 = arith.addf %105, %108 : vector<1x128xf32>
    %110 = math.rsqrt %109 : vector<1x128xf32>
    %111 = vector.broadcast %110 : vector<1x128xf32> to vector<32x128xf32>
    %112 = arith.mulf %107, %111 : vector<32x128xf32>
    %c0_49 = arith.constant 0 : index
    %c0_50 = arith.constant 0 : index
    %113 = vector.load %arg5[%c0_49, %c0_50] : memref<1x128xf32, #tpu.memory_space<vmem>>, vector<1x128xf32>
    %114 = vector.broadcast %113 : vector<1x128xf32> to vector<32x128xf32>
    %115 = arith.mulf %112, %114 : vector<32x128xf32>
    %c0_51 = arith.constant 0 : index
    %c0_52 = arith.constant 0 : index
    %116 = vector.load %arg6[%c0_51, %c0_52] : memref<1x128xf32, #tpu.memory_space<vmem>>, vector<1x128xf32>
    %117 = vector.broadcast %116 : vector<1x128xf32> to vector<32x128xf32>
    %118 = arith.addf %115, %117 : vector<32x128xf32>
    %cst_53 = arith.constant 0.000000e+00 : f32
    %119 = vector.broadcast %cst_53 : f32 to vector<32x128xf32>
    %120 = arith.cmpf oge, %118, %119 : vector<32x128xf32>
    %cst_54 = arith.constant 2.000000e-01 : f32
    %121 = vector.broadcast %cst_54 : f32 to vector<32x128xf32>
    %122 = arith.mulf %121, %118 : vector<32x128xf32>
    %123 = arith.select %120, %118, %122 : vector<32x128xi1>, vector<32x128xf32>
    %124 = arith.truncf %123 : vector<32x128xf32> to vector<32x128xbf16>
    %c0_55 = arith.constant 0 : index
    %c0_56 = arith.constant 0 : index
    %125 = vector.load %arg7[%c0_55, %c0_56] : memref<128x32xbf16, #tpu.memory_space<vmem>>, vector<128x32xbf16>
    %cst_57 = arith.constant dense<0.000000e+00> : vector<128x128xf32>
    %126 = tpu.matmul %125, %124, %cst_57 {dimension_numbers = #tpu.dot_dimension_numbers<[1], [0], [0], [1], [0, 0, 1, 1], [], []>} : vector<128x32xbf16>, vector<32x128xbf16>, vector<128x128xf32> -> vector<128x128xf32>
    %cst_58 = arith.constant 0.000000e+00 : f32
    %127 = vector.broadcast %cst_58 : f32 to vector<8x256xf32>
    %128 = vector.extract_strided_slice %126 {offsets = [0, 0], sizes = [8, 128], strides = [1, 1]} : vector<128x128xf32> to vector<8x128xf32>
    %129 = arith.truncf %128 : vector<8x128xf32> to vector<8x128xbf16>
    %c0_59 = arith.constant 0 : index
    %c0_60 = arith.constant 0 : index
    %130 = vector.load %arg8[%c0_59, %c0_60] : memref<2048x256xbf16, #tpu.memory_space<vmem>>, vector<128x256xbf16>
    %cst_61 = arith.constant dense<0.000000e+00> : vector<8x256xf32>
    %131 = tpu.matmul %129, %130, %cst_61 {dimension_numbers = #tpu.dot_dimension_numbers<[1], [0], [0], [1], [0, 0, 1, 1], [], []>} : vector<8x128xbf16>, vector<128x256xbf16>, vector<8x256xf32> -> vector<8x256xf32>
    %132 = arith.addf %127, %131 : vector<8x256xf32>
    %133 = vector.extract_strided_slice %126 {offsets = [8, 0], sizes = [8, 128], strides = [1, 1]} : vector<128x128xf32> to vector<8x128xf32>
    %134 = arith.truncf %133 : vector<8x128xf32> to vector<8x128xbf16>
    %c128_62 = arith.constant 128 : index
    %c0_63 = arith.constant 0 : index
    %135 = vector.load %arg8[%c128_62, %c0_63] : memref<2048x256xbf16, #tpu.memory_space<vmem>>, vector<128x256xbf16>
    %cst_64 = arith.constant dense<0.000000e+00> : vector<8x256xf32>
    %136 = tpu.matmul %134, %135, %cst_64 {dimension_numbers = #tpu.dot_dimension_numbers<[1], [0], [0], [1], [0, 0, 1, 1], [], []>} : vector<8x128xbf16>, vector<128x256xbf16>, vector<8x256xf32> -> vector<8x256xf32>
    %137 = arith.addf %132, %136 : vector<8x256xf32>
    %138 = vector.extract_strided_slice %126 {offsets = [16, 0], sizes = [8, 128], strides = [1, 1]} : vector<128x128xf32> to vector<8x128xf32>
    %139 = arith.truncf %138 : vector<8x128xf32> to vector<8x128xbf16>
    %c256_65 = arith.constant 256 : index
    %c0_66 = arith.constant 0 : index
    %140 = vector.load %arg8[%c256_65, %c0_66] : memref<2048x256xbf16, #tpu.memory_space<vmem>>, vector<128x256xbf16>
    %cst_67 = arith.constant dense<0.000000e+00> : vector<8x256xf32>
    %141 = tpu.matmul %139, %140, %cst_67 {dimension_numbers = #tpu.dot_dimension_numbers<[1], [0], [0], [1], [0, 0, 1, 1], [], []>} : vector<8x128xbf16>, vector<128x256xbf16>, vector<8x256xf32> -> vector<8x256xf32>
    %142 = arith.addf %137, %141 : vector<8x256xf32>
    %143 = vector.extract_strided_slice %126 {offsets = [24, 0], sizes = [8, 128], strides = [1, 1]} : vector<128x128xf32> to vector<8x128xf32>
    %144 = arith.truncf %143 : vector<8x128xf32> to vector<8x128xbf16>
    %c384_68 = arith.constant 384 : index
    %c0_69 = arith.constant 0 : index
    %145 = vector.load %arg8[%c384_68, %c0_69] : memref<2048x256xbf16, #tpu.memory_space<vmem>>, vector<128x256xbf16>
    %cst_70 = arith.constant dense<0.000000e+00> : vector<8x256xf32>
    %146 = tpu.matmul %144, %145, %cst_70 {dimension_numbers = #tpu.dot_dimension_numbers<[1], [0], [0], [1], [0, 0, 1, 1], [], []>} : vector<8x128xbf16>, vector<128x256xbf16>, vector<8x256xf32> -> vector<8x256xf32>
    %147 = arith.addf %142, %146 : vector<8x256xf32>
    %148 = vector.extract_strided_slice %126 {offsets = [32, 0], sizes = [8, 128], strides = [1, 1]} : vector<128x128xf32> to vector<8x128xf32>
    %149 = arith.truncf %148 : vector<8x128xf32> to vector<8x128xbf16>
    %c512_71 = arith.constant 512 : index
    %c0_72 = arith.constant 0 : index
    %150 = vector.load %arg8[%c512_71, %c0_72] : memref<2048x256xbf16, #tpu.memory_space<vmem>>, vector<128x256xbf16>
    %cst_73 = arith.constant dense<0.000000e+00> : vector<8x256xf32>
    %151 = tpu.matmul %149, %150, %cst_73 {dimension_numbers = #tpu.dot_dimension_numbers<[1], [0], [0], [1], [0, 0, 1, 1], [], []>} : vector<8x128xbf16>, vector<128x256xbf16>, vector<8x256xf32> -> vector<8x256xf32>
    %152 = arith.addf %147, %151 : vector<8x256xf32>
    %153 = vector.extract_strided_slice %126 {offsets = [40, 0], sizes = [8, 128], strides = [1, 1]} : vector<128x128xf32> to vector<8x128xf32>
    %154 = arith.truncf %153 : vector<8x128xf32> to vector<8x128xbf16>
    %c640_74 = arith.constant 640 : index
    %c0_75 = arith.constant 0 : index
    %155 = vector.load %arg8[%c640_74, %c0_75] : memref<2048x256xbf16, #tpu.memory_space<vmem>>, vector<128x256xbf16>
    %cst_76 = arith.constant dense<0.000000e+00> : vector<8x256xf32>
    %156 = tpu.matmul %154, %155, %cst_76 {dimension_numbers = #tpu.dot_dimension_numbers<[1], [0], [0], [1], [0, 0, 1, 1], [], []>} : vector<8x128xbf16>, vector<128x256xbf16>, vector<8x256xf32> -> vector<8x256xf32>
    %157 = arith.addf %152, %156 : vector<8x256xf32>
    %158 = vector.extract_strided_slice %126 {offsets = [48, 0], sizes = [8, 128], strides = [1, 1]} : vector<128x128xf32> to vector<8x128xf32>
    %159 = arith.truncf %158 : vector<8x128xf32> to vector<8x128xbf16>
    %c768_77 = arith.constant 768 : index
    %c0_78 = arith.constant 0 : index
    %160 = vector.load %arg8[%c768_77, %c0_78] : memref<2048x256xbf16, #tpu.memory_space<vmem>>, vector<128x256xbf16>
    %cst_79 = arith.constant dense<0.000000e+00> : vector<8x256xf32>
    %161 = tpu.matmul %159, %160, %cst_79 {dimension_numbers = #tpu.dot_dimension_numbers<[1], [0], [0], [1], [0, 0, 1, 1], [], []>} : vector<8x128xbf16>, vector<128x256xbf16>, vector<8x256xf32> -> vector<8x256xf32>
    %162 = arith.addf %157, %161 : vector<8x256xf32>
    %163 = vector.extract_strided_slice %126 {offsets = [56, 0], sizes = [8, 128], strides = [1, 1]} : vector<128x128xf32> to vector<8x128xf32>
    %164 = arith.truncf %163 : vector<8x128xf32> to vector<8x128xbf16>
    %c896_80 = arith.constant 896 : index
    %c0_81 = arith.constant 0 : index
    %165 = vector.load %arg8[%c896_80, %c0_81] : memref<2048x256xbf16, #tpu.memory_space<vmem>>, vector<128x256xbf16>
    %cst_82 = arith.constant dense<0.000000e+00> : vector<8x256xf32>
    %166 = tpu.matmul %164, %165, %cst_82 {dimension_numbers = #tpu.dot_dimension_numbers<[1], [0], [0], [1], [0, 0, 1, 1], [], []>} : vector<8x128xbf16>, vector<128x256xbf16>, vector<8x256xf32> -> vector<8x256xf32>
    %167 = arith.addf %162, %166 : vector<8x256xf32>
    %168 = vector.extract_strided_slice %126 {offsets = [64, 0], sizes = [8, 128], strides = [1, 1]} : vector<128x128xf32> to vector<8x128xf32>
    %169 = arith.truncf %168 : vector<8x128xf32> to vector<8x128xbf16>
    %c1024_83 = arith.constant 1024 : index
    %c0_84 = arith.constant 0 : index
    %170 = vector.load %arg8[%c1024_83, %c0_84] : memref<2048x256xbf16, #tpu.memory_space<vmem>>, vector<128x256xbf16>
    %cst_85 = arith.constant dense<0.000000e+00> : vector<8x256xf32>
    %171 = tpu.matmul %169, %170, %cst_85 {dimension_numbers = #tpu.dot_dimension_numbers<[1], [0], [0], [1], [0, 0, 1, 1], [], []>} : vector<8x128xbf16>, vector<128x256xbf16>, vector<8x256xf32> -> vector<8x256xf32>
    %172 = arith.addf %167, %171 : vector<8x256xf32>
    %173 = vector.extract_strided_slice %126 {offsets = [72, 0], sizes = [8, 128], strides = [1, 1]} : vector<128x128xf32> to vector<8x128xf32>
    %174 = arith.truncf %173 : vector<8x128xf32> to vector<8x128xbf16>
    %c1152_86 = arith.constant 1152 : index
    %c0_87 = arith.constant 0 : index
    %175 = vector.load %arg8[%c1152_86, %c0_87] : memref<2048x256xbf16, #tpu.memory_space<vmem>>, vector<128x256xbf16>
    %cst_88 = arith.constant dense<0.000000e+00> : vector<8x256xf32>
    %176 = tpu.matmul %174, %175, %cst_88 {dimension_numbers = #tpu.dot_dimension_numbers<[1], [0], [0], [1], [0, 0, 1, 1], [], []>} : vector<8x128xbf16>, vector<128x256xbf16>, vector<8x256xf32> -> vector<8x256xf32>
    %177 = arith.addf %172, %176 : vector<8x256xf32>
    %178 = vector.extract_strided_slice %126 {offsets = [80, 0], sizes = [8, 128], strides = [1, 1]} : vector<128x128xf32> to vector<8x128xf32>
    %179 = arith.truncf %178 : vector<8x128xf32> to vector<8x128xbf16>
    %c1280_89 = arith.constant 1280 : index
    %c0_90 = arith.constant 0 : index
    %180 = vector.load %arg8[%c1280_89, %c0_90] : memref<2048x256xbf16, #tpu.memory_space<vmem>>, vector<128x256xbf16>
    %cst_91 = arith.constant dense<0.000000e+00> : vector<8x256xf32>
    %181 = tpu.matmul %179, %180, %cst_91 {dimension_numbers = #tpu.dot_dimension_numbers<[1], [0], [0], [1], [0, 0, 1, 1], [], []>} : vector<8x128xbf16>, vector<128x256xbf16>, vector<8x256xf32> -> vector<8x256xf32>
    %182 = arith.addf %177, %181 : vector<8x256xf32>
    %183 = vector.extract_strided_slice %126 {offsets = [88, 0], sizes = [8, 128], strides = [1, 1]} : vector<128x128xf32> to vector<8x128xf32>
    %184 = arith.truncf %183 : vector<8x128xf32> to vector<8x128xbf16>
    %c1408_92 = arith.constant 1408 : index
    %c0_93 = arith.constant 0 : index
    %185 = vector.load %arg8[%c1408_92, %c0_93] : memref<2048x256xbf16, #tpu.memory_space<vmem>>, vector<128x256xbf16>
    %cst_94 = arith.constant dense<0.000000e+00> : vector<8x256xf32>
    %186 = tpu.matmul %184, %185, %cst_94 {dimension_numbers = #tpu.dot_dimension_numbers<[1], [0], [0], [1], [0, 0, 1, 1], [], []>} : vector<8x128xbf16>, vector<128x256xbf16>, vector<8x256xf32> -> vector<8x256xf32>
    %187 = arith.addf %182, %186 : vector<8x256xf32>
    %188 = vector.extract_strided_slice %126 {offsets = [96, 0], sizes = [8, 128], strides = [1, 1]} : vector<128x128xf32> to vector<8x128xf32>
    %189 = arith.truncf %188 : vector<8x128xf32> to vector<8x128xbf16>
    %c1536_95 = arith.constant 1536 : index
    %c0_96 = arith.constant 0 : index
    %190 = vector.load %arg8[%c1536_95, %c0_96] : memref<2048x256xbf16, #tpu.memory_space<vmem>>, vector<128x256xbf16>
    %cst_97 = arith.constant dense<0.000000e+00> : vector<8x256xf32>
    %191 = tpu.matmul %189, %190, %cst_97 {dimension_numbers = #tpu.dot_dimension_numbers<[1], [0], [0], [1], [0, 0, 1, 1], [], []>} : vector<8x128xbf16>, vector<128x256xbf16>, vector<8x256xf32> -> vector<8x256xf32>
    %192 = arith.addf %187, %191 : vector<8x256xf32>
    %193 = vector.extract_strided_slice %126 {offsets = [104, 0], sizes = [8, 128], strides = [1, 1]} : vector<128x128xf32> to vector<8x128xf32>
    %194 = arith.truncf %193 : vector<8x128xf32> to vector<8x128xbf16>
    %c1664_98 = arith.constant 1664 : index
    %c0_99 = arith.constant 0 : index
    %195 = vector.load %arg8[%c1664_98, %c0_99] : memref<2048x256xbf16, #tpu.memory_space<vmem>>, vector<128x256xbf16>
    %cst_100 = arith.constant dense<0.000000e+00> : vector<8x256xf32>
    %196 = tpu.matmul %194, %195, %cst_100 {dimension_numbers = #tpu.dot_dimension_numbers<[1], [0], [0], [1], [0, 0, 1, 1], [], []>} : vector<8x128xbf16>, vector<128x256xbf16>, vector<8x256xf32> -> vector<8x256xf32>
    %197 = arith.addf %192, %196 : vector<8x256xf32>
    %198 = vector.extract_strided_slice %126 {offsets = [112, 0], sizes = [8, 128], strides = [1, 1]} : vector<128x128xf32> to vector<8x128xf32>
    %199 = arith.truncf %198 : vector<8x128xf32> to vector<8x128xbf16>
    %c1792_101 = arith.constant 1792 : index
    %c0_102 = arith.constant 0 : index
    %200 = vector.load %arg8[%c1792_101, %c0_102] : memref<2048x256xbf16, #tpu.memory_space<vmem>>, vector<128x256xbf16>
    %cst_103 = arith.constant dense<0.000000e+00> : vector<8x256xf32>
    %201 = tpu.matmul %199, %200, %cst_103 {dimension_numbers = #tpu.dot_dimension_numbers<[1], [0], [0], [1], [0, 0, 1, 1], [], []>} : vector<8x128xbf16>, vector<128x256xbf16>, vector<8x256xf32> -> vector<8x256xf32>
    %202 = arith.addf %197, %201 : vector<8x256xf32>
    %203 = vector.extract_strided_slice %126 {offsets = [120, 0], sizes = [8, 128], strides = [1, 1]} : vector<128x128xf32> to vector<8x128xf32>
    %204 = arith.truncf %203 : vector<8x128xf32> to vector<8x128xbf16>
    %c1920_104 = arith.constant 1920 : index
    %c0_105 = arith.constant 0 : index
    %205 = vector.load %arg8[%c1920_104, %c0_105] : memref<2048x256xbf16, #tpu.memory_space<vmem>>, vector<128x256xbf16>
    %cst_106 = arith.constant dense<0.000000e+00> : vector<8x256xf32>
    %206 = tpu.matmul %204, %205, %cst_106 {dimension_numbers = #tpu.dot_dimension_numbers<[1], [0], [0], [1], [0, 0, 1, 1], [], []>} : vector<8x128xbf16>, vector<128x256xbf16>, vector<8x256xf32> -> vector<8x256xf32>
    %207 = arith.addf %202, %206 : vector<8x256xf32>
    %cst_107 = arith.constant dense<0.000000e+00> : vector<256xf32>
    %208 = vector.multi_reduction <add>, %207, %cst_107 [0] : vector<8x256xf32> to vector<256xf32>
    %209 = vector.shape_cast %208 : vector<256xf32> to vector<1x256xf32>
    %cst_108 = arith.constant 8.000000e+00 : f32
    %210 = vector.broadcast %cst_108 : f32 to vector<1x256xf32>
    %211 = arith.divf %209, %210 : vector<1x256xf32>
    %212 = vector.broadcast %211 : vector<1x256xf32> to vector<8x256xf32>
    %213 = arith.subf %207, %212 : vector<8x256xf32>
    %214 = arith.mulf %213, %213 : vector<8x256xf32>
    %cst_109 = arith.constant dense<0.000000e+00> : vector<256xf32>
    %215 = vector.multi_reduction <add>, %214, %cst_109 [0] : vector<8x256xf32> to vector<256xf32>
    %216 = vector.shape_cast %215 : vector<256xf32> to vector<1x256xf32>
    %cst_110 = arith.constant 8.000000e+00 : f32
    %217 = vector.broadcast %cst_110 : f32 to vector<1x256xf32>
    %218 = arith.divf %216, %217 : vector<1x256xf32>
    %219 = vector.broadcast %211 : vector<1x256xf32> to vector<8x256xf32>
    %220 = arith.subf %207, %219 : vector<8x256xf32>
    %cst_111 = arith.constant 9.99999974E-6 : f32
    %221 = vector.broadcast %cst_111 : f32 to vector<1x256xf32>
    %222 = arith.addf %218, %221 : vector<1x256xf32>
    %223 = math.rsqrt %222 : vector<1x256xf32>
    %224 = vector.broadcast %223 : vector<1x256xf32> to vector<8x256xf32>
    %225 = arith.mulf %220, %224 : vector<8x256xf32>
    %c0_112 = arith.constant 0 : index
    %c0_113 = arith.constant 0 : index
    %226 = vector.load %arg9[%c0_112, %c0_113] : memref<1x256xf32, #tpu.memory_space<vmem>>, vector<1x256xf32>
    %227 = vector.broadcast %226 : vector<1x256xf32> to vector<8x256xf32>
    %228 = arith.mulf %225, %227 : vector<8x256xf32>
    %c0_114 = arith.constant 0 : index
    %c0_115 = arith.constant 0 : index
    %229 = vector.load %arg10[%c0_114, %c0_115] : memref<1x256xf32, #tpu.memory_space<vmem>>, vector<1x256xf32>
    %230 = vector.broadcast %229 : vector<1x256xf32> to vector<8x256xf32>
    %231 = arith.addf %228, %230 : vector<8x256xf32>
    %cst_116 = arith.constant 0.000000e+00 : f32
    %232 = vector.broadcast %cst_116 : f32 to vector<8x256xf32>
    %233 = arith.cmpf oge, %231, %232 : vector<8x256xf32>
    %cst_117 = arith.constant 2.000000e-01 : f32
    %234 = vector.broadcast %cst_117 : f32 to vector<8x256xf32>
    %235 = arith.mulf %234, %231 : vector<8x256xf32>
    %236 = arith.select %233, %231, %235 : vector<8x256xi1>, vector<8x256xf32>
    %237 = arith.truncf %236 : vector<8x256xf32> to vector<8x256xbf16>
    %c0_118 = arith.constant 0 : index
    %c0_119 = arith.constant 0 : index
    %238 = vector.load %arg11[%c0_118, %c0_119] : memref<32x8xbf16, #tpu.memory_space<vmem>>, vector<32x8xbf16>
    %cst_120 = arith.constant dense<0.000000e+00> : vector<32x256xf32>
    %239 = tpu.matmul %238, %237, %cst_120 {dimension_numbers = #tpu.dot_dimension_numbers<[1], [0], [0], [1], [0, 0, 1, 1], [], []>} : vector<32x8xbf16>, vector<8x256xbf16>, vector<32x256xf32> -> vector<32x256xf32>
    %cst_121 = arith.constant 0.000000e+00 : f32
    %240 = vector.broadcast %cst_121 : f32 to vector<8x128xf32>
    %241 = vector.extract_strided_slice %239 {offsets = [0, 0], sizes = [8, 256], strides = [1, 1]} : vector<32x256xf32> to vector<8x256xf32>
    %242 = arith.truncf %241 : vector<8x256xf32> to vector<8x256xbf16>
    %c0_122 = arith.constant 0 : index
    %c0_123 = arith.constant 0 : index
    %243 = vector.load %arg12[%c0_122, %c0_123] : memref<1024x128xbf16, #tpu.memory_space<vmem>>, vector<256x128xbf16>
    %cst_124 = arith.constant dense<0.000000e+00> : vector<8x128xf32>
    %244 = tpu.matmul %242, %243, %cst_124 {dimension_numbers = #tpu.dot_dimension_numbers<[1], [0], [0], [1], [0, 0, 1, 1], [], []>} : vector<8x256xbf16>, vector<256x128xbf16>, vector<8x128xf32> -> vector<8x128xf32>
    %245 = arith.addf %240, %244 : vector<8x128xf32>
    %246 = vector.extract_strided_slice %239 {offsets = [8, 0], sizes = [8, 256], strides = [1, 1]} : vector<32x256xf32> to vector<8x256xf32>
    %247 = arith.truncf %246 : vector<8x256xf32> to vector<8x256xbf16>
    %c256_125 = arith.constant 256 : index
    %c0_126 = arith.constant 0 : index
    %248 = vector.load %arg12[%c256_125, %c0_126] : memref<1024x128xbf16, #tpu.memory_space<vmem>>, vector<256x128xbf16>
    %cst_127 = arith.constant dense<0.000000e+00> : vector<8x128xf32>
    %249 = tpu.matmul %247, %248, %cst_127 {dimension_numbers = #tpu.dot_dimension_numbers<[1], [0], [0], [1], [0, 0, 1, 1], [], []>} : vector<8x256xbf16>, vector<256x128xbf16>, vector<8x128xf32> -> vector<8x128xf32>
    %250 = arith.addf %245, %249 : vector<8x128xf32>
    %251 = vector.extract_strided_slice %239 {offsets = [16, 0], sizes = [8, 256], strides = [1, 1]} : vector<32x256xf32> to vector<8x256xf32>
    %252 = arith.truncf %251 : vector<8x256xf32> to vector<8x256xbf16>
    %c512_128 = arith.constant 512 : index
    %c0_129 = arith.constant 0 : index
    %253 = vector.load %arg12[%c512_128, %c0_129] : memref<1024x128xbf16, #tpu.memory_space<vmem>>, vector<256x128xbf16>
    %cst_130 = arith.constant dense<0.000000e+00> : vector<8x128xf32>
    %254 = tpu.matmul %252, %253, %cst_130 {dimension_numbers = #tpu.dot_dimension_numbers<[1], [0], [0], [1], [0, 0, 1, 1], [], []>} : vector<8x256xbf16>, vector<256x128xbf16>, vector<8x128xf32> -> vector<8x128xf32>
    %255 = arith.addf %250, %254 : vector<8x128xf32>
    %256 = vector.extract_strided_slice %239 {offsets = [24, 0], sizes = [8, 256], strides = [1, 1]} : vector<32x256xf32> to vector<8x256xf32>
    %257 = arith.truncf %256 : vector<8x256xf32> to vector<8x256xbf16>
    %c768_131 = arith.constant 768 : index
    %c0_132 = arith.constant 0 : index
    %258 = vector.load %arg12[%c768_131, %c0_132] : memref<1024x128xbf16, #tpu.memory_space<vmem>>, vector<256x128xbf16>
    %cst_133 = arith.constant dense<0.000000e+00> : vector<8x128xf32>
    %259 = tpu.matmul %257, %258, %cst_133 {dimension_numbers = #tpu.dot_dimension_numbers<[1], [0], [0], [1], [0, 0, 1, 1], [], []>} : vector<8x256xbf16>, vector<256x128xbf16>, vector<8x128xf32> -> vector<8x128xf32>
    %260 = arith.addf %255, %259 : vector<8x128xf32>
    %c0_134 = arith.constant 0 : index
    %c0_135 = arith.constant 0 : index
    %261 = vector.load %arg13[%c0_134, %c0_135] : memref<8x128xf32, #tpu.memory_space<vmem>>, vector<8x128xf32>
    tpu.vector_store %arg13[%c0_134, %c0_135], %260 {strides = array<i32>} : memref<8x128xf32, #tpu.memory_space<vmem>>, vector<8x128xf32>,
    return
  }
}

</mosaic_0001>

<llo_original>
// kernel: _lambda_.1
$region0: #{_lambda_.1}
  #allocation0 [shape = 'u32[]', space=smem, size = 0x4, offset = 0x4, fixed_abs, tag = 'smem constant byte address 0x4 - core index']
  #allocation1 [shape = 'u32[72,128]{1,0:T(1,128)}', space=vmem, size = 0x9000, scoped, tag = 'internal scratch']
  %s0 = inlined_call_operand.vmem [shape: bf16[128,128], index: 0, kind: input, shape index: {}]
  %s1 = inlined_call_operand.hbm [shape: bf16[128,128], index: 1, kind: input, shape index: {}]
  %s2 = inlined_call_operand.vmem [shape: f32[1,128], index: 2, kind: input, shape index: {}]
  %s3 = inlined_call_operand.hbm [shape: bf16[512,128], index: 3, kind: input, shape index: {}]
  %s4 = inlined_call_operand.vmem [shape: bf16[2048,128], index: 4, kind: input, shape index: {}]
  %s5 = inlined_call_operand.vmem [shape: f32[1,128], index: 5, kind: input, shape index: {}]
  %s6 = inlined_call_operand.vmem [shape: f32[1,128], index: 6, kind: input, shape index: {}]
  %s7 = inlined_call_operand.hbm [shape: bf16[128,32], index: 7, kind: input, shape index: {}]
  %s8 = inlined_call_operand.vmem [shape: bf16[2048,256], index: 8, kind: input, shape index: {}]
  %s9 = inlined_call_operand.vmem [shape: f32[1,256], index: 9, kind: input, shape index: {}]
  %s10 = inlined_call_operand.vmem [shape: f32[1,256], index: 10, kind: input, shape index: {}]
  %s11 = inlined_call_operand.vmem [shape: bf16[32,8], index: 11, kind: input, shape index: {}]
  %s12 = inlined_call_operand.hbm [shape: bf16[1024,128], index: 12, kind: input, shape index: {}]
  %s13 = inlined_call_operand.vmem [shape: f32[8,128], index: 13, kind: output, shape index: {}]
  %s14 = sld [smem:[#allocation0]]
  $region78: #{_lambda_.1} parent=0
    _
  %s16 = ssub.s32 1, %s14
  %s17 = scalar_select 0, %s16, %s14
  $region1: #{_lambda_.1} parent=0
    #allocation2 [shape = 'u8[32768]{0}', space=vmem, size = 0x8000, scoped, tag = 'input window, operand 1, single buffered']
    #allocation3 [shape = 's32[1]{0}', space=sflag, size = 0x4, scoped, tag = 'scoped memory for _lambda_.1']
    #allocation4 [shape = 'u8[131072]{0}', space=vmem, size = 0x20000, scoped, tag = 'input window, operand 3, single buffered']
    #allocation5 [shape = 's32[1]{0}', space=sflag, size = 0x4, scoped, tag = 'scoped memory for _lambda_.1']
    #allocation6 [shape = 'u8[32768]{0}', space=vmem, size = 0x8000, scoped, tag = 'input window, operand 7, single buffered']
    #allocation7 [shape = 'u8[262144]{0}', space=vmem, size = 0x40000, scoped, tag = 'input window, operand 12, single buffered']
    #allocation8 [shape = 's32[1]{0}', space=sflag, size = 0x4, scoped, tag = 'scoped memory for _lambda_.1']
    %18 = vsyncpa [#allocation3], 0
    %19 = vsyncpa [#allocation5], 0
    %20 = vsyncpa [#allocation8], 0
    // Predicated region
    $region2: #{_lambda_.1} parent=1 // pred_check
      _
    $region3: #{_lambda_.1} parent=1 // pred_check_branch
      %22 = sbr.rel (0) target = $region5
    $region4: #{_lambda_.1} parent=1 // pred_region
      _
    $region5: #{_lambda_.1} parent=1 // pred_fallthru
      _
    // Predicated region
    $region6: #{_lambda_.1} parent=1 // pred_check
      _
    $region7: #{_lambda_.1} parent=1 // pred_check_branch
      %24 = sbr.rel (0) target = $region9
    $region8: #{_lambda_.1} parent=1 // pred_region
      %26 = vsyncadd [#allocation3], 0
      %s27 = sshll.u32 %s1, 4
      %s28 = int_to_ptr.hbm [resolvable:$true] %s27
      %s29 = sshll.u32 [#allocation2], 4
      %s30 = int_to_ptr.vmem [resolvable:$true] %s29
      %35 = dma.hbm_to_vmem [thread:$0]  %s28, 1024, %s30, [#allocation3], 64, 64, 4
    $region9: #{_lambda_.1} parent=1 // pred_fallthru
      _
    // Predicated region
    $region10: #{_lambda_.1} parent=1 // pred_check
      _
    $region11: #{_lambda_.1} parent=1 // pred_check_branch
      %37 = sbr.rel (0) target = $region13
    $region12: #{_lambda_.1} parent=1 // pred_region
      _
    $region13: #{_lambda_.1} parent=1 // pred_fallthru
      _
    // Predicated region
    $region14: #{_lambda_.1} parent=1 // pred_check
      _
    $region15: #{_lambda_.1} parent=1 // pred_check_branch
      %39 = sbr.rel (0) target = $region17
    $region16: #{_lambda_.1} parent=1 // pred_region
      %41 = vsyncadd [#allocation5], 0
      %s42 = sshll.u32 %s3, 4
      %s43 = int_to_ptr.hbm [resolvable:$true] %s42
      %s44 = sshll.u32 [#allocation4], 4
      %s45 = int_to_ptr.vmem [resolvable:$true] %s44
      %50 = dma.hbm_to_vmem [thread:$0]  %s43, 4096, %s45, [#allocation5], 64, 64, 4
    $region17: #{_lambda_.1} parent=1 // pred_fallthru
      _
    // Predicated region
    $region18: #{_lambda_.1} parent=1 // pred_check
      _
    $region19: #{_lambda_.1} parent=1 // pred_check_branch
      %52 = sbr.rel (0) target = $region21
    $region20: #{_lambda_.1} parent=1 // pred_region
      _
    $region21: #{_lambda_.1} parent=1 // pred_fallthru
      _
    // Predicated region
    $region22: #{_lambda_.1} parent=1 // pred_check
      _
    $region23: #{_lambda_.1} parent=1 // pred_check_branch
      %54 = sbr.rel (0) target = $region25
    $region24: #{_lambda_.1} parent=1 // pred_region
      _
    $region25: #{_lambda_.1} parent=1 // pred_fallthru
      _
    // Predicated region
    $region26: #{_lambda_.1} parent=1 // pred_check
      _
    $region27: #{_lambda_.1} parent=1 // pred_check_branch
      %56 = sbr.rel (0) target = $region29
    $region28: #{_lambda_.1} parent=1 // pred_region
      _
    $region29: #{_lambda_.1} parent=1 // pred_fallthru
      _
    // Predicated region
    $region30: #{_lambda_.1} parent=1 // pred_check
      _
    $region31: #{_lambda_.1} parent=1 // pred_check_branch
      %58 = sbr.rel (0) target = $region33
    $region32: #{_lambda_.1} parent=1 // pred_region
      %60 = vsyncadd [#allocation5], 0
      %s61 = sshll.u32 %s7, 4
      %s62 = int_to_ptr.hbm [resolvable:$true] %s61
      %s63 = sshll.u32 [#allocation6], 4
      %s64 = int_to_ptr.vmem [resolvable:$true] %s63
      %69 = dma.hbm_to_vmem [thread:$0]  %s62, 1024, %s64, [#allocation5], 64, 64, 4
    $region33: #{_lambda_.1} parent=1 // pred_fallthru
      _
    // Predicated region
    $region34: #{_lambda_.1} parent=1 // pred_check
      _
    $region35: #{_lambda_.1} parent=1 // pred_check_branch
      %71 = sbr.rel (0) target = $region37
    $region36: #{_lambda_.1} parent=1 // pred_region
      _
    $region37: #{_lambda_.1} parent=1 // pred_fallthru
      _
    // Predicated region
    $region38: #{_lambda_.1} parent=1 // pred_check
      _
    $region39: #{_lambda_.1} parent=1 // pred_check_branch
      %73 = sbr.rel (0) target = $region41
    $region40: #{_lambda_.1} parent=1 // pred_region
      _
    $region41: #{_lambda_.1} parent=1 // pred_fallthru
      _
    // Predicated region
    $region42: #{_lambda_.1} parent=1 // pred_check
      _
    $region43: #{_lambda_.1} parent=1 // pred_check_branch
      %75 = sbr.rel (0) target = $region45
    $region44: #{_lambda_.1} parent=1 // pred_region
      _
    $region45: #{_lambda_.1} parent=1 // pred_fallthru
      _
    // Predicated region
    $region46: #{_lambda_.1} parent=1 // pred_check
      _
    $region47: #{_lambda_.1} parent=1 // pred_check_branch
      %77 = sbr.rel (0) target = $region49
    $region48: #{_lambda_.1} parent=1 // pred_region
      _
    $region49: #{_lambda_.1} parent=1 // pred_fallthru
      _
    // Predicated region
    $region50: #{_lambda_.1} parent=1 // pred_check
      _
    $region51: #{_lambda_.1} parent=1 // pred_check_branch
      %79 = sbr.rel (0) target = $region53
    $region52: #{_lambda_.1} parent=1 // pred_region
      %81 = vsyncadd [#allocation8], 0
      %s82 = sshll.u32 %s12, 4
      %s83 = int_to_ptr.hbm [resolvable:$true] %s82
      %s84 = sshll.u32 [#allocation7], 4
      %s85 = int_to_ptr.vmem [resolvable:$true] %s84
      %90 = dma.hbm_to_vmem [thread:$0]  %s83, 8192, %s85, [#allocation8], 64, 64, 4
    $region53: #{_lambda_.1} parent=1 // pred_fallthru
      _
    // Predicated region
    $region54: #{_lambda_.1} parent=1 // pred_check
      _
    $region55: #{_lambda_.1} parent=1 // pred_check_branch
      %92 = sbr.rel (0) target = $region57
    $region56: #{_lambda_.1} parent=1 // pred_region
      %94 = dma.done [#allocation3], 1024
    $region57: #{_lambda_.1} parent=1 // pred_fallthru
      _
    // Predicated region
    $region58: #{_lambda_.1} parent=1 // pred_check
      _
    $region59: #{_lambda_.1} parent=1 // pred_check_branch
      %96 = sbr.rel (0) target = $region61
    $region60: #{_lambda_.1} parent=1 // pred_region
      %98 = dma.done [#allocation5], 4096
    $region61: #{_lambda_.1} parent=1 // pred_fallthru
      _
    // Predicated region
    $region62: #{_lambda_.1} parent=1 // pred_check
      _
    $region63: #{_lambda_.1} parent=1 // pred_check_branch
      %100 = sbr.rel (0) target = $region65
    $region64: #{_lambda_.1} parent=1 // pred_region
      %102 = dma.done [#allocation5], 1024
    $region65: #{_lambda_.1} parent=1 // pred_fallthru
      _
    // Predicated region
    $region66: #{_lambda_.1} parent=1 // pred_check
      _
    $region67: #{_lambda_.1} parent=1 // pred_check_branch
      %104 = sbr.rel (0) target = $region69
    $region68: #{_lambda_.1} parent=1 // pred_region
      %106 = dma.done [#allocation8], 8192
    $region69: #{_lambda_.1} parent=1 // pred_fallthru
      _
    %v108 = vld [vmem:[%s0] sm:$0xf]
    %v109 = vld [vmem:[%s0 + $0x4] sm:$0xf]
    %v110 = vld [vmem:[%s0 + $0x8] sm:$0xf]
    %v111 = vld [vmem:[%s0 + $0xc] sm:$0xf]
    %v112 = vld [vmem:[%s0 + $0x10] sm:$0xf]
    %v113 = vld [vmem:[%s0 + $0x14] sm:$0xf]
    %v114 = vld [vmem:[%s0 + $0x18] sm:$0xf]
    %v115 = vld [vmem:[%s0 + $0x1c] sm:$0xf]
    %v116 = vld [vmem:[%s0 + $0x20] sm:$0xf]
    %v117 = vld [vmem:[%s0 + $0x24] sm:$0xf]
    %v118 = vld [vmem:[%s0 + $0x28] sm:$0xf]
    %v119 = vld [vmem:[%s0 + $0x2c] sm:$0xf]
    %v120 = vld [vmem:[%s0 + $0x30] sm:$0xf]
    %v121 = vld [vmem:[%s0 + $0x34] sm:$0xf]
    %v122 = vld [vmem:[%s0 + $0x38] sm:$0xf]
    %v123 = vld [vmem:[%s0 + $0x3c] sm:$0xf]
    %v124 = vld [vmem:[#allocation2] sm:$0xf]
    %v125 = vld [vmem:[#allocation2 + $0x4] sm:$0xf]
    %v126 = vld [vmem:[#allocation2 + $0x8] sm:$0xf]
    %v127 = vld [vmem:[#allocation2 + $0xc] sm:$0xf]
    %v128 = vld [vmem:[#allocation2 + $0x10] sm:$0xf]
    %v129 = vld [vmem:[#allocation2 + $0x14] sm:$0xf]
    %v130 = vld [vmem:[#allocation2 + $0x18] sm:$0xf]
    %v131 = vld [vmem:[#allocation2 + $0x1c] sm:$0xf]
    %v132 = vld [vmem:[#allocation2 + $0x20] sm:$0xf]
    %v133 = vld [vmem:[#allocation2 + $0x24] sm:$0xf]
    %v134 = vld [vmem:[#allocation2 + $0x28] sm:$0xf]
    %v135 = vld [vmem:[#allocation2 + $0x2c] sm:$0xf]
    %v136 = vld [vmem:[#allocation2 + $0x30] sm:$0xf]
    %v137 = vld [vmem:[#allocation2 + $0x34] sm:$0xf]
    %v138 = vld [vmem:[#allocation2 + $0x38] sm:$0xf]
    %v139 = vld [vmem:[#allocation2 + $0x3c] sm:$0xf]
    %v140 = vld [vmem:[%s2] sm:$0x1]
    %v142 = vperm.slane %v140, 0
    %v160 = vunpack.c.l.b16 %v108
    %v161 = vunpack.c.l.b16 %v109
    %v162 = vunpack.c.l.b16 %v110
    %v163 = vunpack.c.l.b16 %v111
    %v164 = vunpack.c.l.b16 %v112
    %v165 = vunpack.c.l.b16 %v113
    %v166 = vunpack.c.l.b16 %v114
    %v167 = vunpack.c.l.b16 %v115
    %v168 = vunpack.c.l.b16 %v116
    %v169 = vunpack.c.l.b16 %v117
    %v170 = vunpack.c.l.b16 %v118
    %v171 = vunpack.c.l.b16 %v119
    %v172 = vunpack.c.l.b16 %v120
    %v173 = vunpack.c.l.b16 %v121
    %v174 = vunpack.c.l.b16 %v122
    %v175 = vunpack.c.l.b16 %v123
    %v176 = vpack.c.b16 %v161, %v160
    %v177 = vpack.c.b16 %v163, %v162
    %v178 = vpack.c.b16 %v165, %v164
    %v179 = vpack.c.b16 %v167, %v166
    %v180 = vpack.c.b16 %v169, %v168
    %v181 = vpack.c.b16 %v171, %v170
    %v182 = vpack.c.b16 %v173, %v172
    %v183 = vpack.c.b16 %v175, %v174
    %v208 = vunpack.c.l.b16 %v124
    %v209 = vunpack.c.l.b16 %v125
    %v210 = vunpack.c.l.b16 %v126
    %v211 = vunpack.c.l.b16 %v127
    %v212 = vunpack.c.l.b16 %v128
    %v213 = vunpack.c.l.b16 %v129
    %v214 = vunpack.c.l.b16 %v130
    %v215 = vunpack.c.l.b16 %v131
    %v216 = vunpack.c.l.b16 %v132
    %v217 = vunpack.c.l.b16 %v133
    %v218 = vunpack.c.l.b16 %v134
    %v219 = vunpack.c.l.b16 %v135
    %v220 = vunpack.c.l.b16 %v136
    %v221 = vunpack.c.l.b16 %v137
    %v222 = vunpack.c.l.b16 %v138
    %v223 = vunpack.c.l.b16 %v139
    %v224 = vpack.c.b16 %v209, %v208
    %v225 = vpack.c.b16 %v211, %v210
    %v226 = vpack.c.b16 %v213, %v212
    %v227 = vpack.c.b16 %v215, %v214
    %v228 = vpack.c.b16 %v217, %v216
    %v229 = vpack.c.b16 %v219, %v218
    %v230 = vpack.c.b16 %v221, %v220
    %v231 = vpack.c.b16 %v223, %v222
    %240 = vmatpush.bf16.msra.mxu0 %v231
    %241 = vmatpush.bf16.msra.mxu0 %v230
    %242 = vmatpush.bf16.msra.mxu0 %v229
    %243 = vmatpush.bf16.msra.mxu0 %v228
    %244 = vmatpush.bf16.msra.mxu0 %v227
    %245 = vmatpush.bf16.msra.mxu0 %v226
    %246 = vmatpush.bf16.msra.mxu0 %v225
    %247 = vmatpush.bf16.msra.mxu0 %v224
    %248 = vmatmul.bf16.gmra.mxu0 %v176
    %v249 = vpop.f32.mrf.mxu0
    %v250 = vadd.f32 %v142, %v249
    %v251 = vpop.f32.mrf.mxu0
    %v252 = vadd.f32 %v142, %v251
    %253 = vmatmul.bf16.gmra.mxu0 %v177
    %v254 = vpop.f32.mrf.mxu0
    %v255 = vadd.f32 %v142, %v254
    %v256 = vpop.f32.mrf.mxu0
    %v257 = vadd.f32 %v142, %v256
    %258 = vmatmul.bf16.gmra.mxu0 %v178
    %v259 = vpop.f32.mrf.mxu0
    %v260 = vadd.f32 %v142, %v259
    %v261 = vpop.f32.mrf.mxu0
    %v262 = vadd.f32 %v142, %v261
    %263 = vmatmul.bf16.gmra.mxu0 %v179
    %v264 = vpop.f32.mrf.mxu0
    %v265 = vadd.f32 %v142, %v264
    %v266 = vpop.f32.mrf.mxu0
    %v267 = vadd.f32 %v142, %v266
    %268 = vmatmul.bf16.gmra.mxu0 %v180
    %v269 = vpop.f32.mrf.mxu0
    %v270 = vadd.f32 %v142, %v269
    %v271 = vpop.f32.mrf.mxu0
    %v272 = vadd.f32 %v142, %v271
    %273 = vmatmul.bf16.gmra.mxu0 %v181
    %v274 = vpop.f32.mrf.mxu0
    %v275 = vadd.f32 %v142, %v274
    %v276 = vpop.f32.mrf.mxu0
    %v277 = vadd.f32 %v142, %v276
    %278 = vmatmul.bf16.gmra.mxu0 %v182
    %v279 = vpop.f32.mrf.mxu0
    %v280 = vadd.f32 %v142, %v279
    %v281 = vpop.f32.mrf.mxu0
    %v282 = vadd.f32 %v142, %v281
    %283 = vmatmul.bf16.gmra.mxu0 %v183
    %v284 = vpop.f32.mrf.mxu0
    %v285 = vadd.f32 %v142, %v284
    %v286 = vpop.f32.mrf.mxu0
    %v287 = vadd.f32 %v142, %v286
    %288 = vdwg.mxu0
    %vm289 = vcmp.ge.f32.partialorder %v250, 0.0
    %vm290 = vcmp.ge.f32.partialorder %v252, 0.0
    %vm291 = vcmp.ge.f32.partialorder %v255, 0.0
    %vm292 = vcmp.ge.f32.partialorder %v257, 0.0
    %vm293 = vcmp.ge.f32.partialorder %v260, 0.0
    %vm294 = vcmp.ge.f32.partialorder %v262, 0.0
    %vm295 = vcmp.ge.f32.partialorder %v265, 0.0
    %vm296 = vcmp.ge.f32.partialorder %v267, 0.0
    %vm297 = vcmp.ge.f32.partialorder %v270, 0.0
    %vm298 = vcmp.ge.f32.partialorder %v272, 0.0
    %vm299 = vcmp.ge.f32.partialorder %v275, 0.0
    %vm300 = vcmp.ge.f32.partialorder %v277, 0.0
    %vm301 = vcmp.ge.f32.partialorder %v280, 0.0
    %vm302 = vcmp.ge.f32.partialorder %v282, 0.0
    %vm303 = vcmp.ge.f32.partialorder %v285, 0.0
    %vm304 = vcmp.ge.f32.partialorder %v287, 0.0
    %v305 = vmul.f32 %v250, 0.2
    %v306 = vmul.f32 %v252, 0.2
    %v307 = vmul.f32 %v255, 0.2
    %v308 = vmul.f32 %v257, 0.2
    %v309 = vmul.f32 %v260, 0.2
    %v310 = vmul.f32 %v262, 0.2
    %v311 = vmul.f32 %v265, 0.2
    %v312 = vmul.f32 %v267, 0.2
    %v313 = vmul.f32 %v270, 0.2
    %v314 = vmul.f32 %v272, 0.2
    %v315 = vmul.f32 %v275, 0.2
    %v316 = vmul.f32 %v277, 0.2
    %v317 = vmul.f32 %v280, 0.2
    %v318 = vmul.f32 %v282, 0.2
    %v319 = vmul.f32 %v285, 0.2
    %v320 = vmul.f32 %v287, 0.2
    %v321 = vsel %vm289, %v250, %v305
    %v322 = vsel %vm290, %v252, %v306
    %v323 = vsel %vm291, %v255, %v307
    %v324 = vsel %vm292, %v257, %v308
    %v325 = vsel %vm293, %v260, %v309
    %v326 = vsel %vm294, %v262, %v310
    %v327 = vsel %vm295, %v265, %v311
    %v328 = vsel %vm296, %v267, %v312
    %v329 = vsel %vm297, %v270, %v313
    %v330 = vsel %vm298, %v272, %v314
    %v331 = vsel %vm299, %v275, %v315
    %v332 = vsel %vm300, %v277, %v316
    %v333 = vsel %vm301, %v280, %v317
    %v334 = vsel %vm302, %v282, %v318
    %v335 = vsel %vm303, %v285, %v319
    %v336 = vsel %vm304, %v287, %v320
    %v337 = vpack.c.bf16 %v322, %v321
    %v338 = vpack.c.bf16 %v324, %v323
    %v339 = vpack.c.bf16 %v326, %v325
    %v340 = vpack.c.bf16 %v328, %v327
    %v341 = vpack.c.bf16 %v330, %v329
    %v342 = vpack.c.bf16 %v332, %v331
    %v343 = vpack.c.bf16 %v334, %v333
    %v344 = vpack.c.bf16 %v336, %v335
    %v345 = vld [vmem:[#allocation4] sm:$0xf]
    %v346 = vld [vmem:[#allocation4 + $0x4] sm:$0xf]
    %v347 = vld [vmem:[#allocation4 + $0x8] sm:$0xf]
    %v348 = vld [vmem:[#allocation4 + $0xc] sm:$0xf]
    %v349 = vld [vmem:[#allocation4 + $0x10] sm:$0xf]
    %v350 = vld [vmem:[#allocation4 + $0x14] sm:$0xf]
    %v351 = vld [vmem:[#allocation4 + $0x18] sm:$0xf]
    %v352 = vld [vmem:[#allocation4 + $0x1c] sm:$0xf]
    %v353 = vld [vmem:[#allocation4 + $0x20] sm:$0xf]
    %v354 = vld [vmem:[#allocation4 + $0x24] sm:$0xf]
    %v355 = vld [vmem:[#allocation4 + $0x28] sm:$0xf]
    %v356 = vld [vmem:[#allocation4 + $0x2c] sm:$0xf]
    %v357 = vld [vmem:[#allocation4 + $0x30] sm:$0xf]
    %v358 = vld [vmem:[#allocation4 + $0x34] sm:$0xf]
    %v359 = vld [vmem:[#allocation4 + $0x38] sm:$0xf]
    %v360 = vld [vmem:[#allocation4 + $0x3c] sm:$0xf]
    %v361 = vld [vmem:[#allocation4 + $0x40] sm:$0xf]
    %v362 = vld [vmem:[#allocation4 + $0x44] sm:$0xf]
    %v363 = vld [vmem:[#allocation4 + $0x48] sm:$0xf]
    %v364 = vld [vmem:[#allocation4 + $0x4c] sm:$0xf]
    %v365 = vld [vmem:[#allocation4 + $0x50] sm:$0xf]
    %v366 = vld [vmem:[#allocation4 + $0x54] sm:$0xf]
    %v367 = vld [vmem:[#allocation4 + $0x58] sm:$0xf]
    %v368 = vld [vmem:[#allocation4 + $0x5c] sm:$0xf]
    %v369 = vld [vmem:[#allocation4 + $0x60] sm:$0xf]
    %v370 = vld [vmem:[#allocation4 + $0x64] sm:$0xf]
    %v371 = vld [vmem:[#allocation4 + $0x68] sm:$0xf]
    %v372 = vld [vmem:[#allocation4 + $0x6c] sm:$0xf]
    %v373 = vld [vmem:[#allocation4 + $0x70] sm:$0xf]
    %v374 = vld [vmem:[#allocation4 + $0x74] sm:$0xf]
    %v375 = vld [vmem:[#allocation4 + $0x78] sm:$0xf]
    %v376 = vld [vmem:[#allocation4 + $0x7c] sm:$0xf]
    %v377 = vld [vmem:[#allocation4 + $0x80] sm:$0xf]
    %v378 = vld [vmem:[#allocation4 + $0x84] sm:$0xf]
    %v379 = vld [vmem:[#allocation4 + $0x88] sm:$0xf]
    %v380 = vld [vmem:[#allocation4 + $0x8c] sm:$0xf]
    %v381 = vld [vmem:[#allocation4 + $0x90] sm:$0xf]
    %v382 = vld [vmem:[#allocation4 + $0x94] sm:$0xf]
    %v383 = vld [vmem:[#allocation4 + $0x98] sm:$0xf]
    %v384 = vld [vmem:[#allocation4 + $0x9c] sm:$0xf]
    %v385 = vld [vmem:[#allocation4 + $0xa0] sm:$0xf]
    %v386 = vld [vmem:[#allocation4 + $0xa4] sm:$0xf]
    %v387 = vld [vmem:[#allocation4 + $0xa8] sm:$0xf]
    %v388 = vld [vmem:[#allocation4 + $0xac] sm:$0xf]
    %v389 = vld [vmem:[#allocation4 + $0xb0] sm:$0xf]
    %v390 = vld [vmem:[#allocation4 + $0xb4] sm:$0xf]
    %v391 = vld [vmem:[#allocation4 + $0xb8] sm:$0xf]
    %v392 = vld [vmem:[#allocation4 + $0xbc] sm:$0xf]
    %v393 = vld [vmem:[#allocation4 + $0xc0] sm:$0xf]
    %v394 = vld [vmem:[#allocation4 + $0xc4] sm:$0xf]
    %v395 = vld [vmem:[#allocation4 + $0xc8] sm:$0xf]
    %v396 = vld [vmem:[#allocation4 + $0xcc] sm:$0xf]
    %v397 = vld [vmem:[#allocation4 + $0xd0] sm:$0xf]
    %v398 = vld [vmem:[#allocation4 + $0xd4] sm:$0xf]
    %v399 = vld [vmem:[#allocation4 + $0xd8] sm:$0xf]
    %v400 = vld [vmem:[#allocation4 + $0xdc] sm:$0xf]
    %v401 = vld [vmem:[#allocation4 + $0xe0] sm:$0xf]
    %v402 = vld [vmem:[#allocation4 + $0xe4] sm:$0xf]
    %v403 = vld [vmem:[#allocation4 + $0xe8] sm:$0xf]
    %v404 = vld [vmem:[#allocation4 + $0xec] sm:$0xf]
    %v405 = vld [vmem:[#allocation4 + $0xf0] sm:$0xf]
    %v406 = vld [vmem:[#allocation4 + $0xf4] sm:$0xf]
    %v407 = vld [vmem:[#allocation4 + $0xf8] sm:$0xf]
    %v408 = vld [vmem:[#allocation4 + $0xfc] sm:$0xf]
    %v473 = vunpack.c.l.b16 %v345
    %v474 = vunpack.c.l.b16 %v346
    %v475 = vunpack.c.l.b16 %v347
    %v476 = vunpack.c.l.b16 %v348
    %v477 = vunpack.c.l.b16 %v349
    %v478 = vunpack.c.l.b16 %v350
    %v479 = vunpack.c.l.b16 %v351
    %v480 = vunpack.c.l.b16 %v352
    %v481 = vunpack.c.l.b16 %v353
    %v482 = vunpack.c.l.b16 %v354
    %v483 = vunpack.c.l.b16 %v355
    %v484 = vunpack.c.l.b16 %v356
    %v485 = vunpack.c.l.b16 %v357
    %v486 = vunpack.c.l.b16 %v358
    %v487 = vunpack.c.l.b16 %v359
    %v488 = vunpack.c.l.b16 %v360
    %v489 = vunpack.c.l.b16 %v361
    %v490 = vunpack.c.l.b16 %v362
    %v491 = vunpack.c.l.b16 %v363
    %v492 = vunpack.c.l.b16 %v364
    %v493 = vunpack.c.l.b16 %v365
    %v494 = vunpack.c.l.b16 %v366
    %v495 = vunpack.c.l.b16 %v367
    %v496 = vunpack.c.l.b16 %v368
    %v497 = vunpack.c.l.b16 %v369
    %v498 = vunpack.c.l.b16 %v370
    %v499 = vunpack.c.l.b16 %v371
    %v500 = vunpack.c.l.b16 %v372
    %v501 = vunpack.c.l.b16 %v373
    %v502 = vunpack.c.l.b16 %v374
    %v503 = vunpack.c.l.b16 %v375
    %v504 = vunpack.c.l.b16 %v376
    %v505 = vunpack.c.l.b16 %v377
    %v506 = vunpack.c.l.b16 %v378
    %v507 = vunpack.c.l.b16 %v379
    %v508 = vunpack.c.l.b16 %v380
    %v509 = vunpack.c.l.b16 %v381
    %v510 = vunpack.c.l.b16 %v382
    %v511 = vunpack.c.l.b16 %v383
    %v512 = vunpack.c.l.b16 %v384
    %v513 = vunpack.c.l.b16 %v385
    %v514 = vunpack.c.l.b16 %v386
    %v515 = vunpack.c.l.b16 %v387
    %v516 = vunpack.c.l.b16 %v388
    %v517 = vunpack.c.l.b16 %v389
    %v518 = vunpack.c.l.b16 %v390
    %v519 = vunpack.c.l.b16 %v391
    %v520 = vunpack.c.l.b16 %v392
    %v521 = vunpack.c.l.b16 %v393
    %v522 = vunpack.c.l.b16 %v394
    %v523 = vunpack.c.l.b16 %v395
    %v524 = vunpack.c.l.b16 %v396
    %v525 = vunpack.c.l.b16 %v397
    %v526 = vunpack.c.l.b16 %v398
    %v527 = vunpack.c.l.b16 %v399
    %v528 = vunpack.c.l.b16 %v400
    %v529 = vunpack.c.l.b16 %v401
    %v530 = vunpack.c.l.b16 %v402
    %v531 = vunpack.c.l.b16 %v403
    %v532 = vunpack.c.l.b16 %v404
    %v533 = vunpack.c.l.b16 %v405
    %v534 = vunpack.c.l.b16 %v406
    %v535 = vunpack.c.l.b16 %v407
    %v536 = vunpack.c.l.b16 %v408
    %v537 = vpack.c.b16 %v474, %v473
    %v538 = vpack.c.b16 %v476, %v475
    %v539 = vpack.c.b16 %v478, %v477
    %v540 = vpack.c.b16 %v480, %v479
    %v541 = vpack.c.b16 %v482, %v481
    %v542 = vpack.c.b16 %v484, %v483
    %v543 = vpack.c.b16 %v486, %v485
    %v544 = vpack.c.b16 %v488, %v487
    %v545 = vpack.c.b16 %v490, %v489
    %v546 = vpack.c.b16 %v492, %v491
    %v547 = vpack.c.b16 %v494, %v493
    %v548 = vpack.c.b16 %v496, %v495
    %v549 = vpack.c.b16 %v498, %v497
    %v550 = vpack.c.b16 %v500, %v499
    %v551 = vpack.c.b16 %v502, %v501
    %v552 = vpack.c.b16 %v504, %v503
    %v553 = vpack.c.b16 %v506, %v505
    %v554 = vpack.c.b16 %v508, %v507
    %v555 = vpack.c.b16 %v510, %v509
    %v556 = vpack.c.b16 %v512, %v511
    %v557 = vpack.c.b16 %v514, %v513
    %v558 = vpack.c.b16 %v516, %v515
    %v559 = vpack.c.b16 %v518, %v517
    %v560 = vpack.c.b16 %v520, %v519
    %v561 = vpack.c.b16 %v522, %v521
    %v562 = vpack.c.b16 %v524, %v523
    %v563 = vpack.c.b16 %v526, %v525
    %v564 = vpack.c.b16 %v528, %v527
    %v565 = vpack.c.b16 %v530, %v529
    %v566 = vpack.c.b16 %v532, %v531
    %v567 = vpack.c.b16 %v534, %v533
    %v568 = vpack.c.b16 %v536, %v535
    %601 = vmatpush.bf16.msra.mxu0 %v344
    %602 = vmatpush.bf16.msra.mxu0 %v343
    %603 = vmatpush.bf16.msra.mxu0 %v342
    %604 = vmatpush.bf16.msra.mxu0 %v341
    %605 = vmatpush.bf16.msra.mxu0 %v340
    %606 = vmatpush.bf16.msra.mxu0 %v339
    %607 = vmatpush.bf16.msra.mxu0 %v338
    %608 = vmatpush.bf16.msra.mxu0 %v337
    %609 = vmatmul.bf16.gmra.mxu0 %v537
    %v610 = vpop.f32.mrf.mxu0
    %v611 = vadd.f32 0.0, %v610
    %v612 = vpop.f32.mrf.mxu0
    %v613 = vadd.f32 0.0, %v612
    %614 = vmatmul.bf16.gmra.mxu0 %v538
    %v615 = vpop.f32.mrf.mxu0
    %v616 = vadd.f32 0.0, %v615
    %v617 = vpop.f32.mrf.mxu0
    %v618 = vadd.f32 0.0, %v617
    %619 = vmatmul.bf16.gmra.mxu0 %v539
    %v620 = vpop.f32.mrf.mxu0
    %v621 = vadd.f32 0.0, %v620
    %v622 = vpop.f32.mrf.mxu0
    %v623 = vadd.f32 0.0, %v622
    %624 = vmatmul.bf16.gmra.mxu0 %v540
    %v625 = vpop.f32.mrf.mxu0
    %v626 = vadd.f32 0.0, %v625
    %v627 = vpop.f32.mrf.mxu0
    %v628 = vadd.f32 0.0, %v627
    %629 = vmatmul.bf16.gmra.mxu0 %v541
    %v630 = vpop.f32.mrf.mxu0
    %v631 = vadd.f32 0.0, %v630
    %v632 = vpop.f32.mrf.mxu0
    %v633 = vadd.f32 0.0, %v632
    %634 = vmatmul.bf16.gmra.mxu0 %v542
    %v635 = vpop.f32.mrf.mxu0
    %v636 = vadd.f32 0.0, %v635
    %v637 = vpop.f32.mrf.mxu0
    %v638 = vadd.f32 0.0, %v637
    %639 = vmatmul.bf16.gmra.mxu0 %v543
    %v640 = vpop.f32.mrf.mxu0
    %v641 = vadd.f32 0.0, %v640
    %v642 = vpop.f32.mrf.mxu0
    %v643 = vadd.f32 0.0, %v642
    %644 = vmatmul.bf16.gmra.mxu0 %v544
    %v645 = vpop.f32.mrf.mxu0
    %v646 = vadd.f32 0.0, %v645
    %v647 = vpop.f32.mrf.mxu0
    %v648 = vadd.f32 0.0, %v647
    %649 = vmatmul.bf16.gmra.mxu0 %v545
    %v650 = vpop.f32.mrf.mxu0
    %v651 = vadd.f32 0.0, %v650
    %v652 = vpop.f32.mrf.mxu0
    %v653 = vadd.f32 0.0, %v652
    %654 = vmatmul.bf16.gmra.mxu0 %v546
    %v655 = vpop.f32.mrf.mxu0
    %v656 = vadd.f32 0.0, %v655
    %v657 = vpop.f32.mrf.mxu0
    %v658 = vadd.f32 0.0, %v657
    %659 = vmatmul.bf16.gmra.mxu0 %v547
    %v660 = vpop.f32.mrf.mxu0
    %v661 = vadd.f32 0.0, %v660
    %v662 = vpop.f32.mrf.mxu0
    %v663 = vadd.f32 0.0, %v662
    %664 = vmatmul.bf16.gmra.mxu0 %v548
    %v665 = vpop.f32.mrf.mxu0
    %v666 = vadd.f32 0.0, %v665
    %v667 = vpop.f32.mrf.mxu0
    %v668 = vadd.f32 0.0, %v667
    %669 = vmatmul.bf16.gmra.mxu0 %v549
    %v670 = vpop.f32.mrf.mxu0
    %v671 = vadd.f32 0.0, %v670
    %v672 = vpop.f32.mrf.mxu0
    %v673 = vadd.f32 0.0, %v672
    %674 = vmatmul.bf16.gmra.mxu0 %v550
    %v675 = vpop.f32.mrf.mxu0
    %v676 = vadd.f32 0.0, %v675
    %v677 = vpop.f32.mrf.mxu0
    %v678 = vadd.f32 0.0, %v677
    %679 = vmatmul.bf16.gmra.mxu0 %v551
    %v680 = vpop.f32.mrf.mxu0
    %v681 = vadd.f32 0.0, %v680
    %v682 = vpop.f32.mrf.mxu0
    %v683 = vadd.f32 0.0, %v682
    %684 = vmatmul.bf16.gmra.mxu0 %v552
    %v685 = vpop.f32.mrf.mxu0
    %v686 = vadd.f32 0.0, %v685
    %v687 = vpop.f32.mrf.mxu0
    %v688 = vadd.f32 0.0, %v687
    %689 = vmatmul.bf16.gmra.mxu0 %v553
    %v690 = vpop.f32.mrf.mxu0
    %v691 = vadd.f32 0.0, %v690
    %v692 = vpop.f32.mrf.mxu0
    %v693 = vadd.f32 0.0, %v692
    %694 = vmatmul.bf16.gmra.mxu0 %v554
    %v695 = vpop.f32.mrf.mxu0
    %v696 = vadd.f32 0.0, %v695
    %v697 = vpop.f32.mrf.mxu0
    %v698 = vadd.f32 0.0, %v697
    %699 = vmatmul.bf16.gmra.mxu0 %v555
    %v700 = vpop.f32.mrf.mxu0
    %v701 = vadd.f32 0.0, %v700
    %v702 = vpop.f32.mrf.mxu0
    %v703 = vadd.f32 0.0, %v702
    %704 = vmatmul.bf16.gmra.mxu0 %v556
    %v705 = vpop.f32.mrf.mxu0
    %v706 = vadd.f32 0.0, %v705
    %v707 = vpop.f32.mrf.mxu0
    %v708 = vadd.f32 0.0, %v707
    %709 = vmatmul.bf16.gmra.mxu0 %v557
    %v710 = vpop.f32.mrf.mxu0
    %v711 = vadd.f32 0.0, %v710
    %v712 = vpop.f32.mrf.mxu0
    %v713 = vadd.f32 0.0, %v712
    %714 = vmatmul.bf16.gmra.mxu0 %v558
    %v715 = vpop.f32.mrf.mxu0
    %v716 = vadd.f32 0.0, %v715
    %v717 = vpop.f32.mrf.mxu0
    %v718 = vadd.f32 0.0, %v717
    %719 = vmatmul.bf16.gmra.mxu0 %v559
    %v720 = vpop.f32.mrf.mxu0
    %v721 = vadd.f32 0.0, %v720
    %v722 = vpop.f32.mrf.mxu0
    %v723 = vadd.f32 0.0, %v722
    %724 = vmatmul.bf16.gmra.mxu0 %v560
    %v725 = vpop.f32.mrf.mxu0
    %v726 = vadd.f32 0.0, %v725
    %v727 = vpop.f32.mrf.mxu0
    %v728 = vadd.f32 0.0, %v727
    %729 = vmatmul.bf16.gmra.mxu0 %v561
    %v730 = vpop.f32.mrf.mxu0
    %v731 = vadd.f32 0.0, %v730
    %v732 = vpop.f32.mrf.mxu0
    %v733 = vadd.f32 0.0, %v732
    %734 = vmatmul.bf16.gmra.mxu0 %v562
    %v735 = vpop.f32.mrf.mxu0
    %v736 = vadd.f32 0.0, %v735
    %v737 = vpop.f32.mrf.mxu0
    %v738 = vadd.f32 0.0, %v737
    %739 = vmatmul.bf16.gmra.mxu0 %v563
    %v740 = vpop.f32.mrf.mxu0
    %v741 = vadd.f32 0.0, %v740
    %v742 = vpop.f32.mrf.mxu0
    %v743 = vadd.f32 0.0, %v742
    %744 = vmatmul.bf16.gmra.mxu0 %v564
    %v745 = vpop.f32.mrf.mxu0
    %v746 = vadd.f32 0.0, %v745
    %v747 = vpop.f32.mrf.mxu0
    %v748 = vadd.f32 0.0, %v747
    %749 = vmatmul.bf16.gmra.mxu0 %v565
    %v750 = vpop.f32.mrf.mxu0
    %v751 = vadd.f32 0.0, %v750
    %v752 = vpop.f32.mrf.mxu0
    %v753 = vadd.f32 0.0, %v752
    %754 = vmatmul.bf16.gmra.mxu0 %v566
    %v755 = vpop.f32.mrf.mxu0
    %v756 = vadd.f32 0.0, %v755
    %v757 = vpop.f32.mrf.mxu0
    %v758 = vadd.f32 0.0, %v757
    %759 = vmatmul.bf16.gmra.mxu0 %v567
    %v760 = vpop.f32.mrf.mxu0
    %v761 = vadd.f32 0.0, %v760
    %v762 = vpop.f32.mrf.mxu0
    %v763 = vadd.f32 0.0, %v762
    %764 = vmatmul.bf16.gmra.mxu0 %v568
    %v765 = vpop.f32.mrf.mxu0
    %v766 = vadd.f32 0.0, %v765
    %v767 = vpop.f32.mrf.mxu0
    %v768 = vadd.f32 0.0, %v767
    %769 = vdwg.mxu0
    %v770 = vpack.c.bf16 %v613, %v611
    %v771 = vpack.c.bf16 %v618, %v616
    %v772 = vld [vmem:[%s4] sm:$0xf]
    %v773 = vld [vmem:[%s4 + $0x4] sm:$0xf]
    %v774 = vld [vmem:[%s4 + $0x8] sm:$0xf]
    %v775 = vld [vmem:[%s4 + $0xc] sm:$0xf]
    %v776 = vld [vmem:[%s4 + $0x10] sm:$0xf]
    %v777 = vld [vmem:[%s4 + $0x14] sm:$0xf]
    %v778 = vld [vmem:[%s4 + $0x18] sm:$0xf]
    %v779 = vld [vmem:[%s4 + $0x1c] sm:$0xf]
    %v780 = vld [vmem:[%s4 + $0x20] sm:$0xf]
    %v781 = vld [vmem:[%s4 + $0x24] sm:$0xf]
    %v782 = vld [vmem:[%s4 + $0x28] sm:$0xf]
    %v783 = vld [vmem:[%s4 + $0x2c] sm:$0xf]
    %v784 = vld [vmem:[%s4 + $0x30] sm:$0xf]
    %v785 = vld [vmem:[%s4 + $0x34] sm:$0xf]
    %v786 = vld [vmem:[%s4 + $0x38] sm:$0xf]
    %v787 = vld [vmem:[%s4 + $0x3c] sm:$0xf]
    %v788 = vpack.c.bf16 %v623, %v621
    %v789 = vpack.c.bf16 %v628, %v626
    %v790 = vld [vmem:[%s4 + $0x40] sm:$0xf]
    %v791 = vld [vmem:[%s4 + $0x44] sm:$0xf]
    %v792 = vld [vmem:[%s4 + $0x48] sm:$0xf]
    %v793 = vld [vmem:[%s4 + $0x4c] sm:$0xf]
    %v794 = vld [vmem:[%s4 + $0x50] sm:$0xf]
    %v795 = vld [vmem:[%s4 + $0x54] sm:$0xf]
    %v796 = vld [vmem:[%s4 + $0x58] sm:$0xf]
    %v797 = vld [vmem:[%s4 + $0x5c] sm:$0xf]
    %v798 = vld [vmem:[%s4 + $0x60] sm:$0xf]
    %v799 = vld [vmem:[%s4 + $0x64] sm:$0xf]
    %v800 = vld [vmem:[%s4 + $0x68] sm:$0xf]
    %v801 = vld [vmem:[%s4 + $0x6c] sm:$0xf]
    %v802 = vld [vmem:[%s4 + $0x70] sm:$0xf]
    %v803 = vld [vmem:[%s4 + $0x74] sm:$0xf]
    %v804 = vld [vmem:[%s4 + $0x78] sm:$0xf]
    %v805 = vld [vmem:[%s4 + $0x7c] sm:$0xf]
    %v822 = vunpack.c.l.b16 %v790
    %v823 = vunpack.c.l.b16 %v791
    %v824 = vunpack.c.l.b16 %v792
    %v825 = vunpack.c.l.b16 %v793
    %v826 = vunpack.c.l.b16 %v794
    %v827 = vunpack.c.l.b16 %v795
    %v828 = vunpack.c.l.b16 %v796
    %v829 = vunpack.c.l.b16 %v797
    %v830 = vunpack.c.l.b16 %v798
    %v831 = vunpack.c.l.b16 %v799
    %v832 = vunpack.c.l.b16 %v800
    %v833 = vunpack.c.l.b16 %v801
    %v834 = vunpack.c.l.b16 %v802
    %v835 = vunpack.c.l.b16 %v803
    %v836 = vunpack.c.l.b16 %v804
    %v837 = vunpack.c.l.b16 %v805
    %v838 = vpack.c.b16 %v823, %v822
    %v839 = vpack.c.b16 %v825, %v824
    %v840 = vpack.c.b16 %v827, %v826
    %v841 = vpack.c.b16 %v829, %v828
    %v842 = vpack.c.b16 %v831, %v830
    %v843 = vpack.c.b16 %v833, %v832
    %v844 = vpack.c.b16 %v835, %v834
    %v845 = vpack.c.b16 %v837, %v836
    %854 = vmatpush.bf16.msra.mxu0 %v845
    %855 = vmatpush.bf16.msra.mxu0 %v844
    %856 = vmatpush.bf16.msra.mxu0 %v843
    %857 = vmatpush.bf16.msra.mxu0 %v842
    %858 = vmatpush.bf16.msra.mxu0 %v841
    %859 = vmatpush.bf16.msra.mxu0 %v840
    %860 = vmatpush.bf16.msra.mxu0 %v839
    %861 = vmatpush.bf16.msra.mxu0 %v838
    %862 = vmatmul.bf16.gmra.mxu0 %v788
    %v863 = vpop.f32.mrf.mxu0
    %v864 = vadd.f32 0.0, %v863
    %v865 = vpop.f32.mrf.mxu0
    %v866 = vadd.f32 0.0, %v865
    %867 = vmatmul.bf16.gmra.mxu0 %v789
    %v868 = vpop.f32.mrf.mxu0
    %v869 = vadd.f32 0.0, %v868
    %v870 = vpop.f32.mrf.mxu0
    %v871 = vadd.f32 0.0, %v870
    %872 = vdwg.mxu0
    %v889 = vunpack.c.l.b16 %v772
    %v890 = vunpack.c.l.b16 %v773
    %v891 = vunpack.c.l.b16 %v774
    %v892 = vunpack.c.l.b16 %v775
    %v893 = vunpack.c.l.b16 %v776
    %v894 = vunpack.c.l.b16 %v777
    %v895 = vunpack.c.l.b16 %v778
    %v896 = vunpack.c.l.b16 %v779
    %v897 = vunpack.c.l.b16 %v780
    %v898 = vunpack.c.l.b16 %v781
    %v899 = vunpack.c.l.b16 %v782
    %v900 = vunpack.c.l.b16 %v783
    %v901 = vunpack.c.l.b16 %v784
    %v902 = vunpack.c.l.b16 %v785
    %v903 = vunpack.c.l.b16 %v786
    %v904 = vunpack.c.l.b16 %v787
    %v905 = vpack.c.b16 %v890, %v889
    %v906 = vpack.c.b16 %v892, %v891
    %v907 = vpack.c.b16 %v894, %v893
    %v908 = vpack.c.b16 %v896, %v895
    %v909 = vpack.c.b16 %v898, %v897
    %v910 = vpack.c.b16 %v900, %v899
    %v911 = vpack.c.b16 %v902, %v901
    %v912 = vpack.c.b16 %v904, %v903
    %921 = vmatpush.bf16.msra.mxu0 %v912
    %922 = vmatpush.bf16.msra.mxu0 %v911
    %923 = vmatpush.bf16.msra.mxu0 %v910
    %924 = vmatpush.bf16.msra.mxu0 %v909
    %925 = vmatpush.bf16.msra.mxu0 %v908
    %926 = vmatpush.bf16.msra.mxu0 %v907
    %927 = vmatpush.bf16.msra.mxu0 %v906
    %928 = vmatpush.bf16.msra.mxu0 %v905
    %929 = vmatmul.bf16.gmra.mxu0 %v770
    %v930 = vpop.f32.mrf.mxu0
    %v931 = vadd.f32 %v864, %v930
    %v932 = vpop.f32.mrf.mxu0
    %v933 = vadd.f32 %v866, %v932
    %934 = vmatmul.bf16.gmra.mxu0 %v771
    %v935 = vpop.f32.mrf.mxu0
    %v936 = vadd.f32 %v869, %v935
    %v937 = vpop.f32.mrf.mxu0
    %v938 = vadd.f32 %v871, %v937
    %939 = vdwg.mxu0
    %v940 = vpack.c.bf16 %v633, %v631
    %v941 = vpack.c.bf16 %v638, %v636
    %v942 = vld [vmem:[%s4 + $0x80] sm:$0xf]
    %v943 = vld [vmem:[%s4 + $0x84] sm:$0xf]
    %v944 = vld [vmem:[%s4 + $0x88] sm:$0xf]
    %v945 = vld [vmem:[%s4 + $0x8c] sm:$0xf]
    %v946 = vld [vmem:[%s4 + $0x90] sm:$0xf]
    %v947 = vld [vmem:[%s4 + $0x94] sm:$0xf]
    %v948 = vld [vmem:[%s4 + $0x98] sm:$0xf]
    %v949 = vld [vmem:[%s4 + $0x9c] sm:$0xf]
    %v950 = vld [vmem:[%s4 + $0xa0] sm:$0xf]
    %v951 = vld [vmem:[%s4 + $0xa4] sm:$0xf]
    %v952 = vld [vmem:[%s4 + $0xa8] sm:$0xf]
    %v953 = vld [vmem:[%s4 + $0xac] sm:$0xf]
    %v954 = vld [vmem:[%s4 + $0xb0] sm:$0xf]
    %v955 = vld [vmem:[%s4 + $0xb4] sm:$0xf]
    %v956 = vld [vmem:[%s4 + $0xb8] sm:$0xf]
    %v957 = vld [vmem:[%s4 + $0xbc] sm:$0xf]
    %v974 = vunpack.c.l.b16 %v942
    %v975 = vunpack.c.l.b16 %v943
    %v976 = vunpack.c.l.b16 %v944
    %v977 = vunpack.c.l.b16 %v945
    %v978 = vunpack.c.l.b16 %v946
    %v979 = vunpack.c.l.b16 %v947
    %v980 = vunpack.c.l.b16 %v948
    %v981 = vunpack.c.l.b16 %v949
    %v982 = vunpack.c.l.b16 %v950
    %v983 = vunpack.c.l.b16 %v951
    %v984 = vunpack.c.l.b16 %v952
    %v985 = vunpack.c.l.b16 %v953
    %v986 = vunpack.c.l.b16 %v954
    %v987 = vunpack.c.l.b16 %v955
    %v988 = vunpack.c.l.b16 %v956
    %v989 = vunpack.c.l.b16 %v957
    %v990 = vpack.c.b16 %v975, %v974
    %v991 = vpack.c.b16 %v977, %v976
    %v992 = vpack.c.b16 %v979, %v978
    %v993 = vpack.c.b16 %v981, %v980
    %v994 = vpack.c.b16 %v983, %v982
    %v995 = vpack.c.b16 %v985, %v984
    %v996 = vpack.c.b16 %v987, %v986
    %v997 = vpack.c.b16 %v989, %v988
    %1006 = vmatpush.bf16.msra.mxu0 %v997
    %1007 = vmatpush.bf16.msra.mxu0 %v996
    %1008 = vmatpush.bf16.msra.mxu0 %v995
    %1009 = vmatpush.bf16.msra.mxu0 %v994
    %1010 = vmatpush.bf16.msra.mxu0 %v993
    %1011 = vmatpush.bf16.msra.mxu0 %v992
    %1012 = vmatpush.bf16.msra.mxu0 %v991
    %1013 = vmatpush.bf16.msra.mxu0 %v990
    %1014 = vmatmul.bf16.gmra.mxu0 %v940
    %v1015 = vpop.f32.mrf.mxu0
    %v1016 = vadd.f32 0.0, %v1015
    %v1017 = vpop.f32.mrf.mxu0
    %v1018 = vadd.f32 0.0, %v1017
    %1019 = vmatmul.bf16.gmra.mxu0 %v941
    %v1020 = vpop.f32.mrf.mxu0
    %v1021 = vadd.f32 0.0, %v1020
    %v1022 = vpop.f32.mrf.mxu0
    %v1023 = vadd.f32 0.0, %v1022
    %1024 = vdwg.mxu0
    %v1025 = vadd.f32 %v931, %v1016
    %v1026 = vadd.f32 %v933, %v1018
    %v1027 = vadd.f32 %v936, %v1021
    %v1028 = vadd.f32 %v938, %v1023
    %v1029 = vpack.c.bf16 %v643, %v641
    %v1030 = vpack.c.bf16 %v648, %v646
    %v1031 = vld [vmem:[%s4 + $0xc0] sm:$0xf]
    %v1032 = vld [vmem:[%s4 + $0xc4] sm:$0xf]
    %v1033 = vld [vmem:[%s4 + $0xc8] sm:$0xf]
    %v1034 = vld [vmem:[%s4 + $0xcc] sm:$0xf]
    %v1035 = vld [vmem:[%s4 + $0xd0] sm:$0xf]
    %v1036 = vld [vmem:[%s4 + $0xd4] sm:$0xf]
    %v1037 = vld [vmem:[%s4 + $0xd8] sm:$0xf]
    %v1038 = vld [vmem:[%s4 + $0xdc] sm:$0xf]
    %v1039 = vld [vmem:[%s4 + $0xe0] sm:$0xf]
    %v1040 = vld [vmem:[%s4 + $0xe4] sm:$0xf]
    %v1041 = vld [vmem:[%s4 + $0xe8] sm:$0xf]
    %v1042 = vld [vmem:[%s4 + $0xec] sm:$0xf]
    %v1043 = vld [vmem:[%s4 + $0xf0] sm:$0xf]
    %v1044 = vld [vmem:[%s4 + $0xf4] sm:$0xf]
    %v1045 = vld [vmem:[%s4 + $0xf8] sm:$0xf]
    %v1046 = vld [vmem:[%s4 + $0xfc] sm:$0xf]
    %v1063 = vunpack.c.l.b16 %v1031
    %v1064 = vunpack.c.l.b16 %v1032
    %v1065 = vunpack.c.l.b16 %v1033
    %v1066 = vunpack.c.l.b16 %v1034
    %v1067 = vunpack.c.l.b16 %v1035
    %v1068 = vunpack.c.l.b16 %v1036
    %v1069 = vunpack.c.l.b16 %v1037
    %v1070 = vunpack.c.l.b16 %v1038
    %v1071 = vunpack.c.l.b16 %v1039
    %v1072 = vunpack.c.l.b16 %v1040
    %v1073 = vunpack.c.l.b16 %v1041
    %v1074 = vunpack.c.l.b16 %v1042
    %v1075 = vunpack.c.l.b16 %v1043
    %v1076 = vunpack.c.l.b16 %v1044
    %v1077 = vunpack.c.l.b16 %v1045
    %v1078 = vunpack.c.l.b16 %v1046
    %v1079 = vpack.c.b16 %v1064, %v1063
    %v1080 = vpack.c.b16 %v1066, %v1065
    %v1081 = vpack.c.b16 %v1068, %v1067
    %v1082 = vpack.c.b16 %v1070, %v1069
    %v1083 = vpack.c.b16 %v1072, %v1071
    %v1084 = vpack.c.b16 %v1074, %v1073
    %v1085 = vpack.c.b16 %v1076, %v1075
    %v1086 = vpack.c.b16 %v1078, %v1077
    %1095 = vmatpush.bf16.msra.mxu0 %v1086
    %1096 = vmatpush.bf16.msra.mxu0 %v1085
    %1097 = vmatpush.bf16.msra.mxu0 %v1084
    %1098 = vmatpush.bf16.msra.mxu0 %v1083
    %1099 = vmatpush.bf16.msra.mxu0 %v1082
    %1100 = vmatpush.bf16.msra.mxu0 %v1081
    %1101 = vmatpush.bf16.msra.mxu0 %v1080
    %1102 = vmatpush.bf16.msra.mxu0 %v1079
    %1103 = vmatmul.bf16.gmra.mxu0 %v1029
    %v1104 = vpop.f32.mrf.mxu0
    %v1105 = vadd.f32 0.0, %v1104
    %v1106 = vpop.f32.mrf.mxu0
    %v1107 = vadd.f32 0.0, %v1106
    %1108 = vmatmul.bf16.gmra.mxu0 %v1030
    %v1109 = vpop.f32.mrf.mxu0
    %v1110 = vadd.f32 0.0, %v1109
    %v1111 = vpop.f32.mrf.mxu0
    %v1112 = vadd.f32 0.0, %v1111
    %1113 = vdwg.mxu0
    %v1114 = vadd.f32 %v1025, %v1105
    %v1115 = vadd.f32 %v1026, %v1107
    %v1116 = vadd.f32 %v1027, %v1110
    %v1117 = vadd.f32 %v1028, %v1112
    %v1118 = vpack.c.bf16 %v653, %v651
    %v1119 = vpack.c.bf16 %v658, %v656
    %v1120 = vld [vmem:[%s4 + $0x100] sm:$0xf]
    %v1121 = vld [vmem:[%s4 + $0x104] sm:$0xf]
    %v1122 = vld [vmem:[%s4 + $0x108] sm:$0xf]
    %v1123 = vld [vmem:[%s4 + $0x10c] sm:$0xf]
    %v1124 = vld [vmem:[%s4 + $0x110] sm:$0xf]
    %v1125 = vld [vmem:[%s4 + $0x114] sm:$0xf]
    %v1126 = vld [vmem:[%s4 + $0x118] sm:$0xf]
    %v1127 = vld [vmem:[%s4 + $0x11c] sm:$0xf]
    %v1128 = vld [vmem:[%s4 + $0x120] sm:$0xf]
    %v1129 = vld [vmem:[%s4 + $0x124] sm:$0xf]
    %v1130 = vld [vmem:[%s4 + $0x128] sm:$0xf]
    %v1131 = vld [vmem:[%s4 + $0x12c] sm:$0xf]
    %v1132 = vld [vmem:[%s4 + $0x130] sm:$0xf]
    %v1133 = vld [vmem:[%s4 + $0x134] sm:$0xf]
    %v1134 = vld [vmem:[%s4 + $0x138] sm:$0xf]
    %v1135 = vld [vmem:[%s4 + $0x13c] sm:$0xf]
    %v1152 = vunpack.c.l.b16 %v1120
    %v1153 = vunpack.c.l.b16 %v1121
    %v1154 = vunpack.c.l.b16 %v1122
    %v1155 = vunpack.c.l.b16 %v1123
    %v1156 = vunpack.c.l.b16 %v1124
    %v1157 = vunpack.c.l.b16 %v1125
    %v1158 = vunpack.c.l.b16 %v1126
    %v1159 = vunpack.c.l.b16 %v1127
    %v1160 = vunpack.c.l.b16 %v1128
    %v1161 = vunpack.c.l.b16 %v1129
    %v1162 = vunpack.c.l.b16 %v1130
    %v1163 = vunpack.c.l.b16 %v1131
    %v1164 = vunpack.c.l.b16 %v1132
    %v1165 = vunpack.c.l.b16 %v1133
    %v1166 = vunpack.c.l.b16 %v1134
    %v1167 = vunpack.c.l.b16 %v1135
    %v1168 = vpack.c.b16 %v1153, %v1152
    %v1169 = vpack.c.b16 %v1155, %v1154
    %v1170 = vpack.c.b16 %v1157, %v1156
    %v1171 = vpack.c.b16 %v1159, %v1158
    %v1172 = vpack.c.b16 %v1161, %v1160
    %v1173 = vpack.c.b16 %v1163, %v1162
    %v1174 = vpack.c.b16 %v1165, %v1164
    %v1175 = vpack.c.b16 %v1167, %v1166
    %1184 = vmatpush.bf16.msra.mxu0 %v1175
    %1185 = vmatpush.bf16.msra.mxu0 %v1174
    %1186 = vmatpush.bf16.msra.mxu0 %v1173
    %1187 = vmatpush.bf16.msra.mxu0 %v1172
    %1188 = vmatpush.bf16.msra.mxu0 %v1171
    %1189 = vmatpush.bf16.msra.mxu0 %v1170
    %1190 = vmatpush.bf16.msra.mxu0 %v1169
    %1191 = vmatpush.bf16.msra.mxu0 %v1168
    %1192 = vmatmul.bf16.gmra.mxu0 %v1118
    %v1193 = vpop.f32.mrf.mxu0
    %v1194 = vadd.f32 0.0, %v1193
    %v1195 = vpop.f32.mrf.mxu0
    %v1196 = vadd.f32 0.0, %v1195
    %1197 = vmatmul.bf16.gmra.mxu0 %v1119
    %v1198 = vpop.f32.mrf.mxu0
    %v1199 = vadd.f32 0.0, %v1198
    %v1200 = vpop.f32.mrf.mxu0
    %v1201 = vadd.f32 0.0, %v1200
    %1202 = vdwg.mxu0
    %v1203 = vadd.f32 %v1114, %v1194
    %v1204 = vadd.f32 %v1115, %v1196
    %v1205 = vadd.f32 %v1116, %v1199
    %v1206 = vadd.f32 %v1117, %v1201
    %v1207 = vpack.c.bf16 %v663, %v661
    %v1208 = vpack.c.bf16 %v668, %v666
    %v1209 = vld [vmem:[%s4 + $0x140] sm:$0xf]
    %v1210 = vld [vmem:[%s4 + $0x144] sm:$0xf]
    %v1211 = vld [vmem:[%s4 + $0x148] sm:$0xf]
    %v1212 = vld [vmem:[%s4 + $0x14c] sm:$0xf]
    %v1213 = vld [vmem:[%s4 + $0x150] sm:$0xf]
    %v1214 = vld [vmem:[%s4 + $0x154] sm:$0xf]
    %v1215 = vld [vmem:[%s4 + $0x158] sm:$0xf]
    %v1216 = vld [vmem:[%s4 + $0x15c] sm:$0xf]
    %v1217 = vld [vmem:[%s4 + $0x160] sm:$0xf]
    %v1218 = vld [vmem:[%s4 + $0x164] sm:$0xf]
    %v1219 = vld [vmem:[%s4 + $0x168] sm:$0xf]
    %v1220 = vld [vmem:[%s4 + $0x16c] sm:$0xf]
    %v1221 = vld [vmem:[%s4 + $0x170] sm:$0xf]
    %v1222 = vld [vmem:[%s4 + $0x174] sm:$0xf]
    %v1223 = vld [vmem:[%s4 + $0x178] sm:$0xf]
    %v1224 = vld [vmem:[%s4 + $0x17c] sm:$0xf]
    %v1241 = vunpack.c.l.b16 %v1209
    %v1242 = vunpack.c.l.b16 %v1210
    %v1243 = vunpack.c.l.b16 %v1211
    %v1244 = vunpack.c.l.b16 %v1212
    %v1245 = vunpack.c.l.b16 %v1213
    %v1246 = vunpack.c.l.b16 %v1214
    %v1247 = vunpack.c.l.b16 %v1215
    %v1248 = vunpack.c.l.b16 %v1216
    %v1249 = vunpack.c.l.b16 %v1217
    %v1250 = vunpack.c.l.b16 %v1218
    %v1251 = vunpack.c.l.b16 %v1219
    %v1252 = vunpack.c.l.b16 %v1220
    %v1253 = vunpack.c.l.b16 %v1221
    %v1254 = vunpack.c.l.b16 %v1222
    %v1255 = vunpack.c.l.b16 %v1223
    %v1256 = vunpack.c.l.b16 %v1224
    %v1257 = vpack.c.b16 %v1242, %v1241
    %v1258 = vpack.c.b16 %v1244, %v1243
    %v1259 = vpack.c.b16 %v1246, %v1245
    %v1260 = vpack.c.b16 %v1248, %v1247
    %v1261 = vpack.c.b16 %v1250, %v1249
    %v1262 = vpack.c.b16 %v1252, %v1251
    %v1263 = vpack.c.b16 %v1254, %v1253
    %v1264 = vpack.c.b16 %v1256, %v1255
    %1273 = vmatpush.bf16.msra.mxu0 %v1264
    %1274 = vmatpush.bf16.msra.mxu0 %v1263
    %1275 = vmatpush.bf16.msra.mxu0 %v1262
    %1276 = vmatpush.bf16.msra.mxu0 %v1261
    %1277 = vmatpush.bf16.msra.mxu0 %v1260
    %1278 = vmatpush.bf16.msra.mxu0 %v1259
    %1279 = vmatpush.bf16.msra.mxu0 %v1258
    %1280 = vmatpush.bf16.msra.mxu0 %v1257
    %1281 = vmatmul.bf16.gmra.mxu0 %v1207
    %v1282 = vpop.f32.mrf.mxu0
    %v1283 = vadd.f32 0.0, %v1282
    %v1284 = vpop.f32.mrf.mxu0
    %v1285 = vadd.f32 0.0, %v1284
    %1286 = vmatmul.bf16.gmra.mxu0 %v1208
    %v1287 = vpop.f32.mrf.mxu0
    %v1288 = vadd.f32 0.0, %v1287
    %v1289 = vpop.f32.mrf.mxu0
    %v1290 = vadd.f32 0.0, %v1289
    %1291 = vdwg.mxu0
    %v1292 = vadd.f32 %v1203, %v1283
    %v1293 = vadd.f32 %v1204, %v1285
    %v1294 = vadd.f32 %v1205, %v1288
    %v1295 = vadd.f32 %v1206, %v1290
    %v1296 = vpack.c.bf16 %v673, %v671
    %v1297 = vpack.c.bf16 %v678, %v676
    %v1298 = vld [vmem:[%s4 + $0x180] sm:$0xf]
    %v1299 = vld [vmem:[%s4 + $0x184] sm:$0xf]
    %v1300 = vld [vmem:[%s4 + $0x188] sm:$0xf]
    %v1301 = vld [vmem:[%s4 + $0x18c] sm:$0xf]
    %v1302 = vld [vmem:[%s4 + $0x190] sm:$0xf]
    %v1303 = vld [vmem:[%s4 + $0x194] sm:$0xf]
    %v1304 = vld [vmem:[%s4 + $0x198] sm:$0xf]
    %v1305 = vld [vmem:[%s4 + $0x19c] sm:$0xf]
    %v1306 = vld [vmem:[%s4 + $0x1a0] sm:$0xf]
    %v1307 = vld [vmem:[%s4 + $0x1a4] sm:$0xf]
    %v1308 = vld [vmem:[%s4 + $0x1a8] sm:$0xf]
    %v1309 = vld [vmem:[%s4 + $0x1ac] sm:$0xf]
    %v1310 = vld [vmem:[%s4 + $0x1b0] sm:$0xf]
    %v1311 = vld [vmem:[%s4 + $0x1b4] sm:$0xf]
    %v1312 = vld [vmem:[%s4 + $0x1b8] sm:$0xf]
    %v1313 = vld [vmem:[%s4 + $0x1bc] sm:$0xf]
    %v1330 = vunpack.c.l.b16 %v1298
    %v1331 = vunpack.c.l.b16 %v1299
    %v1332 = vunpack.c.l.b16 %v1300
    %v1333 = vunpack.c.l.b16 %v1301
    %v1334 = vunpack.c.l.b16 %v1302
    %v1335 = vunpack.c.l.b16 %v1303
    %v1336 = vunpack.c.l.b16 %v1304
    %v1337 = vunpack.c.l.b16 %v1305
    %v1338 = vunpack.c.l.b16 %v1306
    %v1339 = vunpack.c.l.b16 %v1307
    %v1340 = vunpack.c.l.b16 %v1308
    %v1341 = vunpack.c.l.b16 %v1309
    %v1342 = vunpack.c.l.b16 %v1310
    %v1343 = vunpack.c.l.b16 %v1311
    %v1344 = vunpack.c.l.b16 %v1312
    %v1345 = vunpack.c.l.b16 %v1313
    %v1346 = vpack.c.b16 %v1331, %v1330
    %v1347 = vpack.c.b16 %v1333, %v1332
    %v1348 = vpack.c.b16 %v1335, %v1334
    %v1349 = vpack.c.b16 %v1337, %v1336
    %v1350 = vpack.c.b16 %v1339, %v1338
    %v1351 = vpack.c.b16 %v1341, %v1340
    %v1352 = vpack.c.b16 %v1343, %v1342
    %v1353 = vpack.c.b16 %v1345, %v1344
    %1362 = vmatpush.bf16.msra.mxu0 %v1353
    %1363 = vmatpush.bf16.msra.mxu0 %v1352
    %1364 = vmatpush.bf16.msra.mxu0 %v1351
    %1365 = vmatpush.bf16.msra.mxu0 %v1350
    %1366 = vmatpush.bf16.msra.mxu0 %v1349
    %1367 = vmatpush.bf16.msra.mxu0 %v1348
    %1368 = vmatpush.bf16.msra.mxu0 %v1347
    %1369 = vmatpush.bf16.msra.mxu0 %v1346
    %1370 = vmatmul.bf16.gmra.mxu0 %v1296
    %v1371 = vpop.f32.mrf.mxu0
    %v1372 = vadd.f32 0.0, %v1371
    %v1373 = vpop.f32.mrf.mxu0
    %v1374 = vadd.f32 0.0, %v1373
    %1375 = vmatmul.bf16.gmra.mxu0 %v1297
    %v1376 = vpop.f32.mrf.mxu0
    %v1377 = vadd.f32 0.0, %v1376
    %v1378 = vpop.f32.mrf.mxu0
    %v1379 = vadd.f32 0.0, %v1378
    %1380 = vdwg.mxu0
    %v1381 = vadd.f32 %v1292, %v1372
    %v1382 = vadd.f32 %v1293, %v1374
    %v1383 = vadd.f32 %v1294, %v1377
    %v1384 = vadd.f32 %v1295, %v1379
    %v1385 = vpack.c.bf16 %v683, %v681
    %v1386 = vpack.c.bf16 %v688, %v686
    %v1387 = vld [vmem:[%s4 + $0x1c0] sm:$0xf]
    %v1388 = vld [vmem:[%s4 + $0x1c4] sm:$0xf]
    %v1389 = vld [vmem:[%s4 + $0x1c8] sm:$0xf]
    %v1390 = vld [vmem:[%s4 + $0x1cc] sm:$0xf]
    %v1391 = vld [vmem:[%s4 + $0x1d0] sm:$0xf]
    %v1392 = vld [vmem:[%s4 + $0x1d4] sm:$0xf]
    %v1393 = vld [vmem:[%s4 + $0x1d8] sm:$0xf]
    %v1394 = vld [vmem:[%s4 + $0x1dc] sm:$0xf]
    %v1395 = vld [vmem:[%s4 + $0x1e0] sm:$0xf]
    %v1396 = vld [vmem:[%s4 + $0x1e4] sm:$0xf]
    %v1397 = vld [vmem:[%s4 + $0x1e8] sm:$0xf]
    %v1398 = vld [vmem:[%s4 + $0x1ec] sm:$0xf]
    %v1399 = vld [vmem:[%s4 + $0x1f0] sm:$0xf]
    %v1400 = vld [vmem:[%s4 + $0x1f4] sm:$0xf]
    %v1401 = vld [vmem:[%s4 + $0x1f8] sm:$0xf]
    %v1402 = vld [vmem:[%s4 + $0x1fc] sm:$0xf]
    %v1419 = vunpack.c.l.b16 %v1387
    %v1420 = vunpack.c.l.b16 %v1388
    %v1421 = vunpack.c.l.b16 %v1389
    %v1422 = vunpack.c.l.b16 %v1390
    %v1423 = vunpack.c.l.b16 %v1391
    %v1424 = vunpack.c.l.b16 %v1392
    %v1425 = vunpack.c.l.b16 %v1393
    %v1426 = vunpack.c.l.b16 %v1394
    %v1427 = vunpack.c.l.b16 %v1395
    %v1428 = vunpack.c.l.b16 %v1396
    %v1429 = vunpack.c.l.b16 %v1397
    %v1430 = vunpack.c.l.b16 %v1398
    %v1431 = vunpack.c.l.b16 %v1399
    %v1432 = vunpack.c.l.b16 %v1400
    %v1433 = vunpack.c.l.b16 %v1401
    %v1434 = vunpack.c.l.b16 %v1402
    %v1435 = vpack.c.b16 %v1420, %v1419
    %v1436 = vpack.c.b16 %v1422, %v1421
    %v1437 = vpack.c.b16 %v1424, %v1423
    %v1438 = vpack.c.b16 %v1426, %v1425
    %v1439 = vpack.c.b16 %v1428, %v1427
    %v1440 = vpack.c.b16 %v1430, %v1429
    %v1441 = vpack.c.b16 %v1432, %v1431
    %v1442 = vpack.c.b16 %v1434, %v1433
    %1451 = vmatpush.bf16.msra.mxu0 %v1442
    %1452 = vmatpush.bf16.msra.mxu0 %v1441
    %1453 = vmatpush.bf16.msra.mxu0 %v1440
    %1454 = vmatpush.bf16.msra.mxu0 %v1439
    %1455 = vmatpush.bf16.msra.mxu0 %v1438
    %1456 = vmatpush.bf16.msra.mxu0 %v1437
    %1457 = vmatpush.bf16.msra.mxu0 %v1436
    %1458 = vmatpush.bf16.msra.mxu0 %v1435
    %1459 = vmatmul.bf16.gmra.mxu0 %v1385
    %v1460 = vpop.f32.mrf.mxu0
    %v1461 = vadd.f32 0.0, %v1460
    %v1462 = vpop.f32.mrf.mxu0
    %v1463 = vadd.f32 0.0, %v1462
    %1464 = vmatmul.bf16.gmra.mxu0 %v1386
    %v1465 = vpop.f32.mrf.mxu0
    %v1466 = vadd.f32 0.0, %v1465
    %v1467 = vpop.f32.mrf.mxu0
    %v1468 = vadd.f32 0.0, %v1467
    %1469 = vdwg.mxu0
    %v1470 = vadd.f32 %v1381, %v1461
    %v1471 = vadd.f32 %v1382, %v1463
    %v1472 = vadd.f32 %v1383, %v1466
    %v1473 = vadd.f32 %v1384, %v1468
    %v1474 = vpack.c.bf16 %v693, %v691
    %v1475 = vpack.c.bf16 %v698, %v696
    %v1476 = vld [vmem:[%s4 + $0x200] sm:$0xf]
    %v1477 = vld [vmem:[%s4 + $0x204] sm:$0xf]
    %v1478 = vld [vmem:[%s4 + $0x208] sm:$0xf]
    %v1479 = vld [vmem:[%s4 + $0x20c] sm:$0xf]
    %v1480 = vld [vmem:[%s4 + $0x210] sm:$0xf]
    %v1481 = vld [vmem:[%s4 + $0x214] sm:$0xf]
    %v1482 = vld [vmem:[%s4 + $0x218] sm:$0xf]
    %v1483 = vld [vmem:[%s4 + $0x21c] sm:$0xf]
    %v1484 = vld [vmem:[%s4 + $0x220] sm:$0xf]
    %v1485 = vld [vmem:[%s4 + $0x224] sm:$0xf]
    %v1486 = vld [vmem:[%s4 + $0x228] sm:$0xf]
    %v1487 = vld [vmem:[%s4 + $0x22c] sm:$0xf]
    %v1488 = vld [vmem:[%s4 + $0x230] sm:$0xf]
    %v1489 = vld [vmem:[%s4 + $0x234] sm:$0xf]
    %v1490 = vld [vmem:[%s4 + $0x238] sm:$0xf]
    %v1491 = vld [vmem:[%s4 + $0x23c] sm:$0xf]
    %v1508 = vunpack.c.l.b16 %v1476
    %v1509 = vunpack.c.l.b16 %v1477
    %v1510 = vunpack.c.l.b16 %v1478
    %v1511 = vunpack.c.l.b16 %v1479
    %v1512 = vunpack.c.l.b16 %v1480
    %v1513 = vunpack.c.l.b16 %v1481
    %v1514 = vunpack.c.l.b16 %v1482
    %v1515 = vunpack.c.l.b16 %v1483
    %v1516 = vunpack.c.l.b16 %v1484
    %v1517 = vunpack.c.l.b16 %v1485
    %v1518 = vunpack.c.l.b16 %v1486
    %v1519 = vunpack.c.l.b16 %v1487
    %v1520 = vunpack.c.l.b16 %v1488
    %v1521 = vunpack.c.l.b16 %v1489
    %v1522 = vunpack.c.l.b16 %v1490
    %v1523 = vunpack.c.l.b16 %v1491
    %v1524 = vpack.c.b16 %v1509, %v1508
    %v1525 = vpack.c.b16 %v1511, %v1510
    %v1526 = vpack.c.b16 %v1513, %v1512
    %v1527 = vpack.c.b16 %v1515, %v1514
    %v1528 = vpack.c.b16 %v1517, %v1516
    %v1529 = vpack.c.b16 %v1519, %v1518
    %v1530 = vpack.c.b16 %v1521, %v1520
    %v1531 = vpack.c.b16 %v1523, %v1522
    %1540 = vmatpush.bf16.msra.mxu0 %v1531
    %1541 = vmatpush.bf16.msra.mxu0 %v1530
    %1542 = vmatpush.bf16.msra.mxu0 %v1529
    %1543 = vmatpush.bf16.msra.mxu0 %v1528
    %1544 = vmatpush.bf16.msra.mxu0 %v1527
    %1545 = vmatpush.bf16.msra.mxu0 %v1526
    %1546 = vmatpush.bf16.msra.mxu0 %v1525
    %1547 = vmatpush.bf16.msra.mxu0 %v1524
    %1548 = vmatmul.bf16.gmra.mxu0 %v1474
    %v1549 = vpop.f32.mrf.mxu0
    %v1550 = vadd.f32 0.0, %v1549
    %v1551 = vpop.f32.mrf.mxu0
    %v1552 = vadd.f32 0.0, %v1551
    %1553 = vmatmul.bf16.gmra.mxu0 %v1475
    %v1554 = vpop.f32.mrf.mxu0
    %v1555 = vadd.f32 0.0, %v1554
    %v1556 = vpop.f32.mrf.mxu0
    %v1557 = vadd.f32 0.0, %v1556
    %1558 = vdwg.mxu0
    %v1559 = vadd.f32 %v1470, %v1550
    %v1560 = vadd.f32 %v1471, %v1552
    %v1561 = vadd.f32 %v1472, %v1555
    %v1562 = vadd.f32 %v1473, %v1557
    %v1563 = vpack.c.bf16 %v703, %v701
    %v1564 = vpack.c.bf16 %v708, %v706
    %v1565 = vld [vmem:[%s4 + $0x240] sm:$0xf]
    %v1566 = vld [vmem:[%s4 + $0x244] sm:$0xf]
    %v1567 = vld [vmem:[%s4 + $0x248] sm:$0xf]
    %v1568 = vld [vmem:[%s4 + $0x24c] sm:$0xf]
    %v1569 = vld [vmem:[%s4 + $0x250] sm:$0xf]
    %v1570 = vld [vmem:[%s4 + $0x254] sm:$0xf]
    %v1571 = vld [vmem:[%s4 + $0x258] sm:$0xf]
    %v1572 = vld [vmem:[%s4 + $0x25c] sm:$0xf]
    %v1573 = vld [vmem:[%s4 + $0x260] sm:$0xf]
    %v1574 = vld [vmem:[%s4 + $0x264] sm:$0xf]
    %v1575 = vld [vmem:[%s4 + $0x268] sm:$0xf]
    %v1576 = vld [vmem:[%s4 + $0x26c] sm:$0xf]
    %v1577 = vld [vmem:[%s4 + $0x270] sm:$0xf]
    %v1578 = vld [vmem:[%s4 + $0x274] sm:$0xf]
    %v1579 = vld [vmem:[%s4 + $0x278] sm:$0xf]
    %v1580 = vld [vmem:[%s4 + $0x27c] sm:$0xf]
    %v1597 = vunpack.c.l.b16 %v1565
    %v1598 = vunpack.c.l.b16 %v1566
    %v1599 = vunpack.c.l.b16 %v1567
    %v1600 = vunpack.c.l.b16 %v1568
    %v1601 = vunpack.c.l.b16 %v1569
    %v1602 = vunpack.c.l.b16 %v1570
    %v1603 = vunpack.c.l.b16 %v1571
    %v1604 = vunpack.c.l.b16 %v1572
    %v1605 = vunpack.c.l.b16 %v1573
    %v1606 = vunpack.c.l.b16 %v1574
    %v1607 = vunpack.c.l.b16 %v1575
    %v1608 = vunpack.c.l.b16 %v1576
    %v1609 = vunpack.c.l.b16 %v1577
    %v1610 = vunpack.c.l.b16 %v1578
    %v1611 = vunpack.c.l.b16 %v1579
    %v1612 = vunpack.c.l.b16 %v1580
    %v1613 = vpack.c.b16 %v1598, %v1597
    %v1614 = vpack.c.b16 %v1600, %v1599
    %v1615 = vpack.c.b16 %v1602, %v1601
    %v1616 = vpack.c.b16 %v1604, %v1603
    %v1617 = vpack.c.b16 %v1606, %v1605
    %v1618 = vpack.c.b16 %v1608, %v1607
    %v1619 = vpack.c.b16 %v1610, %v1609
    %v1620 = vpack.c.b16 %v1612, %v1611
    %1629 = vmatpush.bf16.msra.mxu0 %v1620
    %1630 = vmatpush.bf16.msra.mxu0 %v1619
    %1631 = vmatpush.bf16.msra.mxu0 %v1618
    %1632 = vmatpush.bf16.msra.mxu0 %v1617
    %1633 = vmatpush.bf16.msra.mxu0 %v1616
    %1634 = vmatpush.bf16.msra.mxu0 %v1615
    %1635 = vmatpush.bf16.msra.mxu0 %v1614
    %1636 = vmatpush.bf16.msra.mxu0 %v1613
    %1637 = vmatmul.bf16.gmra.mxu0 %v1563
    %v1638 = vpop.f32.mrf.mxu0
    %v1639 = vadd.f32 0.0, %v1638
    %v1640 = vpop.f32.mrf.mxu0
    %v1641 = vadd.f32 0.0, %v1640
    %1642 = vmatmul.bf16.gmra.mxu0 %v1564
    %v1643 = vpop.f32.mrf.mxu0
    %v1644 = vadd.f32 0.0, %v1643
    %v1645 = vpop.f32.mrf.mxu0
    %v1646 = vadd.f32 0.0, %v1645
    %1647 = vdwg.mxu0
    %v1648 = vadd.f32 %v1559, %v1639
    %v1649 = vadd.f32 %v1560, %v1641
    %v1650 = vadd.f32 %v1561, %v1644
    %v1651 = vadd.f32 %v1562, %v1646
    %v1652 = vpack.c.bf16 %v713, %v711
    %v1653 = vpack.c.bf16 %v718, %v716
    %v1654 = vld [vmem:[%s4 + $0x280] sm:$0xf]
    %v1655 = vld [vmem:[%s4 + $0x284] sm:$0xf]
    %v1656 = vld [vmem:[%s4 + $0x288] sm:$0xf]
    %v1657 = vld [vmem:[%s4 + $0x28c] sm:$0xf]
    %v1658 = vld [vmem:[%s4 + $0x290] sm:$0xf]
    %v1659 = vld [vmem:[%s4 + $0x294] sm:$0xf]
    %v1660 = vld [vmem:[%s4 + $0x298] sm:$0xf]
    %v1661 = vld [vmem:[%s4 + $0x29c] sm:$0xf]
    %v1662 = vld [vmem:[%s4 + $0x2a0] sm:$0xf]
    %v1663 = vld [vmem:[%s4 + $0x2a4] sm:$0xf]
    %v1664 = vld [vmem:[%s4 + $0x2a8] sm:$0xf]
    %v1665 = vld [vmem:[%s4 + $0x2ac] sm:$0xf]
    %v1666 = vld [vmem:[%s4 + $0x2b0] sm:$0xf]
    %v1667 = vld [vmem:[%s4 + $0x2b4] sm:$0xf]
    %v1668 = vld [vmem:[%s4 + $0x2b8] sm:$0xf]
    %v1669 = vld [vmem:[%s4 + $0x2bc] sm:$0xf]
    %v1686 = vunpack.c.l.b16 %v1654
    %v1687 = vunpack.c.l.b16 %v1655
    %v1688 = vunpack.c.l.b16 %v1656
    %v1689 = vunpack.c.l.b16 %v1657
    %v1690 = vunpack.c.l.b16 %v1658
    %v1691 = vunpack.c.l.b16 %v1659
    %v1692 = vunpack.c.l.b16 %v1660
    %v1693 = vunpack.c.l.b16 %v1661
    %v1694 = vunpack.c.l.b16 %v1662
    %v1695 = vunpack.c.l.b16 %v1663
    %v1696 = vunpack.c.l.b16 %v1664
    %v1697 = vunpack.c.l.b16 %v1665
    %v1698 = vunpack.c.l.b16 %v1666
    %v1699 = vunpack.c.l.b16 %v1667
    %v1700 = vunpack.c.l.b16 %v1668
    %v1701 = vunpack.c.l.b16 %v1669
    %v1702 = vpack.c.b16 %v1687, %v1686
    %v1703 = vpack.c.b16 %v1689, %v1688
    %v1704 = vpack.c.b16 %v1691, %v1690
    %v1705 = vpack.c.b16 %v1693, %v1692
    %v1706 = vpack.c.b16 %v1695, %v1694
    %v1707 = vpack.c.b16 %v1697, %v1696
    %v1708 = vpack.c.b16 %v1699, %v1698
    %v1709 = vpack.c.b16 %v1701, %v1700
    %1718 = vmatpush.bf16.msra.mxu0 %v1709
    %1719 = vmatpush.bf16.msra.mxu0 %v1708
    %1720 = vmatpush.bf16.msra.mxu0 %v1707
    %1721 = vmatpush.bf16.msra.mxu0 %v1706
    %1722 = vmatpush.bf16.msra.mxu0 %v1705
    %1723 = vmatpush.bf16.msra.mxu0 %v1704
    %1724 = vmatpush.bf16.msra.mxu0 %v1703
    %1725 = vmatpush.bf16.msra.mxu0 %v1702
    %1726 = vmatmul.bf16.gmra.mxu0 %v1652
    %v1727 = vpop.f32.mrf.mxu0
    %v1728 = vadd.f32 0.0, %v1727
    %v1729 = vpop.f32.mrf.mxu0
    %v1730 = vadd.f32 0.0, %v1729
    %1731 = vmatmul.bf16.gmra.mxu0 %v1653
    %v1732 = vpop.f32.mrf.mxu0
    %v1733 = vadd.f32 0.0, %v1732
    %v1734 = vpop.f32.mrf.mxu0
    %v1735 = vadd.f32 0.0, %v1734
    %1736 = vdwg.mxu0
    %v1737 = vadd.f32 %v1648, %v1728
    %v1738 = vadd.f32 %v1649, %v1730
    %v1739 = vadd.f32 %v1650, %v1733
    %v1740 = vadd.f32 %v1651, %v1735
    %v1741 = vpack.c.bf16 %v723, %v721
    %v1742 = vpack.c.bf16 %v728, %v726
    %v1743 = vld [vmem:[%s4 + $0x2c0] sm:$0xf]
    %v1744 = vld [vmem:[%s4 + $0x2c4] sm:$0xf]
    %v1745 = vld [vmem:[%s4 + $0x2c8] sm:$0xf]
    %v1746 = vld [vmem:[%s4 + $0x2cc] sm:$0xf]
    %v1747 = vld [vmem:[%s4 + $0x2d0] sm:$0xf]
    %v1748 = vld [vmem:[%s4 + $0x2d4] sm:$0xf]
    %v1749 = vld [vmem:[%s4 + $0x2d8] sm:$0xf]
    %v1750 = vld [vmem:[%s4 + $0x2dc] sm:$0xf]
    %v1751 = vld [vmem:[%s4 + $0x2e0] sm:$0xf]
    %v1752 = vld [vmem:[%s4 + $0x2e4] sm:$0xf]
    %v1753 = vld [vmem:[%s4 + $0x2e8] sm:$0xf]
    %v1754 = vld [vmem:[%s4 + $0x2ec] sm:$0xf]
    %v1755 = vld [vmem:[%s4 + $0x2f0] sm:$0xf]
    %v1756 = vld [vmem:[%s4 + $0x2f4] sm:$0xf]
    %v1757 = vld [vmem:[%s4 + $0x2f8] sm:$0xf]
    %v1758 = vld [vmem:[%s4 + $0x2fc] sm:$0xf]
    %v1775 = vunpack.c.l.b16 %v1743
    %v1776 = vunpack.c.l.b16 %v1744
    %v1777 = vunpack.c.l.b16 %v1745
    %v1778 = vunpack.c.l.b16 %v1746
    %v1779 = vunpack.c.l.b16 %v1747
    %v1780 = vunpack.c.l.b16 %v1748
    %v1781 = vunpack.c.l.b16 %v1749
    %v1782 = vunpack.c.l.b16 %v1750
    %v1783 = vunpack.c.l.b16 %v1751
    %v1784 = vunpack.c.l.b16 %v1752
    %v1785 = vunpack.c.l.b16 %v1753
    %v1786 = vunpack.c.l.b16 %v1754
    %v1787 = vunpack.c.l.b16 %v1755
    %v1788 = vunpack.c.l.b16 %v1756
    %v1789 = vunpack.c.l.b16 %v1757
    %v1790 = vunpack.c.l.b16 %v1758
    %v1791 = vpack.c.b16 %v1776, %v1775
    %v1792 = vpack.c.b16 %v1778, %v1777
    %v1793 = vpack.c.b16 %v1780, %v1779
    %v1794 = vpack.c.b16 %v1782, %v1781
    %v1795 = vpack.c.b16 %v1784, %v1783
    %v1796 = vpack.c.b16 %v1786, %v1785
    %v1797 = vpack.c.b16 %v1788, %v1787
    %v1798 = vpack.c.b16 %v1790, %v1789
    %1807 = vmatpush.bf16.msra.mxu0 %v1798
    %1808 = vmatpush.bf16.msra.mxu0 %v1797
    %1809 = vmatpush.bf16.msra.mxu0 %v1796
    %1810 = vmatpush.bf16.msra.mxu0 %v1795
    %1811 = vmatpush.bf16.msra.mxu0 %v1794
    %1812 = vmatpush.bf16.msra.mxu0 %v1793
    %1813 = vmatpush.bf16.msra.mxu0 %v1792
    %1814 = vmatpush.bf16.msra.mxu0 %v1791
    %1815 = vmatmul.bf16.gmra.mxu0 %v1741
    %v1816 = vpop.f32.mrf.mxu0
    %v1817 = vadd.f32 0.0, %v1816
    %v1818 = vpop.f32.mrf.mxu0
    %v1819 = vadd.f32 0.0, %v1818
    %1820 = vmatmul.bf16.gmra.mxu0 %v1742
    %v1821 = vpop.f32.mrf.mxu0
    %v1822 = vadd.f32 0.0, %v1821
    %v1823 = vpop.f32.mrf.mxu0
    %v1824 = vadd.f32 0.0, %v1823
    %1825 = vdwg.mxu0
    %v1826 = vadd.f32 %v1737, %v1817
    %v1827 = vadd.f32 %v1738, %v1819
    %v1828 = vadd.f32 %v1739, %v1822
    %v1829 = vadd.f32 %v1740, %v1824
    %v1830 = vpack.c.bf16 %v733, %v731
    %v1831 = vpack.c.bf16 %v738, %v736
    %v1832 = vld [vmem:[%s4 + $0x300] sm:$0xf]
    %v1833 = vld [vmem:[%s4 + $0x304] sm:$0xf]
    %v1834 = vld [vmem:[%s4 + $0x308] sm:$0xf]
    %v1835 = vld [vmem:[%s4 + $0x30c] sm:$0xf]
    %v1836 = vld [vmem:[%s4 + $0x310] sm:$0xf]
    %v1837 = vld [vmem:[%s4 + $0x314] sm:$0xf]
    %v1838 = vld [vmem:[%s4 + $0x318] sm:$0xf]
    %v1839 = vld [vmem:[%s4 + $0x31c] sm:$0xf]
    %v1840 = vld [vmem:[%s4 + $0x320] sm:$0xf]
    %v1841 = vld [vmem:[%s4 + $0x324] sm:$0xf]
    %v1842 = vld [vmem:[%s4 + $0x328] sm:$0xf]
    %v1843 = vld [vmem:[%s4 + $0x32c] sm:$0xf]
    %v1844 = vld [vmem:[%s4 + $0x330] sm:$0xf]
    %v1845 = vld [vmem:[%s4 + $0x334] sm:$0xf]
    %v1846 = vld [vmem:[%s4 + $0x338] sm:$0xf]
    %v1847 = vld [vmem:[%s4 + $0x33c] sm:$0xf]
    %v1864 = vunpack.c.l.b16 %v1832
    %v1865 = vunpack.c.l.b16 %v1833
    %v1866 = vunpack.c.l.b16 %v1834
    %v1867 = vunpack.c.l.b16 %v1835
    %v1868 = vunpack.c.l.b16 %v1836
    %v1869 = vunpack.c.l.b16 %v1837
    %v1870 = vunpack.c.l.b16 %v1838
    %v1871 = vunpack.c.l.b16 %v1839
    %v1872 = vunpack.c.l.b16 %v1840
    %v1873 = vunpack.c.l.b16 %v1841
    %v1874 = vunpack.c.l.b16 %v1842
    %v1875 = vunpack.c.l.b16 %v1843
    %v1876 = vunpack.c.l.b16 %v1844
    %v1877 = vunpack.c.l.b16 %v1845
    %v1878 = vunpack.c.l.b16 %v1846
    %v1879 = vunpack.c.l.b16 %v1847
    %v1880 = vpack.c.b16 %v1865, %v1864
    %v1881 = vpack.c.b16 %v1867, %v1866
    %v1882 = vpack.c.b16 %v1869, %v1868
    %v1883 = vpack.c.b16 %v1871, %v1870
    %v1884 = vpack.c.b16 %v1873, %v1872
    %v1885 = vpack.c.b16 %v1875, %v1874
    %v1886 = vpack.c.b16 %v1877, %v1876
    %v1887 = vpack.c.b16 %v1879, %v1878
    %1896 = vmatpush.bf16.msra.mxu0 %v1887
    %1897 = vmatpush.bf16.msra.mxu0 %v1886
    %1898 = vmatpush.bf16.msra.mxu0 %v1885
    %1899 = vmatpush.bf16.msra.mxu0 %v1884
    %1900 = vmatpush.bf16.msra.mxu0 %v1883
    %1901 = vmatpush.bf16.msra.mxu0 %v1882
    %1902 = vmatpush.bf16.msra.mxu0 %v1881
    %1903 = vmatpush.bf16.msra.mxu0 %v1880
    %1904 = vmatmul.bf16.gmra.mxu0 %v1830
    %v1905 = vpop.f32.mrf.mxu0
    %v1906 = vadd.f32 0.0, %v1905
    %v1907 = vpop.f32.mrf.mxu0
    %v1908 = vadd.f32 0.0, %v1907
    %1909 = vmatmul.bf16.gmra.mxu0 %v1831
    %v1910 = vpop.f32.mrf.mxu0
    %v1911 = vadd.f32 0.0, %v1910
    %v1912 = vpop.f32.mrf.mxu0
    %v1913 = vadd.f32 0.0, %v1912
    %1914 = vdwg.mxu0
    %v1915 = vadd.f32 %v1826, %v1906
    %v1916 = vadd.f32 %v1827, %v1908
    %v1917 = vadd.f32 %v1828, %v1911
    %v1918 = vadd.f32 %v1829, %v1913
    %v1919 = vpack.c.bf16 %v743, %v741
    %v1920 = vpack.c.bf16 %v748, %v746
    %v1921 = vld [vmem:[%s4 + $0x340] sm:$0xf]
    %v1922 = vld [vmem:[%s4 + $0x344] sm:$0xf]
    %v1923 = vld [vmem:[%s4 + $0x348] sm:$0xf]
    %v1924 = vld [vmem:[%s4 + $0x34c] sm:$0xf]
    %v1925 = vld [vmem:[%s4 + $0x350] sm:$0xf]
    %v1926 = vld [vmem:[%s4 + $0x354] sm:$0xf]
    %v1927 = vld [vmem:[%s4 + $0x358] sm:$0xf]
    %v1928 = vld [vmem:[%s4 + $0x35c] sm:$0xf]
    %v1929 = vld [vmem:[%s4 + $0x360] sm:$0xf]
    %v1930 = vld [vmem:[%s4 + $0x364] sm:$0xf]
    %v1931 = vld [vmem:[%s4 + $0x368] sm:$0xf]
    %v1932 = vld [vmem:[%s4 + $0x36c] sm:$0xf]
    %v1933 = vld [vmem:[%s4 + $0x370] sm:$0xf]
    %v1934 = vld [vmem:[%s4 + $0x374] sm:$0xf]
    %v1935 = vld [vmem:[%s4 + $0x378] sm:$0xf]
    %v1936 = vld [vmem:[%s4 + $0x37c] sm:$0xf]
    %v1953 = vunpack.c.l.b16 %v1921
    %v1954 = vunpack.c.l.b16 %v1922
    %v1955 = vunpack.c.l.b16 %v1923
    %v1956 = vunpack.c.l.b16 %v1924
    %v1957 = vunpack.c.l.b16 %v1925
    %v1958 = vunpack.c.l.b16 %v1926
    %v1959 = vunpack.c.l.b16 %v1927
    %v1960 = vunpack.c.l.b16 %v1928
    %v1961 = vunpack.c.l.b16 %v1929
    %v1962 = vunpack.c.l.b16 %v1930
    %v1963 = vunpack.c.l.b16 %v1931
    %v1964 = vunpack.c.l.b16 %v1932
    %v1965 = vunpack.c.l.b16 %v1933
    %v1966 = vunpack.c.l.b16 %v1934
    %v1967 = vunpack.c.l.b16 %v1935
    %v1968 = vunpack.c.l.b16 %v1936
    %v1969 = vpack.c.b16 %v1954, %v1953
    %v1970 = vpack.c.b16 %v1956, %v1955
    %v1971 = vpack.c.b16 %v1958, %v1957
    %v1972 = vpack.c.b16 %v1960, %v1959
    %v1973 = vpack.c.b16 %v1962, %v1961
    %v1974 = vpack.c.b16 %v1964, %v1963
    %v1975 = vpack.c.b16 %v1966, %v1965
    %v1976 = vpack.c.b16 %v1968, %v1967
    %1985 = vmatpush.bf16.msra.mxu0 %v1976
    %1986 = vmatpush.bf16.msra.mxu0 %v1975
    %1987 = vmatpush.bf16.msra.mxu0 %v1974
    %1988 = vmatpush.bf16.msra.mxu0 %v1973
    %1989 = vmatpush.bf16.msra.mxu0 %v1972
    %1990 = vmatpush.bf16.msra.mxu0 %v1971
    %1991 = vmatpush.bf16.msra.mxu0 %v1970
    %1992 = vmatpush.bf16.msra.mxu0 %v1969
    %1993 = vmatmul.bf16.gmra.mxu0 %v1919
    %v1994 = vpop.f32.mrf.mxu0
    %v1995 = vadd.f32 0.0, %v1994
    %v1996 = vpop.f32.mrf.mxu0
    %v1997 = vadd.f32 0.0, %v1996
    %1998 = vmatmul.bf16.gmra.mxu0 %v1920
    %v1999 = vpop.f32.mrf.mxu0
    %v2000 = vadd.f32 0.0, %v1999
    %v2001 = vpop.f32.mrf.mxu0
    %v2002 = vadd.f32 0.0, %v2001
    %2003 = vdwg.mxu0
    %v2004 = vadd.f32 %v1915, %v1995
    %v2005 = vadd.f32 %v1916, %v1997
    %v2006 = vadd.f32 %v1917, %v2000
    %v2007 = vadd.f32 %v1918, %v2002
    %v2008 = vpack.c.bf16 %v753, %v751
    %v2009 = vpack.c.bf16 %v758, %v756
    %v2010 = vld [vmem:[%s4 + $0x380] sm:$0xf]
    %v2011 = vld [vmem:[%s4 + $0x384] sm:$0xf]
    %v2012 = vld [vmem:[%s4 + $0x388] sm:$0xf]
    %v2013 = vld [vmem:[%s4 + $0x38c] sm:$0xf]
    %v2014 = vld [vmem:[%s4 + $0x390] sm:$0xf]
    %v2015 = vld [vmem:[%s4 + $0x394] sm:$0xf]
    %v2016 = vld [vmem:[%s4 + $0x398] sm:$0xf]
    %v2017 = vld [vmem:[%s4 + $0x39c] sm:$0xf]
    %v2018 = vld [vmem:[%s4 + $0x3a0] sm:$0xf]
    %v2019 = vld [vmem:[%s4 + $0x3a4] sm:$0xf]
    %v2020 = vld [vmem:[%s4 + $0x3a8] sm:$0xf]
    %v2021 = vld [vmem:[%s4 + $0x3ac] sm:$0xf]
    %v2022 = vld [vmem:[%s4 + $0x3b0] sm:$0xf]
    %v2023 = vld [vmem:[%s4 + $0x3b4] sm:$0xf]
    %v2024 = vld [vmem:[%s4 + $0x3b8] sm:$0xf]
    %v2025 = vld [vmem:[%s4 + $0x3bc] sm:$0xf]
    %v2042 = vunpack.c.l.b16 %v2010
    %v2043 = vunpack.c.l.b16 %v2011
    %v2044 = vunpack.c.l.b16 %v2012
    %v2045 = vunpack.c.l.b16 %v2013
    %v2046 = vunpack.c.l.b16 %v2014
    %v2047 = vunpack.c.l.b16 %v2015
    %v2048 = vunpack.c.l.b16 %v2016
    %v2049 = vunpack.c.l.b16 %v2017
    %v2050 = vunpack.c.l.b16 %v2018
    %v2051 = vunpack.c.l.b16 %v2019
    %v2052 = vunpack.c.l.b16 %v2020
    %v2053 = vunpack.c.l.b16 %v2021
    %v2054 = vunpack.c.l.b16 %v2022
    %v2055 = vunpack.c.l.b16 %v2023
    %v2056 = vunpack.c.l.b16 %v2024
    %v2057 = vunpack.c.l.b16 %v2025
    %v2058 = vpack.c.b16 %v2043, %v2042
    %v2059 = vpack.c.b16 %v2045, %v2044
    %v2060 = vpack.c.b16 %v2047, %v2046
    %v2061 = vpack.c.b16 %v2049, %v2048
    %v2062 = vpack.c.b16 %v2051, %v2050
    %v2063 = vpack.c.b16 %v2053, %v2052
    %v2064 = vpack.c.b16 %v2055, %v2054
    %v2065 = vpack.c.b16 %v2057, %v2056
    %2074 = vmatpush.bf16.msra.mxu0 %v2065
    %2075 = vmatpush.bf16.msra.mxu0 %v2064
    %2076 = vmatpush.bf16.msra.mxu0 %v2063
    %2077 = vmatpush.bf16.msra.mxu0 %v2062
    %2078 = vmatpush.bf16.msra.mxu0 %v2061
    %2079 = vmatpush.bf16.msra.mxu0 %v2060
    %2080 = vmatpush.bf16.msra.mxu0 %v2059
    %2081 = vmatpush.bf16.msra.mxu0 %v2058
    %2082 = vmatmul.bf16.gmra.mxu0 %v2008
    %v2083 = vpop.f32.mrf.mxu0
    %v2084 = vadd.f32 0.0, %v2083
    %v2085 = vpop.f32.mrf.mxu0
    %v2086 = vadd.f32 0.0, %v2085
    %2087 = vmatmul.bf16.gmra.mxu0 %v2009
    %v2088 = vpop.f32.mrf.mxu0
    %v2089 = vadd.f32 0.0, %v2088
    %v2090 = vpop.f32.mrf.mxu0
    %v2091 = vadd.f32 0.0, %v2090
    %2092 = vdwg.mxu0
    %v2093 = vadd.f32 %v2004, %v2084
    %v2094 = vadd.f32 %v2005, %v2086
    %v2095 = vadd.f32 %v2006, %v2089
    %v2096 = vadd.f32 %v2007, %v2091
    %v2097 = vpack.c.bf16 %v763, %v761
    %v2098 = vpack.c.bf16 %v768, %v766
    %v2099 = vld [vmem:[%s4 + $0x3c0] sm:$0xf]
    %v2100 = vld [vmem:[%s4 + $0x3c4] sm:$0xf]
    %v2101 = vld [vmem:[%s4 + $0x3c8] sm:$0xf]
    %v2102 = vld [vmem:[%s4 + $0x3cc] sm:$0xf]
    %v2103 = vld [vmem:[%s4 + $0x3d0] sm:$0xf]
    %v2104 = vld [vmem:[%s4 + $0x3d4] sm:$0xf]
    %v2105 = vld [vmem:[%s4 + $0x3d8] sm:$0xf]
    %v2106 = vld [vmem:[%s4 + $0x3dc] sm:$0xf]
    %v2107 = vld [vmem:[%s4 + $0x3e0] sm:$0xf]
    %v2108 = vld [vmem:[%s4 + $0x3e4] sm:$0xf]
    %v2109 = vld [vmem:[%s4 + $0x3e8] sm:$0xf]
    %v2110 = vld [vmem:[%s4 + $0x3ec] sm:$0xf]
    %v2111 = vld [vmem:[%s4 + $0x3f0] sm:$0xf]
    %v2112 = vld [vmem:[%s4 + $0x3f4] sm:$0xf]
    %v2113 = vld [vmem:[%s4 + $0x3f8] sm:$0xf]
    %v2114 = vld [vmem:[%s4 + $0x3fc] sm:$0xf]
    %v2131 = vunpack.c.l.b16 %v2099
    %v2132 = vunpack.c.l.b16 %v2100
    %v2133 = vunpack.c.l.b16 %v2101
    %v2134 = vunpack.c.l.b16 %v2102
    %v2135 = vunpack.c.l.b16 %v2103
    %v2136 = vunpack.c.l.b16 %v2104
    %v2137 = vunpack.c.l.b16 %v2105
    %v2138 = vunpack.c.l.b16 %v2106
    %v2139 = vunpack.c.l.b16 %v2107
    %v2140 = vunpack.c.l.b16 %v2108
    %v2141 = vunpack.c.l.b16 %v2109
    %v2142 = vunpack.c.l.b16 %v2110
    %v2143 = vunpack.c.l.b16 %v2111
    %v2144 = vunpack.c.l.b16 %v2112
    %v2145 = vunpack.c.l.b16 %v2113
    %v2146 = vunpack.c.l.b16 %v2114
    %v2147 = vpack.c.b16 %v2132, %v2131
    %v2148 = vpack.c.b16 %v2134, %v2133
    %v2149 = vpack.c.b16 %v2136, %v2135
    %v2150 = vpack.c.b16 %v2138, %v2137
    %v2151 = vpack.c.b16 %v2140, %v2139
    %v2152 = vpack.c.b16 %v2142, %v2141
    %v2153 = vpack.c.b16 %v2144, %v2143
    %v2154 = vpack.c.b16 %v2146, %v2145
    %2163 = vmatpush.bf16.msra.mxu0 %v2154
    %2164 = vmatpush.bf16.msra.mxu0 %v2153
    %2165 = vmatpush.bf16.msra.mxu0 %v2152
    %2166 = vmatpush.bf16.msra.mxu0 %v2151
    %2167 = vmatpush.bf16.msra.mxu0 %v2150
    %2168 = vmatpush.bf16.msra.mxu0 %v2149
    %2169 = vmatpush.bf16.msra.mxu0 %v2148
    %2170 = vmatpush.bf16.msra.mxu0 %v2147
    %2171 = vmatmul.bf16.gmra.mxu0 %v2097
    %v2172 = vpop.f32.mrf.mxu0
    %v2173 = vadd.f32 0.0, %v2172
    %v2174 = vpop.f32.mrf.mxu0
    %v2175 = vadd.f32 0.0, %v2174
    %2176 = vmatmul.bf16.gmra.mxu0 %v2098
    %v2177 = vpop.f32.mrf.mxu0
    %v2178 = vadd.f32 0.0, %v2177
    %v2179 = vpop.f32.mrf.mxu0
    %v2180 = vadd.f32 0.0, %v2179
    %2181 = vdwg.mxu0
    %v2182 = vadd.f32 %v2093, %v2173
    %v2183 = vadd.f32 %v2094, %v2175
    %v2184 = vadd.f32 %v2095, %v2178
    %v2185 = vadd.f32 %v2096, %v2180
    %v2186 = vadd.f32 %v2182, %v2183
    %v2187 = vadd.f32 %v2186, %v2184
    %v2188 = vadd.f32 %v2187, %v2185
    %v2189 = vrot.slane %v2188, 4
    %v2190 = vadd.f32 %v2188, %v2189
    %v2191 = vrot.slane %v2190, 2
    %v2192 = vadd.f32 %v2190, %v2191
    %v2193 = vrot.slane %v2192, 1
    %v2194 = vadd.f32 %v2192, %v2193
    %v2195 = vrcp.pop 32.0
    %v2196 = vmul.f32 32.0, %v2195
    %v2197 = vsub.f32 1.0, %v2196
    %v2198 = vmul.f32 %v2195, %v2197
    %v2199 = vadd.f32 %v2195, %v2198
    %vm2200 = vweird.f32 %v2195
    %v2201 = vsel %vm2200, %v2195, %v2199
    %v2202 = vmul.f32 %v2194, %v2201
    %v2203 = vsub.f32 %v2182, %v2202
    %v2204 = vsub.f32 %v2183, %v2202
    %v2205 = vsub.f32 %v2184, %v2202
    %v2206 = vsub.f32 %v2185, %v2202
    %v2207 = vmul.f32 %v2203, %v2203
    %v2208 = vmul.f32 %v2204, %v2204
    %v2209 = vmul.f32 %v2205, %v2205
    %v2210 = vmul.f32 %v2206, %v2206
    %v2211 = vadd.f32 %v2207, %v2208
    %v2212 = vadd.f32 %v2211, %v2209
    %v2213 = vadd.f32 %v2212, %v2210
    %v2214 = vrot.slane %v2213, 4
    %v2215 = vadd.f32 %v2213, %v2214
    %v2216 = vrot.slane %v2215, 2
    %v2217 = vadd.f32 %v2215, %v2216
    %v2218 = vrot.slane %v2217, 1
    %v2219 = vadd.f32 %v2217, %v2218
    %v2220 = vmul.f32 %v2219, %v2201
    %v2221 = vadd.f32 %v2220, 1e-05
    %v2222 = vrsqrt.pop %v2221
    %v2223 = vmul.f32 %v2222, %v2221
    %v2224 = vmul.f32 %v2223, %v2222
    %v2225 = vmul.f32 0.5, %v2224
    %v2226 = vsub.f32 1.5, %v2225
    %v2227 = vmul.f32 %v2222, %v2226
    %vm2228 = vweird.f32 %v2221
    %vm2229 = vweird.f32 %v2222
    %vm2230 = vmor %vm2228, %vm2229
    %v2231 = vsel %vm2230, %v2222, %v2227
    %v2232 = vmul.f32 %v2203, %v2231
    %v2233 = vmul.f32 %v2204, %v2231
    %v2234 = vmul.f32 %v2205, %v2231
    %v2235 = vmul.f32 %v2206, %v2231
    %v2236 = vld [vmem:[%s5] sm:$0x1]
    %v2238 = vperm.slane %v2236, 0
    %v2240 = vmul.f32 %v2232, %v2238
    %v2241 = vmul.f32 %v2233, %v2238
    %v2242 = vmul.f32 %v2234, %v2238
    %v2243 = vmul.f32 %v2235, %v2238
    %v2244 = vld [vmem:[%s6] sm:$0x1]
    %v2246 = vperm.slane %v2244, 0
    %v2248 = vadd.f32 %v2240, %v2246
    %v2249 = vadd.f32 %v2241, %v2246
    %v2250 = vadd.f32 %v2242, %v2246
    %v2251 = vadd.f32 %v2243, %v2246
    %vm2252 = vcmp.ge.f32.partialorder %v2248, 0.0
    %vm2253 = vcmp.ge.f32.partialorder %v2249, 0.0
    %vm2254 = vcmp.ge.f32.partialorder %v2250, 0.0
    %vm2255 = vcmp.ge.f32.partialorder %v2251, 0.0
    %v2256 = vmul.f32 %v2248, 0.2
    %v2257 = vmul.f32 %v2249, 0.2
    %v2258 = vmul.f32 %v2250, 0.2
    %v2259 = vmul.f32 %v2251, 0.2
    %v2260 = vsel %vm2252, %v2248, %v2256
    %v2261 = vsel %vm2253, %v2249, %v2257
    %v2262 = vsel %vm2254, %v2250, %v2258
    %v2263 = vsel %vm2255, %v2251, %v2259
    %v2264 = vpack.c.bf16 %v2261, %v2260
    %v2265 = vpack.c.bf16 %v2263, %v2262
    %v2266 = vld [vmem:[#allocation6] sm:$0xf]
    %v2267 = vld [vmem:[#allocation6 + $0x4] sm:$0xf]
    %v2268 = vld [vmem:[#allocation6 + $0x8] sm:$0xf]
    %v2269 = vld [vmem:[#allocation6 + $0xc] sm:$0xf]
    %v2270 = vld [vmem:[#allocation6 + $0x10] sm:$0xf]
    %v2271 = vld [vmem:[#allocation6 + $0x14] sm:$0xf]
    %v2272 = vld [vmem:[#allocation6 + $0x18] sm:$0xf]
    %v2273 = vld [vmem:[#allocation6 + $0x1c] sm:$0xf]
    %v2274 = vld [vmem:[#allocation6 + $0x20] sm:$0xf]
    %v2275 = vld [vmem:[#allocation6 + $0x24] sm:$0xf]
    %v2276 = vld [vmem:[#allocation6 + $0x28] sm:$0xf]
    %v2277 = vld [vmem:[#allocation6 + $0x2c] sm:$0xf]
    %v2278 = vld [vmem:[#allocation6 + $0x30] sm:$0xf]
    %v2279 = vld [vmem:[#allocation6 + $0x34] sm:$0xf]
    %v2280 = vld [vmem:[#allocation6 + $0x38] sm:$0xf]
    %v2281 = vld [vmem:[#allocation6 + $0x3c] sm:$0xf]
    %v2298 = vunpack.c.l.b16 %v2266
    %v2299 = vunpack.c.l.b16 %v2267
    %v2300 = vunpack.c.l.b16 %v2268
    %v2301 = vunpack.c.l.b16 %v2269
    %v2302 = vunpack.c.l.b16 %v2270
    %v2303 = vunpack.c.l.b16 %v2271
    %v2304 = vunpack.c.l.b16 %v2272
    %v2305 = vunpack.c.l.b16 %v2273
    %v2306 = vunpack.c.l.b16 %v2274
    %v2307 = vunpack.c.l.b16 %v2275
    %v2308 = vunpack.c.l.b16 %v2276
    %v2309 = vunpack.c.l.b16 %v2277
    %v2310 = vunpack.c.l.b16 %v2278
    %v2311 = vunpack.c.l.b16 %v2279
    %v2312 = vunpack.c.l.b16 %v2280
    %v2313 = vunpack.c.l.b16 %v2281
    %v2314 = vpack.c.b16 %v2299, %v2298
    %v2315 = vpack.c.b16 %v2301, %v2300
    %v2316 = vpack.c.b16 %v2303, %v2302
    %v2317 = vpack.c.b16 %v2305, %v2304
    %v2318 = vpack.c.b16 %v2307, %v2306
    %v2319 = vpack.c.b16 %v2309, %v2308
    %v2320 = vpack.c.b16 %v2311, %v2310
    %v2321 = vpack.c.b16 %v2313, %v2312
    %vm2322 = vcmask 261120
    %v2324 = vsel %vm2322, %v2314, 0
    %v2327 = vsel %vm2322, %v2315, 0
    %v2330 = vsel %vm2322, %v2316, 0
    %v2333 = vsel %vm2322, %v2317, 0
    %v2336 = vsel %vm2322, %v2318, 0
    %v2339 = vsel %vm2322, %v2319, 0
    %v2342 = vsel %vm2322, %v2320, 0
    %v2345 = vsel %vm2322, %v2321, 0
    %2347 = vmatpush.bf16.msra.mxu0 0
    %2348 = vmatpush.bf16.msra.mxu0 0
    %2349 = vmatpush.bf16.msra.mxu0 0
    %2350 = vmatpush.bf16.msra.mxu0 0
    %2351 = vmatpush.bf16.msra.mxu0 0
    %2352 = vmatpush.bf16.msra.mxu0 0
    %2353 = vmatpush.bf16.msra.mxu0 %v2265
    %2354 = vmatpush.bf16.msra.mxu0 %v2264
    %2355 = vmatmul.bf16.gmra.mxu0 %v2324
    %v2356 = vpop.f32.mrf.mxu0
    %v2357 = vadd.f32 0.0, %v2356
    %v2358 = vpop.f32.mrf.mxu0
    %v2359 = vadd.f32 0.0, %v2358
    %2360 = vmatmul.bf16.gmra.mxu0 %v2327
    %v2361 = vpop.f32.mrf.mxu0
    %v2362 = vadd.f32 0.0, %v2361
    %v2363 = vpop.f32.mrf.mxu0
    %v2364 = vadd.f32 0.0, %v2363
    %2365 = vmatmul.bf16.gmra.mxu0 %v2330
    %v2366 = vpop.f32.mrf.mxu0
    %v2367 = vadd.f32 0.0, %v2366
    %v2368 = vpop.f32.mrf.mxu0
    %v2369 = vadd.f32 0.0, %v2368
    %2370 = vmatmul.bf16.gmra.mxu0 %v2333
    %v2371 = vpop.f32.mrf.mxu0
    %v2372 = vadd.f32 0.0, %v2371
    %v2373 = vpop.f32.mrf.mxu0
    %v2374 = vadd.f32 0.0, %v2373
    %2375 = vmatmul.bf16.gmra.mxu0 %v2336
    %v2376 = vpop.f32.mrf.mxu0
    %v2377 = vadd.f32 0.0, %v2376
    %v2378 = vpop.f32.mrf.mxu0
    %v2379 = vadd.f32 0.0, %v2378
    %2380 = vmatmul.bf16.gmra.mxu0 %v2339
    %v2381 = vpop.f32.mrf.mxu0
    %v2382 = vadd.f32 0.0, %v2381
    %v2383 = vpop.f32.mrf.mxu0
    %v2384 = vadd.f32 0.0, %v2383
    %2385 = vmatmul.bf16.gmra.mxu0 %v2342
    %v2386 = vpop.f32.mrf.mxu0
    %v2387 = vadd.f32 0.0, %v2386
    %v2388 = vpop.f32.mrf.mxu0
    %v2389 = vadd.f32 0.0, %v2388
    %2390 = vmatmul.bf16.gmra.mxu0 %v2345
    %v2391 = vpop.f32.mrf.mxu0
    %v2392 = vadd.f32 0.0, %v2391
    %v2393 = vpop.f32.mrf.mxu0
    %v2394 = vadd.f32 0.0, %v2393
    %2395 = vdwg.mxu0
    %v2396 = vpack.c.bf16 %v2357, %v2357
    %v2397 = vld [vmem:[%s8] sm:$0xff]
    %v2398 = vld [vmem:[%s8 + $0x8] sm:$0xff]
    %v2399 = vld [vmem:[%s8 + $0x10] sm:$0xff]
    %v2400 = vld [vmem:[%s8 + $0x18] sm:$0xff]
    %v2401 = vld [vmem:[%s8 + $0x20] sm:$0xff]
    %v2402 = vld [vmem:[%s8 + $0x28] sm:$0xff]
    %v2403 = vld [vmem:[%s8 + $0x30] sm:$0xff]
    %v2404 = vld [vmem:[%s8 + $0x38] sm:$0xff]
    %v2405 = vld [vmem:[%s8 + $0x40] sm:$0xff]
    %v2406 = vld [vmem:[%s8 + $0x48] sm:$0xff]
    %v2407 = vld [vmem:[%s8 + $0x50] sm:$0xff]
    %v2408 = vld [vmem:[%s8 + $0x58] sm:$0xff]
    %v2409 = vld [vmem:[%s8 + $0x60] sm:$0xff]
    %v2410 = vld [vmem:[%s8 + $0x68] sm:$0xff]
    %v2411 = vld [vmem:[%s8 + $0x70] sm:$0xff]
    %v2412 = vld [vmem:[%s8 + $0x78] sm:$0xff]
    %v2413 = vpack.c.bf16 %v2359, %v2359
    %v2414 = vld [vmem:[%s8 + $0x80] sm:$0xff]
    %v2415 = vld [vmem:[%s8 + $0x88] sm:$0xff]
    %v2416 = vld [vmem:[%s8 + $0x90] sm:$0xff]
    %v2417 = vld [vmem:[%s8 + $0x98] sm:$0xff]
    %v2418 = vld [vmem:[%s8 + $0xa0] sm:$0xff]
    %v2419 = vld [vmem:[%s8 + $0xa8] sm:$0xff]
    %v2420 = vld [vmem:[%s8 + $0xb0] sm:$0xff]
    %v2421 = vld [vmem:[%s8 + $0xb8] sm:$0xff]
    %v2422 = vld [vmem:[%s8 + $0xc0] sm:$0xff]
    %v2423 = vld [vmem:[%s8 + $0xc8] sm:$0xff]
    %v2424 = vld [vmem:[%s8 + $0xd0] sm:$0xff]
    %v2425 = vld [vmem:[%s8 + $0xd8] sm:$0xff]
    %v2426 = vld [vmem:[%s8 + $0xe0] sm:$0xff]
    %v2427 = vld [vmem:[%s8 + $0xe8] sm:$0xff]
    %v2428 = vld [vmem:[%s8 + $0xf0] sm:$0xff]
    %v2429 = vld [vmem:[%s8 + $0xf8] sm:$0xff]
    %v2446 = vunpack.c.l.b16 %v2414
    %v2447 = vunpack.c.h.b16 %v2414
    %v2448 = vunpack.c.l.b16 %v2415
    %v2449 = vunpack.c.h.b16 %v2415
    %v2450 = vunpack.c.l.b16 %v2416
    %v2451 = vunpack.c.h.b16 %v2416
    %v2452 = vunpack.c.l.b16 %v2417
    %v2453 = vunpack.c.h.b16 %v2417
    %v2454 = vunpack.c.l.b16 %v2418
    %v2455 = vunpack.c.h.b16 %v2418
    %v2456 = vunpack.c.l.b16 %v2419
    %v2457 = vunpack.c.h.b16 %v2419
    %v2458 = vunpack.c.l.b16 %v2420
    %v2459 = vunpack.c.h.b16 %v2420
    %v2460 = vunpack.c.l.b16 %v2421
    %v2461 = vunpack.c.h.b16 %v2421
    %v2462 = vunpack.c.l.b16 %v2422
    %v2463 = vunpack.c.h.b16 %v2422
    %v2464 = vunpack.c.l.b16 %v2423
    %v2465 = vunpack.c.h.b16 %v2423
    %v2466 = vunpack.c.l.b16 %v2424
    %v2467 = vunpack.c.h.b16 %v2424
    %v2468 = vunpack.c.l.b16 %v2425
    %v2469 = vunpack.c.h.b16 %v2425
    %v2470 = vunpack.c.l.b16 %v2426
    %v2471 = vunpack.c.h.b16 %v2426
    %v2472 = vunpack.c.l.b16 %v2427
    %v2473 = vunpack.c.h.b16 %v2427
    %v2474 = vunpack.c.l.b16 %v2428
    %v2475 = vunpack.c.h.b16 %v2428
    %v2476 = vunpack.c.l.b16 %v2429
    %v2477 = vunpack.c.h.b16 %v2429
    %v2478 = vpack.c.b16 %v2448, %v2446
    %v2479 = vpack.c.b16 %v2449, %v2447
    %v2480 = vpack.c.b16 %v2452, %v2450
    %v2481 = vpack.c.b16 %v2453, %v2451
    %v2482 = vpack.c.b16 %v2456, %v2454
    %v2483 = vpack.c.b16 %v2457, %v2455
    %v2484 = vpack.c.b16 %v2460, %v2458
    %v2485 = vpack.c.b16 %v2461, %v2459
    %v2486 = vpack.c.b16 %v2464, %v2462
    %v2487 = vpack.c.b16 %v2465, %v2463
    %v2488 = vpack.c.b16 %v2468, %v2466
    %v2489 = vpack.c.b16 %v2469, %v2467
    %v2490 = vpack.c.b16 %v2472, %v2470
    %v2491 = vpack.c.b16 %v2473, %v2471
    %v2492 = vpack.c.b16 %v2476, %v2474
    %v2493 = vpack.c.b16 %v2477, %v2475
    %2510 = vmatpush.bf16.msra.mxu0 %v2492
    %2511 = vmatpush.bf16.msra.mxu0 %v2490
    %2512 = vmatpush.bf16.msra.mxu0 %v2488
    %2513 = vmatpush.bf16.msra.mxu0 %v2486
    %2514 = vmatpush.bf16.msra.mxu0 %v2484
    %2515 = vmatpush.bf16.msra.mxu0 %v2482
    %2516 = vmatpush.bf16.msra.mxu0 %v2480
    %2517 = vmatpush.bf16.msra.mxu0 %v2478
    %2518 = vmatmul.bf16.gmra.mxu0 %v2413
    %v2519 = vpop.f32.mrf.mxu0
    %v2520 = vadd.f32 0.0, %v2519
    %v2521 = vpop.f32.mrf.mxu0
    %2522 = vdwg.mxu0
    %2523 = vmatpush.bf16.msra.mxu0 %v2493
    %2524 = vmatpush.bf16.msra.mxu0 %v2491
    %2525 = vmatpush.bf16.msra.mxu0 %v2489
    %2526 = vmatpush.bf16.msra.mxu0 %v2487
    %2527 = vmatpush.bf16.msra.mxu0 %v2485
    %2528 = vmatpush.bf16.msra.mxu0 %v2483
    %2529 = vmatpush.bf16.msra.mxu0 %v2481
    %2530 = vmatpush.bf16.msra.mxu0 %v2479
    %2531 = vmatmul.bf16.gmra.mxu0 %v2413
    %v2532 = vpop.f32.mrf.mxu0
    %v2533 = vadd.f32 0.0, %v2532
    %v2534 = vpop.f32.mrf.mxu0
    %2535 = vdwg.mxu0
    %v2552 = vunpack.c.l.b16 %v2397
    %v2553 = vunpack.c.h.b16 %v2397
    %v2554 = vunpack.c.l.b16 %v2398
    %v2555 = vunpack.c.h.b16 %v2398
    %v2556 = vunpack.c.l.b16 %v2399
    %v2557 = vunpack.c.h.b16 %v2399
    %v2558 = vunpack.c.l.b16 %v2400
    %v2559 = vunpack.c.h.b16 %v2400
    %v2560 = vunpack.c.l.b16 %v2401
    %v2561 = vunpack.c.h.b16 %v2401
    %v2562 = vunpack.c.l.b16 %v2402
    %v2563 = vunpack.c.h.b16 %v2402
    %v2564 = vunpack.c.l.b16 %v2403
    %v2565 = vunpack.c.h.b16 %v2403
    %v2566 = vunpack.c.l.b16 %v2404
    %v2567 = vunpack.c.h.b16 %v2404
    %v2568 = vunpack.c.l.b16 %v2405
    %v2569 = vunpack.c.h.b16 %v2405
    %v2570 = vunpack.c.l.b16 %v2406
    %v2571 = vunpack.c.h.b16 %v2406
    %v2572 = vunpack.c.l.b16 %v2407
    %v2573 = vunpack.c.h.b16 %v2407
    %v2574 = vunpack.c.l.b16 %v2408
    %v2575 = vunpack.c.h.b16 %v2408
    %v2576 = vunpack.c.l.b16 %v2409
    %v2577 = vunpack.c.h.b16 %v2409
    %v2578 = vunpack.c.l.b16 %v2410
    %v2579 = vunpack.c.h.b16 %v2410
    %v2580 = vunpack.c.l.b16 %v2411
    %v2581 = vunpack.c.h.b16 %v2411
    %v2582 = vunpack.c.l.b16 %v2412
    %v2583 = vunpack.c.h.b16 %v2412
    %v2584 = vpack.c.b16 %v2554, %v2552
    %v2585 = vpack.c.b16 %v2555, %v2553
    %v2586 = vpack.c.b16 %v2558, %v2556
    %v2587 = vpack.c.b16 %v2559, %v2557
    %v2588 = vpack.c.b16 %v2562, %v2560
    %v2589 = vpack.c.b16 %v2563, %v2561
    %v2590 = vpack.c.b16 %v2566, %v2564
    %v2591 = vpack.c.b16 %v2567, %v2565
    %v2592 = vpack.c.b16 %v2570, %v2568
    %v2593 = vpack.c.b16 %v2571, %v2569
    %v2594 = vpack.c.b16 %v2574, %v2572
    %v2595 = vpack.c.b16 %v2575, %v2573
    %v2596 = vpack.c.b16 %v2578, %v2576
    %v2597 = vpack.c.b16 %v2579, %v2577
    %v2598 = vpack.c.b16 %v2582, %v2580
    %v2599 = vpack.c.b16 %v2583, %v2581
    %2616 = vmatpush.bf16.msra.mxu0 %v2598
    %2617 = vmatpush.bf16.msra.mxu0 %v2596
    %2618 = vmatpush.bf16.msra.mxu0 %v2594
    %2619 = vmatpush.bf16.msra.mxu0 %v2592
    %2620 = vmatpush.bf16.msra.mxu0 %v2590
    %2621 = vmatpush.bf16.msra.mxu0 %v2588
    %2622 = vmatpush.bf16.msra.mxu0 %v2586
    %2623 = vmatpush.bf16.msra.mxu0 %v2584
    %2624 = vmatmul.bf16.gmra.mxu0 %v2396
    %v2625 = vpop.f32.mrf.mxu0
    %v2626 = vadd.f32 %v2520, %v2625
    %v2627 = vpop.f32.mrf.mxu0
    %2628 = vdwg.mxu0
    %2629 = vmatpush.bf16.msra.mxu0 %v2599
    %2630 = vmatpush.bf16.msra.mxu0 %v2597
    %2631 = vmatpush.bf16.msra.mxu0 %v2595
    %2632 = vmatpush.bf16.msra.mxu0 %v2593
    %2633 = vmatpush.bf16.msra.mxu0 %v2591
    %2634 = vmatpush.bf16.msra.mxu0 %v2589
    %2635 = vmatpush.bf16.msra.mxu0 %v2587
    %2636 = vmatpush.bf16.msra.mxu0 %v2585
    %2637 = vmatmul.bf16.gmra.mxu0 %v2396
    %v2638 = vpop.f32.mrf.mxu0
    %v2639 = vadd.f32 %v2533, %v2638
    %v2640 = vpop.f32.mrf.mxu0
    %2641 = vdwg.mxu0
    %v2642 = vpack.c.bf16 %v2362, %v2362
    %v2643 = vld [vmem:[%s8 + $0x100] sm:$0xff]
    %v2644 = vld [vmem:[%s8 + $0x108] sm:$0xff]
    %v2645 = vld [vmem:[%s8 + $0x110] sm:$0xff]
    %v2646 = vld [vmem:[%s8 + $0x118] sm:$0xff]
    %v2647 = vld [vmem:[%s8 + $0x120] sm:$0xff]
    %v2648 = vld [vmem:[%s8 + $0x128] sm:$0xff]
    %v2649 = vld [vmem:[%s8 + $0x130] sm:$0xff]
    %v2650 = vld [vmem:[%s8 + $0x138] sm:$0xff]
    %v2651 = vld [vmem:[%s8 + $0x140] sm:$0xff]
    %v2652 = vld [vmem:[%s8 + $0x148] sm:$0xff]
    %v2653 = vld [vmem:[%s8 + $0x150] sm:$0xff]
    %v2654 = vld [vmem:[%s8 + $0x158] sm:$0xff]
    %v2655 = vld [vmem:[%s8 + $0x160] sm:$0xff]
    %v2656 = vld [vmem:[%s8 + $0x168] sm:$0xff]
    %v2657 = vld [vmem:[%s8 + $0x170] sm:$0xff]
    %v2658 = vld [vmem:[%s8 + $0x178] sm:$0xff]
    %v2675 = vunpack.c.l.b16 %v2643
    %v2676 = vunpack.c.h.b16 %v2643
    %v2677 = vunpack.c.l.b16 %v2644
    %v2678 = vunpack.c.h.b16 %v2644
    %v2679 = vunpack.c.l.b16 %v2645
    %v2680 = vunpack.c.h.b16 %v2645
    %v2681 = vunpack.c.l.b16 %v2646
    %v2682 = vunpack.c.h.b16 %v2646
    %v2683 = vunpack.c.l.b16 %v2647
    %v2684 = vunpack.c.h.b16 %v2647
    %v2685 = vunpack.c.l.b16 %v2648
    %v2686 = vunpack.c.h.b16 %v2648
    %v2687 = vunpack.c.l.b16 %v2649
    %v2688 = vunpack.c.h.b16 %v2649
    %v2689 = vunpack.c.l.b16 %v2650
    %v2690 = vunpack.c.h.b16 %v2650
    %v2691 = vunpack.c.l.b16 %v2651
    %v2692 = vunpack.c.h.b16 %v2651
    %v2693 = vunpack.c.l.b16 %v2652
    %v2694 = vunpack.c.h.b16 %v2652
    %v2695 = vunpack.c.l.b16 %v2653
    %v2696 = vunpack.c.h.b16 %v2653
    %v2697 = vunpack.c.l.b16 %v2654
    %v2698 = vunpack.c.h.b16 %v2654
    %v2699 = vunpack.c.l.b16 %v2655
    %v2700 = vunpack.c.h.b16 %v2655
    %v2701 = vunpack.c.l.b16 %v2656
    %v2702 = vunpack.c.h.b16 %v2656
    %v2703 = vunpack.c.l.b16 %v2657
    %v2704 = vunpack.c.h.b16 %v2657
    %v2705 = vunpack.c.l.b16 %v2658
    %v2706 = vunpack.c.h.b16 %v2658
    %v2707 = vpack.c.b16 %v2677, %v2675
    %v2708 = vpack.c.b16 %v2678, %v2676
    %v2709 = vpack.c.b16 %v2681, %v2679
    %v2710 = vpack.c.b16 %v2682, %v2680
    %v2711 = vpack.c.b16 %v2685, %v2683
    %v2712 = vpack.c.b16 %v2686, %v2684
    %v2713 = vpack.c.b16 %v2689, %v2687
    %v2714 = vpack.c.b16 %v2690, %v2688
    %v2715 = vpack.c.b16 %v2693, %v2691
    %v2716 = vpack.c.b16 %v2694, %v2692
    %v2717 = vpack.c.b16 %v2697, %v2695
    %v2718 = vpack.c.b16 %v2698, %v2696
    %v2719 = vpack.c.b16 %v2701, %v2699
    %v2720 = vpack.c.b16 %v2702, %v2700
    %v2721 = vpack.c.b16 %v2705, %v2703
    %v2722 = vpack.c.b16 %v2706, %v2704
    %2739 = vmatpush.bf16.msra.mxu0 %v2721
    %2740 = vmatpush.bf16.msra.mxu0 %v2719
    %2741 = vmatpush.bf16.msra.mxu0 %v2717
    %2742 = vmatpush.bf16.msra.mxu0 %v2715
    %2743 = vmatpush.bf16.msra.mxu0 %v2713
    %2744 = vmatpush.bf16.msra.mxu0 %v2711
    %2745 = vmatpush.bf16.msra.mxu0 %v2709
    %2746 = vmatpush.bf16.msra.mxu0 %v2707
    %2747 = vmatmul.bf16.gmra.mxu0 %v2642
    %v2748 = vpop.f32.mrf.mxu0
    %v2749 = vadd.f32 0.0, %v2748
    %v2750 = vpop.f32.mrf.mxu0
    %2751 = vdwg.mxu0
    %2752 = vmatpush.bf16.msra.mxu0 %v2722
    %2753 = vmatpush.bf16.msra.mxu0 %v2720
    %2754 = vmatpush.bf16.msra.mxu0 %v2718
    %2755 = vmatpush.bf16.msra.mxu0 %v2716
    %2756 = vmatpush.bf16.msra.mxu0 %v2714
    %2757 = vmatpush.bf16.msra.mxu0 %v2712
    %2758 = vmatpush.bf16.msra.mxu0 %v2710
    %2759 = vmatpush.bf16.msra.mxu0 %v2708
    %2760 = vmatmul.bf16.gmra.mxu0 %v2642
    %v2761 = vpop.f32.mrf.mxu0
    %v2762 = vadd.f32 0.0, %v2761
    %v2763 = vpop.f32.mrf.mxu0
    %2764 = vdwg.mxu0
    %v2765 = vadd.f32 %v2626, %v2749
    %v2766 = vadd.f32 %v2639, %v2762
    %v2767 = vpack.c.bf16 %v2364, %v2364
    %v2768 = vld [vmem:[%s8 + $0x180] sm:$0xff]
    %v2769 = vld [vmem:[%s8 + $0x188] sm:$0xff]
    %v2770 = vld [vmem:[%s8 + $0x190] sm:$0xff]
    %v2771 = vld [vmem:[%s8 + $0x198] sm:$0xff]
    %v2772 = vld [vmem:[%s8 + $0x1a0] sm:$0xff]
    %v2773 = vld [vmem:[%s8 + $0x1a8] sm:$0xff]
    %v2774 = vld [vmem:[%s8 + $0x1b0] sm:$0xff]
    %v2775 = vld [vmem:[%s8 + $0x1b8] sm:$0xff]
    %v2776 = vld [vmem:[%s8 + $0x1c0] sm:$0xff]
    %v2777 = vld [vmem:[%s8 + $0x1c8] sm:$0xff]
    %v2778 = vld [vmem:[%s8 + $0x1d0] sm:$0xff]
    %v2779 = vld [vmem:[%s8 + $0x1d8] sm:$0xff]
    %v2780 = vld [vmem:[%s8 + $0x1e0] sm:$0xff]
    %v2781 = vld [vmem:[%s8 + $0x1e8] sm:$0xff]
    %v2782 = vld [vmem:[%s8 + $0x1f0] sm:$0xff]
    %v2783 = vld [vmem:[%s8 + $0x1f8] sm:$0xff]
    %v2800 = vunpack.c.l.b16 %v2768
    %v2801 = vunpack.c.h.b16 %v2768
    %v2802 = vunpack.c.l.b16 %v2769
    %v2803 = vunpack.c.h.b16 %v2769
    %v2804 = vunpack.c.l.b16 %v2770
    %v2805 = vunpack.c.h.b16 %v2770
    %v2806 = vunpack.c.l.b16 %v2771
    %v2807 = vunpack.c.h.b16 %v2771
    %v2808 = vunpack.c.l.b16 %v2772
    %v2809 = vunpack.c.h.b16 %v2772
    %v2810 = vunpack.c.l.b16 %v2773
    %v2811 = vunpack.c.h.b16 %v2773
    %v2812 = vunpack.c.l.b16 %v2774
    %v2813 = vunpack.c.h.b16 %v2774
    %v2814 = vunpack.c.l.b16 %v2775
    %v2815 = vunpack.c.h.b16 %v2775
    %v2816 = vunpack.c.l.b16 %v2776
    %v2817 = vunpack.c.h.b16 %v2776
    %v2818 = vunpack.c.l.b16 %v2777
    %v2819 = vunpack.c.h.b16 %v2777
    %v2820 = vunpack.c.l.b16 %v2778
    %v2821 = vunpack.c.h.b16 %v2778
    %v2822 = vunpack.c.l.b16 %v2779
    %v2823 = vunpack.c.h.b16 %v2779
    %v2824 = vunpack.c.l.b16 %v2780
    %v2825 = vunpack.c.h.b16 %v2780
    %v2826 = vunpack.c.l.b16 %v2781
    %v2827 = vunpack.c.h.b16 %v2781
    %v2828 = vunpack.c.l.b16 %v2782
    %v2829 = vunpack.c.h.b16 %v2782
    %v2830 = vunpack.c.l.b16 %v2783
    %v2831 = vunpack.c.h.b16 %v2783
    %v2832 = vpack.c.b16 %v2802, %v2800
    %v2833 = vpack.c.b16 %v2803, %v2801
    %v2834 = vpack.c.b16 %v2806, %v2804
    %v2835 = vpack.c.b16 %v2807, %v2805
    %v2836 = vpack.c.b16 %v2810, %v2808
    %v2837 = vpack.c.b16 %v2811, %v2809
    %v2838 = vpack.c.b16 %v2814, %v2812
    %v2839 = vpack.c.b16 %v2815, %v2813
    %v2840 = vpack.c.b16 %v2818, %v2816
    %v2841 = vpack.c.b16 %v2819, %v2817
    %v2842 = vpack.c.b16 %v2822, %v2820
    %v2843 = vpack.c.b16 %v2823, %v2821
    %v2844 = vpack.c.b16 %v2826, %v2824
    %v2845 = vpack.c.b16 %v2827, %v2825
    %v2846 = vpack.c.b16 %v2830, %v2828
    %v2847 = vpack.c.b16 %v2831, %v2829
    %2864 = vmatpush.bf16.msra.mxu0 %v2846
    %2865 = vmatpush.bf16.msra.mxu0 %v2844
    %2866 = vmatpush.bf16.msra.mxu0 %v2842
    %2867 = vmatpush.bf16.msra.mxu0 %v2840
    %2868 = vmatpush.bf16.msra.mxu0 %v2838
    %2869 = vmatpush.bf16.msra.mxu0 %v2836
    %2870 = vmatpush.bf16.msra.mxu0 %v2834
    %2871 = vmatpush.bf16.msra.mxu0 %v2832
    %2872 = vmatmul.bf16.gmra.mxu0 %v2767
    %v2873 = vpop.f32.mrf.mxu0
    %v2874 = vadd.f32 0.0, %v2873
    %v2875 = vpop.f32.mrf.mxu0
    %2876 = vdwg.mxu0
    %2877 = vmatpush.bf16.msra.mxu0 %v2847
    %2878 = vmatpush.bf16.msra.mxu0 %v2845
    %2879 = vmatpush.bf16.msra.mxu0 %v2843
    %2880 = vmatpush.bf16.msra.mxu0 %v2841
    %2881 = vmatpush.bf16.msra.mxu0 %v2839
    %2882 = vmatpush.bf16.msra.mxu0 %v2837
    %2883 = vmatpush.bf16.msra.mxu0 %v2835
    %2884 = vmatpush.bf16.msra.mxu0 %v2833
    %2885 = vmatmul.bf16.gmra.mxu0 %v2767
    %v2886 = vpop.f32.mrf.mxu0
    %v2887 = vadd.f32 0.0, %v2886
    %v2888 = vpop.f32.mrf.mxu0
    %2889 = vdwg.mxu0
    %v2890 = vadd.f32 %v2765, %v2874
    %v2891 = vadd.f32 %v2766, %v2887
    %v2892 = vpack.c.bf16 %v2367, %v2367
    %v2893 = vld [vmem:[%s8 + $0x200] sm:$0xff]
    %v2894 = vld [vmem:[%s8 + $0x208] sm:$0xff]
    %v2895 = vld [vmem:[%s8 + $0x210] sm:$0xff]
    %v2896 = vld [vmem:[%s8 + $0x218] sm:$0xff]
    %v2897 = vld [vmem:[%s8 + $0x220] sm:$0xff]
    %v2898 = vld [vmem:[%s8 + $0x228] sm:$0xff]
    %v2899 = vld [vmem:[%s8 + $0x230] sm:$0xff]
    %v2900 = vld [vmem:[%s8 + $0x238] sm:$0xff]
    %v2901 = vld [vmem:[%s8 + $0x240] sm:$0xff]
    %v2902 = vld [vmem:[%s8 + $0x248] sm:$0xff]
    %v2903 = vld [vmem:[%s8 + $0x250] sm:$0xff]
    %v2904 = vld [vmem:[%s8 + $0x258] sm:$0xff]
    %v2905 = vld [vmem:[%s8 + $0x260] sm:$0xff]
    %v2906 = vld [vmem:[%s8 + $0x268] sm:$0xff]
    %v2907 = vld [vmem:[%s8 + $0x270] sm:$0xff]
    %v2908 = vld [vmem:[%s8 + $0x278] sm:$0xff]
    %v2925 = vunpack.c.l.b16 %v2893
    %v2926 = vunpack.c.h.b16 %v2893
    %v2927 = vunpack.c.l.b16 %v2894
    %v2928 = vunpack.c.h.b16 %v2894
    %v2929 = vunpack.c.l.b16 %v2895
    %v2930 = vunpack.c.h.b16 %v2895
    %v2931 = vunpack.c.l.b16 %v2896
    %v2932 = vunpack.c.h.b16 %v2896
    %v2933 = vunpack.c.l.b16 %v2897
    %v2934 = vunpack.c.h.b16 %v2897
    %v2935 = vunpack.c.l.b16 %v2898
    %v2936 = vunpack.c.h.b16 %v2898
    %v2937 = vunpack.c.l.b16 %v2899
    %v2938 = vunpack.c.h.b16 %v2899
    %v2939 = vunpack.c.l.b16 %v2900
    %v2940 = vunpack.c.h.b16 %v2900
    %v2941 = vunpack.c.l.b16 %v2901
    %v2942 = vunpack.c.h.b16 %v2901
    %v2943 = vunpack.c.l.b16 %v2902
    %v2944 = vunpack.c.h.b16 %v2902
    %v2945 = vunpack.c.l.b16 %v2903
    %v2946 = vunpack.c.h.b16 %v2903
    %v2947 = vunpack.c.l.b16 %v2904
    %v2948 = vunpack.c.h.b16 %v2904
    %v2949 = vunpack.c.l.b16 %v2905
    %v2950 = vunpack.c.h.b16 %v2905
    %v2951 = vunpack.c.l.b16 %v2906
    %v2952 = vunpack.c.h.b16 %v2906
    %v2953 = vunpack.c.l.b16 %v2907
    %v2954 = vunpack.c.h.b16 %v2907
    %v2955 = vunpack.c.l.b16 %v2908
    %v2956 = vunpack.c.h.b16 %v2908
    %v2957 = vpack.c.b16 %v2927, %v2925
    %v2958 = vpack.c.b16 %v2928, %v2926
    %v2959 = vpack.c.b16 %v2931, %v2929
    %v2960 = vpack.c.b16 %v2932, %v2930
    %v2961 = vpack.c.b16 %v2935, %v2933
    %v2962 = vpack.c.b16 %v2936, %v2934
    %v2963 = vpack.c.b16 %v2939, %v2937
    %v2964 = vpack.c.b16 %v2940, %v2938
    %v2965 = vpack.c.b16 %v2943, %v2941
    %v2966 = vpack.c.b16 %v2944, %v2942
    %v2967 = vpack.c.b16 %v2947, %v2945
    %v2968 = vpack.c.b16 %v2948, %v2946
    %v2969 = vpack.c.b16 %v2951, %v2949
    %v2970 = vpack.c.b16 %v2952, %v2950
    %v2971 = vpack.c.b16 %v2955, %v2953
    %v2972 = vpack.c.b16 %v2956, %v2954
    %2989 = vmatpush.bf16.msra.mxu0 %v2971
    %2990 = vmatpush.bf16.msra.mxu0 %v2969
    %2991 = vmatpush.bf16.msra.mxu0 %v2967
    %2992 = vmatpush.bf16.msra.mxu0 %v2965
    %2993 = vmatpush.bf16.msra.mxu0 %v2963
    %2994 = vmatpush.bf16.msra.mxu0 %v2961
    %2995 = vmatpush.bf16.msra.mxu0 %v2959
    %2996 = vmatpush.bf16.msra.mxu0 %v2957
    %2997 = vmatmul.bf16.gmra.mxu0 %v2892
    %v2998 = vpop.f32.mrf.mxu0
    %v2999 = vadd.f32 0.0, %v2998
    %v3000 = vpop.f32.mrf.mxu0
    %3001 = vdwg.mxu0
    %3002 = vmatpush.bf16.msra.mxu0 %v2972
    %3003 = vmatpush.bf16.msra.mxu0 %v2970
    %3004 = vmatpush.bf16.msra.mxu0 %v2968
    %3005 = vmatpush.bf16.msra.mxu0 %v2966
    %3006 = vmatpush.bf16.msra.mxu0 %v2964
    %3007 = vmatpush.bf16.msra.mxu0 %v2962
    %3008 = vmatpush.bf16.msra.mxu0 %v2960
    %3009 = vmatpush.bf16.msra.mxu0 %v2958
    %3010 = vmatmul.bf16.gmra.mxu0 %v2892
    %v3011 = vpop.f32.mrf.mxu0
    %v3012 = vadd.f32 0.0, %v3011
    %v3013 = vpop.f32.mrf.mxu0
    %3014 = vdwg.mxu0
    %v3015 = vadd.f32 %v2890, %v2999
    %v3016 = vadd.f32 %v2891, %v3012
    %v3017 = vpack.c.bf16 %v2369, %v2369
    %v3018 = vld [vmem:[%s8 + $0x280] sm:$0xff]
    %v3019 = vld [vmem:[%s8 + $0x288] sm:$0xff]
    %v3020 = vld [vmem:[%s8 + $0x290] sm:$0xff]
    %v3021 = vld [vmem:[%s8 + $0x298] sm:$0xff]
    %v3022 = vld [vmem:[%s8 + $0x2a0] sm:$0xff]
    %v3023 = vld [vmem:[%s8 + $0x2a8] sm:$0xff]
    %v3024 = vld [vmem:[%s8 + $0x2b0] sm:$0xff]
    %v3025 = vld [vmem:[%s8 + $0x2b8] sm:$0xff]
    %v3026 = vld [vmem:[%s8 + $0x2c0] sm:$0xff]
    %v3027 = vld [vmem:[%s8 + $0x2c8] sm:$0xff]
    %v3028 = vld [vmem:[%s8 + $0x2d0] sm:$0xff]
    %v3029 = vld [vmem:[%s8 + $0x2d8] sm:$0xff]
    %v3030 = vld [vmem:[%s8 + $0x2e0] sm:$0xff]
    %v3031 = vld [vmem:[%s8 + $0x2e8] sm:$0xff]
    %v3032 = vld [vmem:[%s8 + $0x2f0] sm:$0xff]
    %v3033 = vld [vmem:[%s8 + $0x2f8] sm:$0xff]
    %v3050 = vunpack.c.l.b16 %v3018
    %v3051 = vunpack.c.h.b16 %v3018
    %v3052 = vunpack.c.l.b16 %v3019
    %v3053 = vunpack.c.h.b16 %v3019
    %v3054 = vunpack.c.l.b16 %v3020
    %v3055 = vunpack.c.h.b16 %v3020
    %v3056 = vunpack.c.l.b16 %v3021
    %v3057 = vunpack.c.h.b16 %v3021
    %v3058 = vunpack.c.l.b16 %v3022
    %v3059 = vunpack.c.h.b16 %v3022
    %v3060 = vunpack.c.l.b16 %v3023
    %v3061 = vunpack.c.h.b16 %v3023
    %v3062 = vunpack.c.l.b16 %v3024
    %v3063 = vunpack.c.h.b16 %v3024
    %v3064 = vunpack.c.l.b16 %v3025
    %v3065 = vunpack.c.h.b16 %v3025
    %v3066 = vunpack.c.l.b16 %v3026
    %v3067 = vunpack.c.h.b16 %v3026
    %v3068 = vunpack.c.l.b16 %v3027
    %v3069 = vunpack.c.h.b16 %v3027
    %v3070 = vunpack.c.l.b16 %v3028
    %v3071 = vunpack.c.h.b16 %v3028
    %v3072 = vunpack.c.l.b16 %v3029
    %v3073 = vunpack.c.h.b16 %v3029
    %v3074 = vunpack.c.l.b16 %v3030
    %v3075 = vunpack.c.h.b16 %v3030
    %v3076 = vunpack.c.l.b16 %v3031
    %v3077 = vunpack.c.h.b16 %v3031
    %v3078 = vunpack.c.l.b16 %v3032
    %v3079 = vunpack.c.h.b16 %v3032
    %v3080 = vunpack.c.l.b16 %v3033
    %v3081 = vunpack.c.h.b16 %v3033
    %v3082 = vpack.c.b16 %v3052, %v3050
    %v3083 = vpack.c.b16 %v3053, %v3051
    %v3084 = vpack.c.b16 %v3056, %v3054
    %v3085 = vpack.c.b16 %v3057, %v3055
    %v3086 = vpack.c.b16 %v3060, %v3058
    %v3087 = vpack.c.b16 %v3061, %v3059
    %v3088 = vpack.c.b16 %v3064, %v3062
    %v3089 = vpack.c.b16 %v3065, %v3063
    %v3090 = vpack.c.b16 %v3068, %v3066
    %v3091 = vpack.c.b16 %v3069, %v3067
    %v3092 = vpack.c.b16 %v3072, %v3070
    %v3093 = vpack.c.b16 %v3073, %v3071
    %v3094 = vpack.c.b16 %v3076, %v3074
    %v3095 = vpack.c.b16 %v3077, %v3075
    %v3096 = vpack.c.b16 %v3080, %v3078
    %v3097 = vpack.c.b16 %v3081, %v3079
    %3114 = vmatpush.bf16.msra.mxu0 %v3096
    %3115 = vmatpush.bf16.msra.mxu0 %v3094
    %3116 = vmatpush.bf16.msra.mxu0 %v3092
    %3117 = vmatpush.bf16.msra.mxu0 %v3090
    %3118 = vmatpush.bf16.msra.mxu0 %v3088
    %3119 = vmatpush.bf16.msra.mxu0 %v3086
    %3120 = vmatpush.bf16.msra.mxu0 %v3084
    %3121 = vmatpush.bf16.msra.mxu0 %v3082
    %3122 = vmatmul.bf16.gmra.mxu0 %v3017
    %v3123 = vpop.f32.mrf.mxu0
    %v3124 = vadd.f32 0.0, %v3123
    %v3125 = vpop.f32.mrf.mxu0
    %3126 = vdwg.mxu0
    %3127 = vmatpush.bf16.msra.mxu0 %v3097
    %3128 = vmatpush.bf16.msra.mxu0 %v3095
    %3129 = vmatpush.bf16.msra.mxu0 %v3093
    %3130 = vmatpush.bf16.msra.mxu0 %v3091
    %3131 = vmatpush.bf16.msra.mxu0 %v3089
    %3132 = vmatpush.bf16.msra.mxu0 %v3087
    %3133 = vmatpush.bf16.msra.mxu0 %v3085
    %3134 = vmatpush.bf16.msra.mxu0 %v3083
    %3135 = vmatmul.bf16.gmra.mxu0 %v3017
    %v3136 = vpop.f32.mrf.mxu0
    %v3137 = vadd.f32 0.0, %v3136
    %v3138 = vpop.f32.mrf.mxu0
    %3139 = vdwg.mxu0
    %v3140 = vadd.f32 %v3015, %v3124
    %v3141 = vadd.f32 %v3016, %v3137
    %v3142 = vpack.c.bf16 %v2372, %v2372
    %v3143 = vld [vmem:[%s8 + $0x300] sm:$0xff]
    %v3144 = vld [vmem:[%s8 + $0x308] sm:$0xff]
    %v3145 = vld [vmem:[%s8 + $0x310] sm:$0xff]
    %v3146 = vld [vmem:[%s8 + $0x318] sm:$0xff]
    %v3147 = vld [vmem:[%s8 + $0x320] sm:$0xff]
    %v3148 = vld [vmem:[%s8 + $0x328] sm:$0xff]
    %v3149 = vld [vmem:[%s8 + $0x330] sm:$0xff]
    %v3150 = vld [vmem:[%s8 + $0x338] sm:$0xff]
    %v3151 = vld [vmem:[%s8 + $0x340] sm:$0xff]
    %v3152 = vld [vmem:[%s8 + $0x348] sm:$0xff]
    %v3153 = vld [vmem:[%s8 + $0x350] sm:$0xff]
    %v3154 = vld [vmem:[%s8 + $0x358] sm:$0xff]
    %v3155 = vld [vmem:[%s8 + $0x360] sm:$0xff]
    %v3156 = vld [vmem:[%s8 + $0x368] sm:$0xff]
    %v3157 = vld [vmem:[%s8 + $0x370] sm:$0xff]
    %v3158 = vld [vmem:[%s8 + $0x378] sm:$0xff]
    %v3175 = vunpack.c.l.b16 %v3143
    %v3176 = vunpack.c.h.b16 %v3143
    %v3177 = vunpack.c.l.b16 %v3144
    %v3178 = vunpack.c.h.b16 %v3144
    %v3179 = vunpack.c.l.b16 %v3145
    %v3180 = vunpack.c.h.b16 %v3145
    %v3181 = vunpack.c.l.b16 %v3146
    %v3182 = vunpack.c.h.b16 %v3146
    %v3183 = vunpack.c.l.b16 %v3147
    %v3184 = vunpack.c.h.b16 %v3147
    %v3185 = vunpack.c.l.b16 %v3148
    %v3186 = vunpack.c.h.b16 %v3148
    %v3187 = vunpack.c.l.b16 %v3149
    %v3188 = vunpack.c.h.b16 %v3149
    %v3189 = vunpack.c.l.b16 %v3150
    %v3190 = vunpack.c.h.b16 %v3150
    %v3191 = vunpack.c.l.b16 %v3151
    %v3192 = vunpack.c.h.b16 %v3151
    %v3193 = vunpack.c.l.b16 %v3152
    %v3194 = vunpack.c.h.b16 %v3152
    %v3195 = vunpack.c.l.b16 %v3153
    %v3196 = vunpack.c.h.b16 %v3153
    %v3197 = vunpack.c.l.b16 %v3154
    %v3198 = vunpack.c.h.b16 %v3154
    %v3199 = vunpack.c.l.b16 %v3155
    %v3200 = vunpack.c.h.b16 %v3155
    %v3201 = vunpack.c.l.b16 %v3156
    %v3202 = vunpack.c.h.b16 %v3156
    %v3203 = vunpack.c.l.b16 %v3157
    %v3204 = vunpack.c.h.b16 %v3157
    %v3205 = vunpack.c.l.b16 %v3158
    %v3206 = vunpack.c.h.b16 %v3158
    %v3207 = vpack.c.b16 %v3177, %v3175
    %v3208 = vpack.c.b16 %v3178, %v3176
    %v3209 = vpack.c.b16 %v3181, %v3179
    %v3210 = vpack.c.b16 %v3182, %v3180
    %v3211 = vpack.c.b16 %v3185, %v3183
    %v3212 = vpack.c.b16 %v3186, %v3184
    %v3213 = vpack.c.b16 %v3189, %v3187
    %v3214 = vpack.c.b16 %v3190, %v3188
    %v3215 = vpack.c.b16 %v3193, %v3191
    %v3216 = vpack.c.b16 %v3194, %v3192
    %v3217 = vpack.c.b16 %v3197, %v3195
    %v3218 = vpack.c.b16 %v3198, %v3196
    %v3219 = vpack.c.b16 %v3201, %v3199
    %v3220 = vpack.c.b16 %v3202, %v3200
    %v3221 = vpack.c.b16 %v3205, %v3203
    %v3222 = vpack.c.b16 %v3206, %v3204
    %3239 = vmatpush.bf16.msra.mxu0 %v3221
    %3240 = vmatpush.bf16.msra.mxu0 %v3219
    %3241 = vmatpush.bf16.msra.mxu0 %v3217
    %3242 = vmatpush.bf16.msra.mxu0 %v3215
    %3243 = vmatpush.bf16.msra.mxu0 %v3213
    %3244 = vmatpush.bf16.msra.mxu0 %v3211
    %3245 = vmatpush.bf16.msra.mxu0 %v3209
    %3246 = vmatpush.bf16.msra.mxu0 %v3207
    %3247 = vmatmul.bf16.gmra.mxu0 %v3142
    %v3248 = vpop.f32.mrf.mxu0
    %v3249 = vadd.f32 0.0, %v3248
    %v3250 = vpop.f32.mrf.mxu0
    %3251 = vdwg.mxu0
    %3252 = vmatpush.bf16.msra.mxu0 %v3222
    %3253 = vmatpush.bf16.msra.mxu0 %v3220
    %3254 = vmatpush.bf16.msra.mxu0 %v3218
    %3255 = vmatpush.bf16.msra.mxu0 %v3216
    %3256 = vmatpush.bf16.msra.mxu0 %v3214
    %3257 = vmatpush.bf16.msra.mxu0 %v3212
    %3258 = vmatpush.bf16.msra.mxu0 %v3210
    %3259 = vmatpush.bf16.msra.mxu0 %v3208
    %3260 = vmatmul.bf16.gmra.mxu0 %v3142
    %v3261 = vpop.f32.mrf.mxu0
    %v3262 = vadd.f32 0.0, %v3261
    %v3263 = vpop.f32.mrf.mxu0
    %3264 = vdwg.mxu0
    %v3265 = vadd.f32 %v3140, %v3249
    %v3266 = vadd.f32 %v3141, %v3262
    %v3267 = vpack.c.bf16 %v2374, %v2374
    %v3268 = vld [vmem:[%s8 + $0x380] sm:$0xff]
    %v3269 = vld [vmem:[%s8 + $0x388] sm:$0xff]
    %v3270 = vld [vmem:[%s8 + $0x390] sm:$0xff]
    %v3271 = vld [vmem:[%s8 + $0x398] sm:$0xff]
    %v3272 = vld [vmem:[%s8 + $0x3a0] sm:$0xff]
    %v3273 = vld [vmem:[%s8 + $0x3a8] sm:$0xff]
    %v3274 = vld [vmem:[%s8 + $0x3b0] sm:$0xff]
    %v3275 = vld [vmem:[%s8 + $0x3b8] sm:$0xff]
    %v3276 = vld [vmem:[%s8 + $0x3c0] sm:$0xff]
    %v3277 = vld [vmem:[%s8 + $0x3c8] sm:$0xff]
    %v3278 = vld [vmem:[%s8 + $0x3d0] sm:$0xff]
    %v3279 = vld [vmem:[%s8 + $0x3d8] sm:$0xff]
    %v3280 = vld [vmem:[%s8 + $0x3e0] sm:$0xff]
    %v3281 = vld [vmem:[%s8 + $0x3e8] sm:$0xff]
    %v3282 = vld [vmem:[%s8 + $0x3f0] sm:$0xff]
    %v3283 = vld [vmem:[%s8 + $0x3f8] sm:$0xff]
    %v3300 = vunpack.c.l.b16 %v3268
    %v3301 = vunpack.c.h.b16 %v3268
    %v3302 = vunpack.c.l.b16 %v3269
    %v3303 = vunpack.c.h.b16 %v3269
    %v3304 = vunpack.c.l.b16 %v3270
    %v3305 = vunpack.c.h.b16 %v3270
    %v3306 = vunpack.c.l.b16 %v3271
    %v3307 = vunpack.c.h.b16 %v3271
    %v3308 = vunpack.c.l.b16 %v3272
    %v3309 = vunpack.c.h.b16 %v3272
    %v3310 = vunpack.c.l.b16 %v3273
    %v3311 = vunpack.c.h.b16 %v3273
    %v3312 = vunpack.c.l.b16 %v3274
    %v3313 = vunpack.c.h.b16 %v3274
    %v3314 = vunpack.c.l.b16 %v3275
    %v3315 = vunpack.c.h.b16 %v3275
    %v3316 = vunpack.c.l.b16 %v3276
    %v3317 = vunpack.c.h.b16 %v3276
    %v3318 = vunpack.c.l.b16 %v3277
    %v3319 = vunpack.c.h.b16 %v3277
    %v3320 = vunpack.c.l.b16 %v3278
    %v3321 = vunpack.c.h.b16 %v3278
    %v3322 = vunpack.c.l.b16 %v3279
    %v3323 = vunpack.c.h.b16 %v3279
    %v3324 = vunpack.c.l.b16 %v3280
    %v3325 = vunpack.c.h.b16 %v3280
    %v3326 = vunpack.c.l.b16 %v3281
    %v3327 = vunpack.c.h.b16 %v3281
    %v3328 = vunpack.c.l.b16 %v3282
    %v3329 = vunpack.c.h.b16 %v3282
    %v3330 = vunpack.c.l.b16 %v3283
    %v3331 = vunpack.c.h.b16 %v3283
    %v3332 = vpack.c.b16 %v3302, %v3300
    %v3333 = vpack.c.b16 %v3303, %v3301
    %v3334 = vpack.c.b16 %v3306, %v3304
    %v3335 = vpack.c.b16 %v3307, %v3305
    %v3336 = vpack.c.b16 %v3310, %v3308
    %v3337 = vpack.c.b16 %v3311, %v3309
    %v3338 = vpack.c.b16 %v3314, %v3312
    %v3339 = vpack.c.b16 %v3315, %v3313
    %v3340 = vpack.c.b16 %v3318, %v3316
    %v3341 = vpack.c.b16 %v3319, %v3317
    %v3342 = vpack.c.b16 %v3322, %v3320
    %v3343 = vpack.c.b16 %v3323, %v3321
    %v3344 = vpack.c.b16 %v3326, %v3324
    %v3345 = vpack.c.b16 %v3327, %v3325
    %v3346 = vpack.c.b16 %v3330, %v3328
    %v3347 = vpack.c.b16 %v3331, %v3329
    %3364 = vmatpush.bf16.msra.mxu0 %v3346
    %3365 = vmatpush.bf16.msra.mxu0 %v3344
    %3366 = vmatpush.bf16.msra.mxu0 %v3342
    %3367 = vmatpush.bf16.msra.mxu0 %v3340
    %3368 = vmatpush.bf16.msra.mxu0 %v3338
    %3369 = vmatpush.bf16.msra.mxu0 %v3336
    %3370 = vmatpush.bf16.msra.mxu0 %v3334
    %3371 = vmatpush.bf16.msra.mxu0 %v3332
    %3372 = vmatmul.bf16.gmra.mxu0 %v3267
    %v3373 = vpop.f32.mrf.mxu0
    %v3374 = vadd.f32 0.0, %v3373
    %v3375 = vpop.f32.mrf.mxu0
    %3376 = vdwg.mxu0
    %3377 = vmatpush.bf16.msra.mxu0 %v3347
    %3378 = vmatpush.bf16.msra.mxu0 %v3345
    %3379 = vmatpush.bf16.msra.mxu0 %v3343
    %3380 = vmatpush.bf16.msra.mxu0 %v3341
    %3381 = vmatpush.bf16.msra.mxu0 %v3339
    %3382 = vmatpush.bf16.msra.mxu0 %v3337
    %3383 = vmatpush.bf16.msra.mxu0 %v3335
    %3384 = vmatpush.bf16.msra.mxu0 %v3333
    %3385 = vmatmul.bf16.gmra.mxu0 %v3267
    %v3386 = vpop.f32.mrf.mxu0
    %v3387 = vadd.f32 0.0, %v3386
    %v3388 = vpop.f32.mrf.mxu0
    %3389 = vdwg.mxu0
    %v3390 = vadd.f32 %v3265, %v3374
    %v3391 = vadd.f32 %v3266, %v3387
    %v3392 = vpack.c.bf16 %v2377, %v2377
    %v3393 = vld [vmem:[%s8 + $0x400] sm:$0xff]
    %v3394 = vld [vmem:[%s8 + $0x408] sm:$0xff]
    %v3395 = vld [vmem:[%s8 + $0x410] sm:$0xff]
    %v3396 = vld [vmem:[%s8 + $0x418] sm:$0xff]
    %v3397 = vld [vmem:[%s8 + $0x420] sm:$0xff]
    %v3398 = vld [vmem:[%s8 + $0x428] sm:$0xff]
    %v3399 = vld [vmem:[%s8 + $0x430] sm:$0xff]
    %v3400 = vld [vmem:[%s8 + $0x438] sm:$0xff]
    %v3401 = vld [vmem:[%s8 + $0x440] sm:$0xff]
    %v3402 = vld [vmem:[%s8 + $0x448] sm:$0xff]
    %v3403 = vld [vmem:[%s8 + $0x450] sm:$0xff]
    %v3404 = vld [vmem:[%s8 + $0x458] sm:$0xff]
    %v3405 = vld [vmem:[%s8 + $0x460] sm:$0xff]
    %v3406 = vld [vmem:[%s8 + $0x468] sm:$0xff]
    %v3407 = vld [vmem:[%s8 + $0x470] sm:$0xff]
    %v3408 = vld [vmem:[%s8 + $0x478] sm:$0xff]
    %v3425 = vunpack.c.l.b16 %v3393
    %v3426 = vunpack.c.h.b16 %v3393
    %v3427 = vunpack.c.l.b16 %v3394
    %v3428 = vunpack.c.h.b16 %v3394
    %v3429 = vunpack.c.l.b16 %v3395
    %v3430 = vunpack.c.h.b16 %v3395
    %v3431 = vunpack.c.l.b16 %v3396
    %v3432 = vunpack.c.h.b16 %v3396
    %v3433 = vunpack.c.l.b16 %v3397
    %v3434 = vunpack.c.h.b16 %v3397
    %v3435 = vunpack.c.l.b16 %v3398
    %v3436 = vunpack.c.h.b16 %v3398
    %v3437 = vunpack.c.l.b16 %v3399
    %v3438 = vunpack.c.h.b16 %v3399
    %v3439 = vunpack.c.l.b16 %v3400
    %v3440 = vunpack.c.h.b16 %v3400
    %v3441 = vunpack.c.l.b16 %v3401
    %v3442 = vunpack.c.h.b16 %v3401
    %v3443 = vunpack.c.l.b16 %v3402
    %v3444 = vunpack.c.h.b16 %v3402
    %v3445 = vunpack.c.l.b16 %v3403
    %v3446 = vunpack.c.h.b16 %v3403
    %v3447 = vunpack.c.l.b16 %v3404
    %v3448 = vunpack.c.h.b16 %v3404
    %v3449 = vunpack.c.l.b16 %v3405
    %v3450 = vunpack.c.h.b16 %v3405
    %v3451 = vunpack.c.l.b16 %v3406
    %v3452 = vunpack.c.h.b16 %v3406
    %v3453 = vunpack.c.l.b16 %v3407
    %v3454 = vunpack.c.h.b16 %v3407
    %v3455 = vunpack.c.l.b16 %v3408
    %v3456 = vunpack.c.h.b16 %v3408
    %v3457 = vpack.c.b16 %v3427, %v3425
    %v3458 = vpack.c.b16 %v3428, %v3426
    %v3459 = vpack.c.b16 %v3431, %v3429
    %v3460 = vpack.c.b16 %v3432, %v3430
    %v3461 = vpack.c.b16 %v3435, %v3433
    %v3462 = vpack.c.b16 %v3436, %v3434
    %v3463 = vpack.c.b16 %v3439, %v3437
    %v3464 = vpack.c.b16 %v3440, %v3438
    %v3465 = vpack.c.b16 %v3443, %v3441
    %v3466 = vpack.c.b16 %v3444, %v3442
    %v3467 = vpack.c.b16 %v3447, %v3445
    %v3468 = vpack.c.b16 %v3448, %v3446
    %v3469 = vpack.c.b16 %v3451, %v3449
    %v3470 = vpack.c.b16 %v3452, %v3450
    %v3471 = vpack.c.b16 %v3455, %v3453
    %v3472 = vpack.c.b16 %v3456, %v3454
    %3489 = vmatpush.bf16.msra.mxu0 %v3471
    %3490 = vmatpush.bf16.msra.mxu0 %v3469
    %3491 = vmatpush.bf16.msra.mxu0 %v3467
    %3492 = vmatpush.bf16.msra.mxu0 %v3465
    %3493 = vmatpush.bf16.msra.mxu0 %v3463
    %3494 = vmatpush.bf16.msra.mxu0 %v3461
    %3495 = vmatpush.bf16.msra.mxu0 %v3459
    %3496 = vmatpush.bf16.msra.mxu0 %v3457
    %3497 = vmatmul.bf16.gmra.mxu0 %v3392
    %v3498 = vpop.f32.mrf.mxu0
    %v3499 = vadd.f32 0.0, %v3498
    %v3500 = vpop.f32.mrf.mxu0
    %3501 = vdwg.mxu0
    %3502 = vmatpush.bf16.msra.mxu0 %v3472
    %3503 = vmatpush.bf16.msra.mxu0 %v3470
    %3504 = vmatpush.bf16.msra.mxu0 %v3468
    %3505 = vmatpush.bf16.msra.mxu0 %v3466
    %3506 = vmatpush.bf16.msra.mxu0 %v3464
    %3507 = vmatpush.bf16.msra.mxu0 %v3462
    %3508 = vmatpush.bf16.msra.mxu0 %v3460
    %3509 = vmatpush.bf16.msra.mxu0 %v3458
    %3510 = vmatmul.bf16.gmra.mxu0 %v3392
    %v3511 = vpop.f32.mrf.mxu0
    %v3512 = vadd.f32 0.0, %v3511
    %v3513 = vpop.f32.mrf.mxu0
    %3514 = vdwg.mxu0
    %v3515 = vadd.f32 %v3390, %v3499
    %v3516 = vadd.f32 %v3391, %v3512
    %v3517 = vpack.c.bf16 %v2379, %v2379
    %v3518 = vld [vmem:[%s8 + $0x480] sm:$0xff]
    %v3519 = vld [vmem:[%s8 + $0x488] sm:$0xff]
    %v3520 = vld [vmem:[%s8 + $0x490] sm:$0xff]
    %v3521 = vld [vmem:[%s8 + $0x498] sm:$0xff]
    %v3522 = vld [vmem:[%s8 + $0x4a0] sm:$0xff]
    %v3523 = vld [vmem:[%s8 + $0x4a8] sm:$0xff]
    %v3524 = vld [vmem:[%s8 + $0x4b0] sm:$0xff]
    %v3525 = vld [vmem:[%s8 + $0x4b8] sm:$0xff]
    %v3526 = vld [vmem:[%s8 + $0x4c0] sm:$0xff]
    %v3527 = vld [vmem:[%s8 + $0x4c8] sm:$0xff]
    %v3528 = vld [vmem:[%s8 + $0x4d0] sm:$0xff]
    %v3529 = vld [vmem:[%s8 + $0x4d8] sm:$0xff]
    %v3530 = vld [vmem:[%s8 + $0x4e0] sm:$0xff]
    %v3531 = vld [vmem:[%s8 + $0x4e8] sm:$0xff]
    %v3532 = vld [vmem:[%s8 + $0x4f0] sm:$0xff]
    %v3533 = vld [vmem:[%s8 + $0x4f8] sm:$0xff]
    %v3550 = vunpack.c.l.b16 %v3518
    %v3551 = vunpack.c.h.b16 %v3518
    %v3552 = vunpack.c.l.b16 %v3519
    %v3553 = vunpack.c.h.b16 %v3519
    %v3554 = vunpack.c.l.b16 %v3520
    %v3555 = vunpack.c.h.b16 %v3520
    %v3556 = vunpack.c.l.b16 %v3521
    %v3557 = vunpack.c.h.b16 %v3521
    %v3558 = vunpack.c.l.b16 %v3522
    %v3559 = vunpack.c.h.b16 %v3522
    %v3560 = vunpack.c.l.b16 %v3523
    %v3561 = vunpack.c.h.b16 %v3523
    %v3562 = vunpack.c.l.b16 %v3524
    %v3563 = vunpack.c.h.b16 %v3524
    %v3564 = vunpack.c.l.b16 %v3525
    %v3565 = vunpack.c.h.b16 %v3525
    %v3566 = vunpack.c.l.b16 %v3526
    %v3567 = vunpack.c.h.b16 %v3526
    %v3568 = vunpack.c.l.b16 %v3527
    %v3569 = vunpack.c.h.b16 %v3527
    %v3570 = vunpack.c.l.b16 %v3528
    %v3571 = vunpack.c.h.b16 %v3528
    %v3572 = vunpack.c.l.b16 %v3529
    %v3573 = vunpack.c.h.b16 %v3529
    %v3574 = vunpack.c.l.b16 %v3530
    %v3575 = vunpack.c.h.b16 %v3530
    %v3576 = vunpack.c.l.b16 %v3531
    %v3577 = vunpack.c.h.b16 %v3531
    %v3578 = vunpack.c.l.b16 %v3532
    %v3579 = vunpack.c.h.b16 %v3532
    %v3580 = vunpack.c.l.b16 %v3533
    %v3581 = vunpack.c.h.b16 %v3533
    %v3582 = vpack.c.b16 %v3552, %v3550
    %v3583 = vpack.c.b16 %v3553, %v3551
    %v3584 = vpack.c.b16 %v3556, %v3554
    %v3585 = vpack.c.b16 %v3557, %v3555
    %v3586 = vpack.c.b16 %v3560, %v3558
    %v3587 = vpack.c.b16 %v3561, %v3559
    %v3588 = vpack.c.b16 %v3564, %v3562
    %v3589 = vpack.c.b16 %v3565, %v3563
    %v3590 = vpack.c.b16 %v3568, %v3566
    %v3591 = vpack.c.b16 %v3569, %v3567
    %v3592 = vpack.c.b16 %v3572, %v3570
    %v3593 = vpack.c.b16 %v3573, %v3571
    %v3594 = vpack.c.b16 %v3576, %v3574
    %v3595 = vpack.c.b16 %v3577, %v3575
    %v3596 = vpack.c.b16 %v3580, %v3578
    %v3597 = vpack.c.b16 %v3581, %v3579
    %3614 = vmatpush.bf16.msra.mxu0 %v3596
    %3615 = vmatpush.bf16.msra.mxu0 %v3594
    %3616 = vmatpush.bf16.msra.mxu0 %v3592
    %3617 = vmatpush.bf16.msra.mxu0 %v3590
    %3618 = vmatpush.bf16.msra.mxu0 %v3588
    %3619 = vmatpush.bf16.msra.mxu0 %v3586
    %3620 = vmatpush.bf16.msra.mxu0 %v3584
    %3621 = vmatpush.bf16.msra.mxu0 %v3582
    %3622 = vmatmul.bf16.gmra.mxu0 %v3517
    %v3623 = vpop.f32.mrf.mxu0
    %v3624 = vadd.f32 0.0, %v3623
    %v3625 = vpop.f32.mrf.mxu0
    %3626 = vdwg.mxu0
    %3627 = vmatpush.bf16.msra.mxu0 %v3597
    %3628 = vmatpush.bf16.msra.mxu0 %v3595
    %3629 = vmatpush.bf16.msra.mxu0 %v3593
    %3630 = vmatpush.bf16.msra.mxu0 %v3591
    %3631 = vmatpush.bf16.msra.mxu0 %v3589
    %3632 = vmatpush.bf16.msra.mxu0 %v3587
    %3633 = vmatpush.bf16.msra.mxu0 %v3585
    %3634 = vmatpush.bf16.msra.mxu0 %v3583
    %3635 = vmatmul.bf16.gmra.mxu0 %v3517
    %v3636 = vpop.f32.mrf.mxu0
    %v3637 = vadd.f32 0.0, %v3636
    %v3638 = vpop.f32.mrf.mxu0
    %3639 = vdwg.mxu0
    %v3640 = vadd.f32 %v3515, %v3624
    %v3641 = vadd.f32 %v3516, %v3637
    %v3642 = vpack.c.bf16 %v2382, %v2382
    %v3643 = vld [vmem:[%s8 + $0x500] sm:$0xff]
    %v3644 = vld [vmem:[%s8 + $0x508] sm:$0xff]
    %v3645 = vld [vmem:[%s8 + $0x510] sm:$0xff]
    %v3646 = vld [vmem:[%s8 + $0x518] sm:$0xff]
    %v3647 = vld [vmem:[%s8 + $0x520] sm:$0xff]
    %v3648 = vld [vmem:[%s8 + $0x528] sm:$0xff]
    %v3649 = vld [vmem:[%s8 + $0x530] sm:$0xff]
    %v3650 = vld [vmem:[%s8 + $0x538] sm:$0xff]
    %v3651 = vld [vmem:[%s8 + $0x540] sm:$0xff]
    %v3652 = vld [vmem:[%s8 + $0x548] sm:$0xff]
    %v3653 = vld [vmem:[%s8 + $0x550] sm:$0xff]
    %v3654 = vld [vmem:[%s8 + $0x558] sm:$0xff]
    %v3655 = vld [vmem:[%s8 + $0x560] sm:$0xff]
    %v3656 = vld [vmem:[%s8 + $0x568] sm:$0xff]
    %v3657 = vld [vmem:[%s8 + $0x570] sm:$0xff]
    %v3658 = vld [vmem:[%s8 + $0x578] sm:$0xff]
    %v3675 = vunpack.c.l.b16 %v3643
    %v3676 = vunpack.c.h.b16 %v3643
    %v3677 = vunpack.c.l.b16 %v3644
    %v3678 = vunpack.c.h.b16 %v3644
    %v3679 = vunpack.c.l.b16 %v3645
    %v3680 = vunpack.c.h.b16 %v3645
    %v3681 = vunpack.c.l.b16 %v3646
    %v3682 = vunpack.c.h.b16 %v3646
    %v3683 = vunpack.c.l.b16 %v3647
    %v3684 = vunpack.c.h.b16 %v3647
    %v3685 = vunpack.c.l.b16 %v3648
    %v3686 = vunpack.c.h.b16 %v3648
    %v3687 = vunpack.c.l.b16 %v3649
    %v3688 = vunpack.c.h.b16 %v3649
    %v3689 = vunpack.c.l.b16 %v3650
    %v3690 = vunpack.c.h.b16 %v3650
    %v3691 = vunpack.c.l.b16 %v3651
    %v3692 = vunpack.c.h.b16 %v3651
    %v3693 = vunpack.c.l.b16 %v3652
    %v3694 = vunpack.c.h.b16 %v3652
    %v3695 = vunpack.c.l.b16 %v3653
    %v3696 = vunpack.c.h.b16 %v3653
    %v3697 = vunpack.c.l.b16 %v3654
    %v3698 = vunpack.c.h.b16 %v3654
    %v3699 = vunpack.c.l.b16 %v3655
    %v3700 = vunpack.c.h.b16 %v3655
    %v3701 = vunpack.c.l.b16 %v3656
    %v3702 = vunpack.c.h.b16 %v3656
    %v3703 = vunpack.c.l.b16 %v3657
    %v3704 = vunpack.c.h.b16 %v3657
    %v3705 = vunpack.c.l.b16 %v3658
    %v3706 = vunpack.c.h.b16 %v3658
    %v3707 = vpack.c.b16 %v3677, %v3675
    %v3708 = vpack.c.b16 %v3678, %v3676
    %v3709 = vpack.c.b16 %v3681, %v3679
    %v3710 = vpack.c.b16 %v3682, %v3680
    %v3711 = vpack.c.b16 %v3685, %v3683
    %v3712 = vpack.c.b16 %v3686, %v3684
    %v3713 = vpack.c.b16 %v3689, %v3687
    %v3714 = vpack.c.b16 %v3690, %v3688
    %v3715 = vpack.c.b16 %v3693, %v3691
    %v3716 = vpack.c.b16 %v3694, %v3692
    %v3717 = vpack.c.b16 %v3697, %v3695
    %v3718 = vpack.c.b16 %v3698, %v3696
    %v3719 = vpack.c.b16 %v3701, %v3699
    %v3720 = vpack.c.b16 %v3702, %v3700
    %v3721 = vpack.c.b16 %v3705, %v3703
    %v3722 = vpack.c.b16 %v3706, %v3704
    %3739 = vmatpush.bf16.msra.mxu0 %v3721
    %3740 = vmatpush.bf16.msra.mxu0 %v3719
    %3741 = vmatpush.bf16.msra.mxu0 %v3717
    %3742 = vmatpush.bf16.msra.mxu0 %v3715
    %3743 = vmatpush.bf16.msra.mxu0 %v3713
    %3744 = vmatpush.bf16.msra.mxu0 %v3711
    %3745 = vmatpush.bf16.msra.mxu0 %v3709
    %3746 = vmatpush.bf16.msra.mxu0 %v3707
    %3747 = vmatmul.bf16.gmra.mxu0 %v3642
    %v3748 = vpop.f32.mrf.mxu0
    %v3749 = vadd.f32 0.0, %v3748
    %v3750 = vpop.f32.mrf.mxu0
    %3751 = vdwg.mxu0
    %3752 = vmatpush.bf16.msra.mxu0 %v3722
    %3753 = vmatpush.bf16.msra.mxu0 %v3720
    %3754 = vmatpush.bf16.msra.mxu0 %v3718
    %3755 = vmatpush.bf16.msra.mxu0 %v3716
    %3756 = vmatpush.bf16.msra.mxu0 %v3714
    %3757 = vmatpush.bf16.msra.mxu0 %v3712
    %3758 = vmatpush.bf16.msra.mxu0 %v3710
    %3759 = vmatpush.bf16.msra.mxu0 %v3708
    %3760 = vmatmul.bf16.gmra.mxu0 %v3642
    %v3761 = vpop.f32.mrf.mxu0
    %v3762 = vadd.f32 0.0, %v3761
    %v3763 = vpop.f32.mrf.mxu0
    %3764 = vdwg.mxu0
    %v3765 = vadd.f32 %v3640, %v3749
    %v3766 = vadd.f32 %v3641, %v3762
    %v3767 = vpack.c.bf16 %v2384, %v2384
    %v3768 = vld [vmem:[%s8 + $0x580] sm:$0xff]
    %v3769 = vld [vmem:[%s8 + $0x588] sm:$0xff]
    %v3770 = vld [vmem:[%s8 + $0x590] sm:$0xff]
    %v3771 = vld [vmem:[%s8 + $0x598] sm:$0xff]
    %v3772 = vld [vmem:[%s8 + $0x5a0] sm:$0xff]
    %v3773 = vld [vmem:[%s8 + $0x5a8] sm:$0xff]
    %v3774 = vld [vmem:[%s8 + $0x5b0] sm:$0xff]
    %v3775 = vld [vmem:[%s8 + $0x5b8] sm:$0xff]
    %v3776 = vld [vmem:[%s8 + $0x5c0] sm:$0xff]
    %v3777 = vld [vmem:[%s8 + $0x5c8] sm:$0xff]
    %v3778 = vld [vmem:[%s8 + $0x5d0] sm:$0xff]
    %v3779 = vld [vmem:[%s8 + $0x5d8] sm:$0xff]
    %v3780 = vld [vmem:[%s8 + $0x5e0] sm:$0xff]
    %v3781 = vld [vmem:[%s8 + $0x5e8] sm:$0xff]
    %v3782 = vld [vmem:[%s8 + $0x5f0] sm:$0xff]
    %v3783 = vld [vmem:[%s8 + $0x5f8] sm:$0xff]
    %v3800 = vunpack.c.l.b16 %v3768
    %v3801 = vunpack.c.h.b16 %v3768
    %v3802 = vunpack.c.l.b16 %v3769
    %v3803 = vunpack.c.h.b16 %v3769
    %v3804 = vunpack.c.l.b16 %v3770
    %v3805 = vunpack.c.h.b16 %v3770
    %v3806 = vunpack.c.l.b16 %v3771
    %v3807 = vunpack.c.h.b16 %v3771
    %v3808 = vunpack.c.l.b16 %v3772
    %v3809 = vunpack.c.h.b16 %v3772
    %v3810 = vunpack.c.l.b16 %v3773
    %v3811 = vunpack.c.h.b16 %v3773
    %v3812 = vunpack.c.l.b16 %v3774
    %v3813 = vunpack.c.h.b16 %v3774
    %v3814 = vunpack.c.l.b16 %v3775
    %v3815 = vunpack.c.h.b16 %v3775
    %v3816 = vunpack.c.l.b16 %v3776
    %v3817 = vunpack.c.h.b16 %v3776
    %v3818 = vunpack.c.l.b16 %v3777
    %v3819 = vunpack.c.h.b16 %v3777
    %v3820 = vunpack.c.l.b16 %v3778
    %v3821 = vunpack.c.h.b16 %v3778
    %v3822 = vunpack.c.l.b16 %v3779
    %v3823 = vunpack.c.h.b16 %v3779
    %v3824 = vunpack.c.l.b16 %v3780
    %v3825 = vunpack.c.h.b16 %v3780
    %v3826 = vunpack.c.l.b16 %v3781
    %v3827 = vunpack.c.h.b16 %v3781
    %v3828 = vunpack.c.l.b16 %v3782
    %v3829 = vunpack.c.h.b16 %v3782
    %v3830 = vunpack.c.l.b16 %v3783
    %v3831 = vunpack.c.h.b16 %v3783
    %v3832 = vpack.c.b16 %v3802, %v3800
    %v3833 = vpack.c.b16 %v3803, %v3801
    %v3834 = vpack.c.b16 %v3806, %v3804
    %v3835 = vpack.c.b16 %v3807, %v3805
    %v3836 = vpack.c.b16 %v3810, %v3808
    %v3837 = vpack.c.b16 %v3811, %v3809
    %v3838 = vpack.c.b16 %v3814, %v3812
    %v3839 = vpack.c.b16 %v3815, %v3813
    %v3840 = vpack.c.b16 %v3818, %v3816
    %v3841 = vpack.c.b16 %v3819, %v3817
    %v3842 = vpack.c.b16 %v3822, %v3820
    %v3843 = vpack.c.b16 %v3823, %v3821
    %v3844 = vpack.c.b16 %v3826, %v3824
    %v3845 = vpack.c.b16 %v3827, %v3825
    %v3846 = vpack.c.b16 %v3830, %v3828
    %v3847 = vpack.c.b16 %v3831, %v3829
    %3864 = vmatpush.bf16.msra.mxu0 %v3846
    %3865 = vmatpush.bf16.msra.mxu0 %v3844
    %3866 = vmatpush.bf16.msra.mxu0 %v3842
    %3867 = vmatpush.bf16.msra.mxu0 %v3840
    %3868 = vmatpush.bf16.msra.mxu0 %v3838
    %3869 = vmatpush.bf16.msra.mxu0 %v3836
    %3870 = vmatpush.bf16.msra.mxu0 %v3834
    %3871 = vmatpush.bf16.msra.mxu0 %v3832
    %3872 = vmatmul.bf16.gmra.mxu0 %v3767
    %v3873 = vpop.f32.mrf.mxu0
    %v3874 = vadd.f32 0.0, %v3873
    %v3875 = vpop.f32.mrf.mxu0
    %3876 = vdwg.mxu0
    %3877 = vmatpush.bf16.msra.mxu0 %v3847
    %3878 = vmatpush.bf16.msra.mxu0 %v3845
    %3879 = vmatpush.bf16.msra.mxu0 %v3843
    %3880 = vmatpush.bf16.msra.mxu0 %v3841
    %3881 = vmatpush.bf16.msra.mxu0 %v3839
    %3882 = vmatpush.bf16.msra.mxu0 %v3837
    %3883 = vmatpush.bf16.msra.mxu0 %v3835
    %3884 = vmatpush.bf16.msra.mxu0 %v3833
    %3885 = vmatmul.bf16.gmra.mxu0 %v3767
    %v3886 = vpop.f32.mrf.mxu0
    %v3887 = vadd.f32 0.0, %v3886
    %v3888 = vpop.f32.mrf.mxu0
    %3889 = vdwg.mxu0
    %v3890 = vadd.f32 %v3765, %v3874
    %v3891 = vadd.f32 %v3766, %v3887
    %v3892 = vpack.c.bf16 %v2387, %v2387
    %v3893 = vld [vmem:[%s8 + $0x600] sm:$0xff]
    %v3894 = vld [vmem:[%s8 + $0x608] sm:$0xff]
    %v3895 = vld [vmem:[%s8 + $0x610] sm:$0xff]
    %v3896 = vld [vmem:[%s8 + $0x618] sm:$0xff]
    %v3897 = vld [vmem:[%s8 + $0x620] sm:$0xff]
    %v3898 = vld [vmem:[%s8 + $0x628] sm:$0xff]
    %v3899 = vld [vmem:[%s8 + $0x630] sm:$0xff]
    %v3900 = vld [vmem:[%s8 + $0x638] sm:$0xff]
    %v3901 = vld [vmem:[%s8 + $0x640] sm:$0xff]
    %v3902 = vld [vmem:[%s8 + $0x648] sm:$0xff]
    %v3903 = vld [vmem:[%s8 + $0x650] sm:$0xff]
    %v3904 = vld [vmem:[%s8 + $0x658] sm:$0xff]
    %v3905 = vld [vmem:[%s8 + $0x660] sm:$0xff]
    %v3906 = vld [vmem:[%s8 + $0x668] sm:$0xff]
    %v3907 = vld [vmem:[%s8 + $0x670] sm:$0xff]
    %v3908 = vld [vmem:[%s8 + $0x678] sm:$0xff]
    %v3925 = vunpack.c.l.b16 %v3893
    %v3926 = vunpack.c.h.b16 %v3893
    %v3927 = vunpack.c.l.b16 %v3894
    %v3928 = vunpack.c.h.b16 %v3894
    %v3929 = vunpack.c.l.b16 %v3895
    %v3930 = vunpack.c.h.b16 %v3895
    %v3931 = vunpack.c.l.b16 %v3896
    %v3932 = vunpack.c.h.b16 %v3896
    %v3933 = vunpack.c.l.b16 %v3897
    %v3934 = vunpack.c.h.b16 %v3897
    %v3935 = vunpack.c.l.b16 %v3898
    %v3936 = vunpack.c.h.b16 %v3898
    %v3937 = vunpack.c.l.b16 %v3899
    %v3938 = vunpack.c.h.b16 %v3899
    %v3939 = vunpack.c.l.b16 %v3900
    %v3940 = vunpack.c.h.b16 %v3900
    %v3941 = vunpack.c.l.b16 %v3901
    %v3942 = vunpack.c.h.b16 %v3901
    %v3943 = vunpack.c.l.b16 %v3902
    %v3944 = vunpack.c.h.b16 %v3902
    %v3945 = vunpack.c.l.b16 %v3903
    %v3946 = vunpack.c.h.b16 %v3903
    %v3947 = vunpack.c.l.b16 %v3904
    %v3948 = vunpack.c.h.b16 %v3904
    %v3949 = vunpack.c.l.b16 %v3905
    %v3950 = vunpack.c.h.b16 %v3905
    %v3951 = vunpack.c.l.b16 %v3906
    %v3952 = vunpack.c.h.b16 %v3906
    %v3953 = vunpack.c.l.b16 %v3907
    %v3954 = vunpack.c.h.b16 %v3907
    %v3955 = vunpack.c.l.b16 %v3908
    %v3956 = vunpack.c.h.b16 %v3908
    %v3957 = vpack.c.b16 %v3927, %v3925
    %v3958 = vpack.c.b16 %v3928, %v3926
    %v3959 = vpack.c.b16 %v3931, %v3929
    %v3960 = vpack.c.b16 %v3932, %v3930
    %v3961 = vpack.c.b16 %v3935, %v3933
    %v3962 = vpack.c.b16 %v3936, %v3934
    %v3963 = vpack.c.b16 %v3939, %v3937
    %v3964 = vpack.c.b16 %v3940, %v3938
    %v3965 = vpack.c.b16 %v3943, %v3941
    %v3966 = vpack.c.b16 %v3944, %v3942
    %v3967 = vpack.c.b16 %v3947, %v3945
    %v3968 = vpack.c.b16 %v3948, %v3946
    %v3969 = vpack.c.b16 %v3951, %v3949
    %v3970 = vpack.c.b16 %v3952, %v3950
    %v3971 = vpack.c.b16 %v3955, %v3953
    %v3972 = vpack.c.b16 %v3956, %v3954
    %3989 = vmatpush.bf16.msra.mxu0 %v3971
    %3990 = vmatpush.bf16.msra.mxu0 %v3969
    %3991 = vmatpush.bf16.msra.mxu0 %v3967
    %3992 = vmatpush.bf16.msra.mxu0 %v3965
    %3993 = vmatpush.bf16.msra.mxu0 %v3963
    %3994 = vmatpush.bf16.msra.mxu0 %v3961
    %3995 = vmatpush.bf16.msra.mxu0 %v3959
    %3996 = vmatpush.bf16.msra.mxu0 %v3957
    %3997 = vmatmul.bf16.gmra.mxu0 %v3892
    %v3998 = vpop.f32.mrf.mxu0
    %v3999 = vadd.f32 0.0, %v3998
    %v4000 = vpop.f32.mrf.mxu0
    %4001 = vdwg.mxu0
    %4002 = vmatpush.bf16.msra.mxu0 %v3972
    %4003 = vmatpush.bf16.msra.mxu0 %v3970
    %4004 = vmatpush.bf16.msra.mxu0 %v3968
    %4005 = vmatpush.bf16.msra.mxu0 %v3966
    %4006 = vmatpush.bf16.msra.mxu0 %v3964
    %4007 = vmatpush.bf16.msra.mxu0 %v3962
    %4008 = vmatpush.bf16.msra.mxu0 %v3960
    %4009 = vmatpush.bf16.msra.mxu0 %v3958
    %4010 = vmatmul.bf16.gmra.mxu0 %v3892
    %v4011 = vpop.f32.mrf.mxu0
    %v4012 = vadd.f32 0.0, %v4011
    %v4013 = vpop.f32.mrf.mxu0
    %4014 = vdwg.mxu0
    %v4015 = vadd.f32 %v3890, %v3999
    %v4016 = vadd.f32 %v3891, %v4012
    %v4017 = vpack.c.bf16 %v2389, %v2389
    %v4018 = vld [vmem:[%s8 + $0x680] sm:$0xff]
    %v4019 = vld [vmem:[%s8 + $0x688] sm:$0xff]
    %v4020 = vld [vmem:[%s8 + $0x690] sm:$0xff]
    %v4021 = vld [vmem:[%s8 + $0x698] sm:$0xff]
    %v4022 = vld [vmem:[%s8 + $0x6a0] sm:$0xff]
    %v4023 = vld [vmem:[%s8 + $0x6a8] sm:$0xff]
    %v4024 = vld [vmem:[%s8 + $0x6b0] sm:$0xff]
    %v4025 = vld [vmem:[%s8 + $0x6b8] sm:$0xff]
    %v4026 = vld [vmem:[%s8 + $0x6c0] sm:$0xff]
    %v4027 = vld [vmem:[%s8 + $0x6c8] sm:$0xff]
    %v4028 = vld [vmem:[%s8 + $0x6d0] sm:$0xff]
    %v4029 = vld [vmem:[%s8 + $0x6d8] sm:$0xff]
    %v4030 = vld [vmem:[%s8 + $0x6e0] sm:$0xff]
    %v4031 = vld [vmem:[%s8 + $0x6e8] sm:$0xff]
    %v4032 = vld [vmem:[%s8 + $0x6f0] sm:$0xff]
    %v4033 = vld [vmem:[%s8 + $0x6f8] sm:$0xff]
    %v4050 = vunpack.c.l.b16 %v4018
    %v4051 = vunpack.c.h.b16 %v4018
    %v4052 = vunpack.c.l.b16 %v4019
    %v4053 = vunpack.c.h.b16 %v4019
    %v4054 = vunpack.c.l.b16 %v4020
    %v4055 = vunpack.c.h.b16 %v4020
    %v4056 = vunpack.c.l.b16 %v4021
    %v4057 = vunpack.c.h.b16 %v4021
    %v4058 = vunpack.c.l.b16 %v4022
    %v4059 = vunpack.c.h.b16 %v4022
    %v4060 = vunpack.c.l.b16 %v4023
    %v4061 = vunpack.c.h.b16 %v4023
    %v4062 = vunpack.c.l.b16 %v4024
    %v4063 = vunpack.c.h.b16 %v4024
    %v4064 = vunpack.c.l.b16 %v4025
    %v4065 = vunpack.c.h.b16 %v4025
    %v4066 = vunpack.c.l.b16 %v4026
    %v4067 = vunpack.c.h.b16 %v4026
    %v4068 = vunpack.c.l.b16 %v4027
    %v4069 = vunpack.c.h.b16 %v4027
    %v4070 = vunpack.c.l.b16 %v4028
    %v4071 = vunpack.c.h.b16 %v4028
    %v4072 = vunpack.c.l.b16 %v4029
    %v4073 = vunpack.c.h.b16 %v4029
    %v4074 = vunpack.c.l.b16 %v4030
    %v4075 = vunpack.c.h.b16 %v4030
    %v4076 = vunpack.c.l.b16 %v4031
    %v4077 = vunpack.c.h.b16 %v4031
    %v4078 = vunpack.c.l.b16 %v4032
    %v4079 = vunpack.c.h.b16 %v4032
    %v4080 = vunpack.c.l.b16 %v4033
    %v4081 = vunpack.c.h.b16 %v4033
    %v4082 = vpack.c.b16 %v4052, %v4050
    %v4083 = vpack.c.b16 %v4053, %v4051
    %v4084 = vpack.c.b16 %v4056, %v4054
    %v4085 = vpack.c.b16 %v4057, %v4055
    %v4086 = vpack.c.b16 %v4060, %v4058
    %v4087 = vpack.c.b16 %v4061, %v4059
    %v4088 = vpack.c.b16 %v4064, %v4062
    %v4089 = vpack.c.b16 %v4065, %v4063
    %v4090 = vpack.c.b16 %v4068, %v4066
    %v4091 = vpack.c.b16 %v4069, %v4067
    %v4092 = vpack.c.b16 %v4072, %v4070
    %v4093 = vpack.c.b16 %v4073, %v4071
    %v4094 = vpack.c.b16 %v4076, %v4074
    %v4095 = vpack.c.b16 %v4077, %v4075
    %v4096 = vpack.c.b16 %v4080, %v4078
    %v4097 = vpack.c.b16 %v4081, %v4079
    %4114 = vmatpush.bf16.msra.mxu0 %v4096
    %4115 = vmatpush.bf16.msra.mxu0 %v4094
    %4116 = vmatpush.bf16.msra.mxu0 %v4092
    %4117 = vmatpush.bf16.msra.mxu0 %v4090
    %4118 = vmatpush.bf16.msra.mxu0 %v4088
    %4119 = vmatpush.bf16.msra.mxu0 %v4086
    %4120 = vmatpush.bf16.msra.mxu0 %v4084
    %4121 = vmatpush.bf16.msra.mxu0 %v4082
    %4122 = vmatmul.bf16.gmra.mxu0 %v4017
    %v4123 = vpop.f32.mrf.mxu0
    %v4124 = vadd.f32 0.0, %v4123
    %v4125 = vpop.f32.mrf.mxu0
    %4126 = vdwg.mxu0
    %4127 = vmatpush.bf16.msra.mxu0 %v4097
    %4128 = vmatpush.bf16.msra.mxu0 %v4095
    %4129 = vmatpush.bf16.msra.mxu0 %v4093
    %4130 = vmatpush.bf16.msra.mxu0 %v4091
    %4131 = vmatpush.bf16.msra.mxu0 %v4089
    %4132 = vmatpush.bf16.msra.mxu0 %v4087
    %4133 = vmatpush.bf16.msra.mxu0 %v4085
    %4134 = vmatpush.bf16.msra.mxu0 %v4083
    %4135 = vmatmul.bf16.gmra.mxu0 %v4017
    %v4136 = vpop.f32.mrf.mxu0
    %v4137 = vadd.f32 0.0, %v4136
    %v4138 = vpop.f32.mrf.mxu0
    %4139 = vdwg.mxu0
    %v4140 = vadd.f32 %v4015, %v4124
    %v4141 = vadd.f32 %v4016, %v4137
    %v4142 = vpack.c.bf16 %v2392, %v2392
    %v4143 = vld [vmem:[%s8 + $0x700] sm:$0xff]
    %v4144 = vld [vmem:[%s8 + $0x708] sm:$0xff]
    %v4145 = vld [vmem:[%s8 + $0x710] sm:$0xff]
    %v4146 = vld [vmem:[%s8 + $0x718] sm:$0xff]
    %v4147 = vld [vmem:[%s8 + $0x720] sm:$0xff]
    %v4148 = vld [vmem:[%s8 + $0x728] sm:$0xff]
    %v4149 = vld [vmem:[%s8 + $0x730] sm:$0xff]
    %v4150 = vld [vmem:[%s8 + $0x738] sm:$0xff]
    %v4151 = vld [vmem:[%s8 + $0x740] sm:$0xff]
    %v4152 = vld [vmem:[%s8 + $0x748] sm:$0xff]
    %v4153 = vld [vmem:[%s8 + $0x750] sm:$0xff]
    %v4154 = vld [vmem:[%s8 + $0x758] sm:$0xff]
    %v4155 = vld [vmem:[%s8 + $0x760] sm:$0xff]
    %v4156 = vld [vmem:[%s8 + $0x768] sm:$0xff]
    %v4157 = vld [vmem:[%s8 + $0x770] sm:$0xff]
    %v4158 = vld [vmem:[%s8 + $0x778] sm:$0xff]
    %v4175 = vunpack.c.l.b16 %v4143
    %v4176 = vunpack.c.h.b16 %v4143
    %v4177 = vunpack.c.l.b16 %v4144
    %v4178 = vunpack.c.h.b16 %v4144
    %v4179 = vunpack.c.l.b16 %v4145
    %v4180 = vunpack.c.h.b16 %v4145
    %v4181 = vunpack.c.l.b16 %v4146
    %v4182 = vunpack.c.h.b16 %v4146
    %v4183 = vunpack.c.l.b16 %v4147
    %v4184 = vunpack.c.h.b16 %v4147
    %v4185 = vunpack.c.l.b16 %v4148
    %v4186 = vunpack.c.h.b16 %v4148
    %v4187 = vunpack.c.l.b16 %v4149
    %v4188 = vunpack.c.h.b16 %v4149
    %v4189 = vunpack.c.l.b16 %v4150
    %v4190 = vunpack.c.h.b16 %v4150
    %v4191 = vunpack.c.l.b16 %v4151
    %v4192 = vunpack.c.h.b16 %v4151
    %v4193 = vunpack.c.l.b16 %v4152
    %v4194 = vunpack.c.h.b16 %v4152
    %v4195 = vunpack.c.l.b16 %v4153
    %v4196 = vunpack.c.h.b16 %v4153
    %v4197 = vunpack.c.l.b16 %v4154
    %v4198 = vunpack.c.h.b16 %v4154
    %v4199 = vunpack.c.l.b16 %v4155
    %v4200 = vunpack.c.h.b16 %v4155
    %v4201 = vunpack.c.l.b16 %v4156
    %v4202 = vunpack.c.h.b16 %v4156
    %v4203 = vunpack.c.l.b16 %v4157
    %v4204 = vunpack.c.h.b16 %v4157
    %v4205 = vunpack.c.l.b16 %v4158
    %v4206 = vunpack.c.h.b16 %v4158
    %v4207 = vpack.c.b16 %v4177, %v4175
    %v4208 = vpack.c.b16 %v4178, %v4176
    %v4209 = vpack.c.b16 %v4181, %v4179
    %v4210 = vpack.c.b16 %v4182, %v4180
    %v4211 = vpack.c.b16 %v4185, %v4183
    %v4212 = vpack.c.b16 %v4186, %v4184
    %v4213 = vpack.c.b16 %v4189, %v4187
    %v4214 = vpack.c.b16 %v4190, %v4188
    %v4215 = vpack.c.b16 %v4193, %v4191
    %v4216 = vpack.c.b16 %v4194, %v4192
    %v4217 = vpack.c.b16 %v4197, %v4195
    %v4218 = vpack.c.b16 %v4198, %v4196
    %v4219 = vpack.c.b16 %v4201, %v4199
    %v4220 = vpack.c.b16 %v4202, %v4200
    %v4221 = vpack.c.b16 %v4205, %v4203
    %v4222 = vpack.c.b16 %v4206, %v4204
    %4239 = vmatpush.bf16.msra.mxu0 %v4221
    %4240 = vmatpush.bf16.msra.mxu0 %v4219
    %4241 = vmatpush.bf16.msra.mxu0 %v4217
    %4242 = vmatpush.bf16.msra.mxu0 %v4215
    %4243 = vmatpush.bf16.msra.mxu0 %v4213
    %4244 = vmatpush.bf16.msra.mxu0 %v4211
    %4245 = vmatpush.bf16.msra.mxu0 %v4209
    %4246 = vmatpush.bf16.msra.mxu0 %v4207
    %4247 = vmatmul.bf16.gmra.mxu0 %v4142
    %v4248 = vpop.f32.mrf.mxu0
    %v4249 = vadd.f32 0.0, %v4248
    %v4250 = vpop.f32.mrf.mxu0
    %4251 = vdwg.mxu0
    %4252 = vmatpush.bf16.msra.mxu0 %v4222
    %4253 = vmatpush.bf16.msra.mxu0 %v4220
    %4254 = vmatpush.bf16.msra.mxu0 %v4218
    %4255 = vmatpush.bf16.msra.mxu0 %v4216
    %4256 = vmatpush.bf16.msra.mxu0 %v4214
    %4257 = vmatpush.bf16.msra.mxu0 %v4212
    %4258 = vmatpush.bf16.msra.mxu0 %v4210
    %4259 = vmatpush.bf16.msra.mxu0 %v4208
    %4260 = vmatmul.bf16.gmra.mxu0 %v4142
    %v4261 = vpop.f32.mrf.mxu0
    %v4262 = vadd.f32 0.0, %v4261
    %v4263 = vpop.f32.mrf.mxu0
    %4264 = vdwg.mxu0
    %v4265 = vadd.f32 %v4140, %v4249
    %v4266 = vadd.f32 %v4141, %v4262
    %v4267 = vpack.c.bf16 %v2394, %v2394
    %v4268 = vld [vmem:[%s8 + $0x780] sm:$0xff]
    %v4269 = vld [vmem:[%s8 + $0x788] sm:$0xff]
    %v4270 = vld [vmem:[%s8 + $0x790] sm:$0xff]
    %v4271 = vld [vmem:[%s8 + $0x798] sm:$0xff]
    %v4272 = vld [vmem:[%s8 + $0x7a0] sm:$0xff]
    %v4273 = vld [vmem:[%s8 + $0x7a8] sm:$0xff]
    %v4274 = vld [vmem:[%s8 + $0x7b0] sm:$0xff]
    %v4275 = vld [vmem:[%s8 + $0x7b8] sm:$0xff]
    %v4276 = vld [vmem:[%s8 + $0x7c0] sm:$0xff]
    %v4277 = vld [vmem:[%s8 + $0x7c8] sm:$0xff]
    %v4278 = vld [vmem:[%s8 + $0x7d0] sm:$0xff]
    %v4279 = vld [vmem:[%s8 + $0x7d8] sm:$0xff]
    %v4280 = vld [vmem:[%s8 + $0x7e0] sm:$0xff]
    %v4281 = vld [vmem:[%s8 + $0x7e8] sm:$0xff]
    %v4282 = vld [vmem:[%s8 + $0x7f0] sm:$0xff]
    %v4283 = vld [vmem:[%s8 + $0x7f8] sm:$0xff]
    %v4300 = vunpack.c.l.b16 %v4268
    %v4301 = vunpack.c.h.b16 %v4268
    %v4302 = vunpack.c.l.b16 %v4269
    %v4303 = vunpack.c.h.b16 %v4269
    %v4304 = vunpack.c.l.b16 %v4270
    %v4305 = vunpack.c.h.b16 %v4270
    %v4306 = vunpack.c.l.b16 %v4271
    %v4307 = vunpack.c.h.b16 %v4271
    %v4308 = vunpack.c.l.b16 %v4272
    %v4309 = vunpack.c.h.b16 %v4272
    %v4310 = vunpack.c.l.b16 %v4273
    %v4311 = vunpack.c.h.b16 %v4273
    %v4312 = vunpack.c.l.b16 %v4274
    %v4313 = vunpack.c.h.b16 %v4274
    %v4314 = vunpack.c.l.b16 %v4275
    %v4315 = vunpack.c.h.b16 %v4275
    %v4316 = vunpack.c.l.b16 %v4276
    %v4317 = vunpack.c.h.b16 %v4276
    %v4318 = vunpack.c.l.b16 %v4277
    %v4319 = vunpack.c.h.b16 %v4277
    %v4320 = vunpack.c.l.b16 %v4278
    %v4321 = vunpack.c.h.b16 %v4278
    %v4322 = vunpack.c.l.b16 %v4279
    %v4323 = vunpack.c.h.b16 %v4279
    %v4324 = vunpack.c.l.b16 %v4280
    %v4325 = vunpack.c.h.b16 %v4280
    %v4326 = vunpack.c.l.b16 %v4281
    %v4327 = vunpack.c.h.b16 %v4281
    %v4328 = vunpack.c.l.b16 %v4282
    %v4329 = vunpack.c.h.b16 %v4282
    %v4330 = vunpack.c.l.b16 %v4283
    %v4331 = vunpack.c.h.b16 %v4283
    %v4332 = vpack.c.b16 %v4302, %v4300
    %v4333 = vpack.c.b16 %v4303, %v4301
    %v4334 = vpack.c.b16 %v4306, %v4304
    %v4335 = vpack.c.b16 %v4307, %v4305
    %v4336 = vpack.c.b16 %v4310, %v4308
    %v4337 = vpack.c.b16 %v4311, %v4309
    %v4338 = vpack.c.b16 %v4314, %v4312
    %v4339 = vpack.c.b16 %v4315, %v4313
    %v4340 = vpack.c.b16 %v4318, %v4316
    %v4341 = vpack.c.b16 %v4319, %v4317
    %v4342 = vpack.c.b16 %v4322, %v4320
    %v4343 = vpack.c.b16 %v4323, %v4321
    %v4344 = vpack.c.b16 %v4326, %v4324
    %v4345 = vpack.c.b16 %v4327, %v4325
    %v4346 = vpack.c.b16 %v4330, %v4328
    %v4347 = vpack.c.b16 %v4331, %v4329
    %4364 = vmatpush.bf16.msra.mxu0 %v4346
    %4365 = vmatpush.bf16.msra.mxu0 %v4344
    %4366 = vmatpush.bf16.msra.mxu0 %v4342
    %4367 = vmatpush.bf16.msra.mxu0 %v4340
    %4368 = vmatpush.bf16.msra.mxu0 %v4338
    %4369 = vmatpush.bf16.msra.mxu0 %v4336
    %4370 = vmatpush.bf16.msra.mxu0 %v4334
    %4371 = vmatpush.bf16.msra.mxu0 %v4332
    %4372 = vmatmul.bf16.gmra.mxu0 %v4267
    %v4373 = vpop.f32.mrf.mxu0
    %v4374 = vadd.f32 0.0, %v4373
    %v4375 = vpop.f32.mrf.mxu0
    %4376 = vdwg.mxu0
    %4377 = vmatpush.bf16.msra.mxu0 %v4347
    %4378 = vmatpush.bf16.msra.mxu0 %v4345
    %4379 = vmatpush.bf16.msra.mxu0 %v4343
    %4380 = vmatpush.bf16.msra.mxu0 %v4341
    %4381 = vmatpush.bf16.msra.mxu0 %v4339
    %4382 = vmatpush.bf16.msra.mxu0 %v4337
    %4383 = vmatpush.bf16.msra.mxu0 %v4335
    %4384 = vmatpush.bf16.msra.mxu0 %v4333
    %4385 = vmatmul.bf16.gmra.mxu0 %v4267
    %v4386 = vpop.f32.mrf.mxu0
    %v4387 = vadd.f32 0.0, %v4386
    %v4388 = vpop.f32.mrf.mxu0
    %4389 = vdwg.mxu0
    %v4390 = vadd.f32 %v4265, %v4374
    %v4391 = vadd.f32 %v4266, %v4387
    %v4392 = vrot.slane %v4390, 4
    %v4393 = vadd.f32 %v4390, %v4392
    %v4394 = vrot.slane %v4393, 2
    %v4395 = vadd.f32 %v4393, %v4394
    %v4396 = vrot.slane %v4395, 1
    %v4397 = vadd.f32 %v4395, %v4396
    %v4398 = vrot.slane %v4391, 4
    %v4399 = vadd.f32 %v4391, %v4398
    %v4400 = vrot.slane %v4399, 2
    %v4401 = vadd.f32 %v4399, %v4400
    %v4402 = vrot.slane %v4401, 1
    %v4403 = vadd.f32 %v4401, %v4402
    %v4404 = vrcp.pop 8.0
    %v4405 = vmul.f32 8.0, %v4404
    %v4406 = vsub.f32 1.0, %v4405
    %v4407 = vmul.f32 %v4404, %v4406
    %v4408 = vadd.f32 %v4404, %v4407
    %vm4409 = vweird.f32 %v4404
    %v4410 = vsel %vm4409, %v4404, %v4408
    %v4411 = vmul.f32 %v4397, %v4410
    %v4412 = vmul.f32 %v4403, %v4410
    %v4413 = vsub.f32 %v4390, %v4411
    %v4414 = vsub.f32 %v4391, %v4412
    %v4415 = vmul.f32 %v4413, %v4413
    %v4416 = vmul.f32 %v4414, %v4414
    %v4417 = vrot.slane %v4415, 4
    %v4418 = vadd.f32 %v4415, %v4417
    %v4419 = vrot.slane %v4418, 2
    %v4420 = vadd.f32 %v4418, %v4419
    %v4421 = vrot.slane %v4420, 1
    %v4422 = vadd.f32 %v4420, %v4421
    %v4423 = vrot.slane %v4416, 4
    %v4424 = vadd.f32 %v4416, %v4423
    %v4425 = vrot.slane %v4424, 2
    %v4426 = vadd.f32 %v4424, %v4425
    %v4427 = vrot.slane %v4426, 1
    %v4428 = vadd.f32 %v4426, %v4427
    %v4429 = vmul.f32 %v4422, %v4410
    %v4430 = vmul.f32 %v4428, %v4410
    %v4431 = vadd.f32 %v4429, 1e-05
    %v4432 = vadd.f32 %v4430, 1e-05
    %v4433 = vrsqrt.pop %v4431
    %v4434 = vmul.f32 %v4433, %v4431
    %v4435 = vmul.f32 %v4434, %v4433
    %v4436 = vmul.f32 0.5, %v4435
    %v4437 = vsub.f32 1.5, %v4436
    %v4438 = vmul.f32 %v4433, %v4437
    %vm4439 = vweird.f32 %v4431
    %vm4440 = vweird.f32 %v4433
    %vm4441 = vmor %vm4439, %vm4440
    %v4442 = vsel %vm4441, %v4433, %v4438
    %v4443 = vrsqrt.pop %v4432
    %v4444 = vmul.f32 %v4443, %v4432
    %v4445 = vmul.f32 %v4444, %v4443
    %v4446 = vmul.f32 0.5, %v4445
    %v4447 = vsub.f32 1.5, %v4446
    %v4448 = vmul.f32 %v4443, %v4447
    %vm4449 = vweird.f32 %v4432
    %vm4450 = vweird.f32 %v4443
    %vm4451 = vmor %vm4449, %vm4450
    %v4452 = vsel %vm4451, %v4443, %v4448
    %v4453 = vmul.f32 %v4413, %v4442
    %v4454 = vmul.f32 %v4414, %v4452
    %v4455 = vld [vmem:[%s9] sm:$0x3]
    %v4457 = vperm.slane %v4455, 0
    %v4458 = vperm.slane %v4455, 1
    %v4461 = vmul.f32 %v4453, %v4457
    %v4462 = vmul.f32 %v4454, %v4458
    %v4463 = vld [vmem:[%s10] sm:$0x3]
    %v4465 = vperm.slane %v4463, 0
    %v4466 = vperm.slane %v4463, 1
    %v4469 = vadd.f32 %v4461, %v4465
    %v4470 = vadd.f32 %v4462, %v4466
    %vm4471 = vcmp.ge.f32.partialorder %v4469, 0.0
    %vm4472 = vcmp.ge.f32.partialorder %v4470, 0.0
    %v4473 = vmul.f32 %v4469, 0.2
    %v4474 = vmul.f32 %v4470, 0.2
    %v4475 = vsel %vm4471, %v4469, %v4473
    %v4476 = vsel %vm4472, %v4470, %v4474
    %v4477 = vpack.c.bf16 %v4475, %v4475
    %v4478 = vpack.c.bf16 %v4476, %v4476
    %v4479 = vld [vmem:[%s11] sm:$0xf]
    %v4480 = vld [vmem:[%s11 + $0x4] sm:$0xf]
    %v4481 = vld [vmem:[%s11 + $0x8] sm:$0xf]
    %v4482 = vld [vmem:[%s11 + $0xc] sm:$0xf]
    %v4487 = vunpack.c.l.b16 %v4479
    %v4488 = vunpack.c.l.b16 %v4480
    %v4489 = vunpack.c.l.b16 %v4481
    %v4490 = vunpack.c.l.b16 %v4482
    %v4491 = vpack.c.b16 %v4488, %v4487
    %v4492 = vpack.c.b16 %v4490, %v4489
    %vm4493 = vcmask 64512
    %v4495 = vsel %vm4493, %v4491, 0
    %v4498 = vsel %vm4493, %v4492, 0
    %vm4500 = vcmask 1043456
    %v4502 = vsel %vm4500, %v4477, 0
    %v4505 = vsel %vm4500, %v4478, 0
    %4507 = vmatpush.bf16.msra.mxu0 0
    %4508 = vmatpush.bf16.msra.mxu0 0
    %4509 = vmatpush.bf16.msra.mxu0 0
    %4510 = vmatpush.bf16.msra.mxu0 0
    %4511 = vmatpush.bf16.msra.mxu0 0
    %4512 = vmatpush.bf16.msra.mxu0 0
    %4513 = vmatpush.bf16.msra.mxu0 0
    %4514 = vmatpush.bf16.msra.mxu0 %v4502
    %4515 = vmatmul.bf16.gmra.mxu0 %v4495
    %v4516 = vpop.f32.mrf.mxu0
    %v4517 = vadd.f32 0.0, %v4516
    %v4518 = vpop.f32.mrf.mxu0
    %v4519 = vadd.f32 0.0, %v4518
    %4520 = vmatmul.bf16.gmra.mxu0 %v4498
    %v4521 = vpop.f32.mrf.mxu0
    %v4522 = vadd.f32 0.0, %v4521
    %v4523 = vpop.f32.mrf.mxu0
    %v4524 = vadd.f32 0.0, %v4523
    %4525 = vdwg.mxu0
    %4526 = vmatpush.bf16.msra.mxu0 0
    %4527 = vmatpush.bf16.msra.mxu0 0
    %4528 = vmatpush.bf16.msra.mxu0 0
    %4529 = vmatpush.bf16.msra.mxu0 0
    %4530 = vmatpush.bf16.msra.mxu0 0
    %4531 = vmatpush.bf16.msra.mxu0 0
    %4532 = vmatpush.bf16.msra.mxu0 0
    %4533 = vmatpush.bf16.msra.mxu0 %v4505
    %4534 = vmatmul.bf16.gmra.mxu0 %v4495
    %v4535 = vpop.f32.mrf.mxu0
    %v4536 = vadd.f32 0.0, %v4535
    %v4537 = vpop.f32.mrf.mxu0
    %v4538 = vadd.f32 0.0, %v4537
    %4539 = vmatmul.bf16.gmra.mxu0 %v4498
    %v4540 = vpop.f32.mrf.mxu0
    %v4541 = vadd.f32 0.0, %v4540
    %v4542 = vpop.f32.mrf.mxu0
    %v4543 = vadd.f32 0.0, %v4542
    %4544 = vdwg.mxu0
    %v4545 = vpack.c.bf16 %v4517, %v4517
    %v4546 = vpack.c.bf16 %v4536, %v4536
    %v4547 = vld [vmem:[#allocation7] sm:$0xf]
    %v4548 = vld [vmem:[#allocation7 + $0x4] sm:$0xf]
    %v4549 = vld [vmem:[#allocation7 + $0x8] sm:$0xf]
    %v4550 = vld [vmem:[#allocation7 + $0xc] sm:$0xf]
    %v4551 = vld [vmem:[#allocation7 + $0x10] sm:$0xf]
    %v4552 = vld [vmem:[#allocation7 + $0x14] sm:$0xf]
    %v4553 = vld [vmem:[#allocation7 + $0x18] sm:$0xf]
    %v4554 = vld [vmem:[#allocation7 + $0x1c] sm:$0xf]
    %v4555 = vld [vmem:[#allocation7 + $0x20] sm:$0xf]
    %v4556 = vld [vmem:[#allocation7 + $0x24] sm:$0xf]
    %v4557 = vld [vmem:[#allocation7 + $0x28] sm:$0xf]
    %v4558 = vld [vmem:[#allocation7 + $0x2c] sm:$0xf]
    %v4559 = vld [vmem:[#allocation7 + $0x30] sm:$0xf]
    %v4560 = vld [vmem:[#allocation7 + $0x34] sm:$0xf]
    %v4561 = vld [vmem:[#allocation7 + $0x38] sm:$0xf]
    %v4562 = vld [vmem:[#allocation7 + $0x3c] sm:$0xf]
    %v4563 = vld [vmem:[#allocation7 + $0x40] sm:$0xf]
    %v4564 = vld [vmem:[#allocation7 + $0x44] sm:$0xf]
    %v4565 = vld [vmem:[#allocation7 + $0x48] sm:$0xf]
    %v4566 = vld [vmem:[#allocation7 + $0x4c] sm:$0xf]
    %v4567 = vld [vmem:[#allocation7 + $0x50] sm:$0xf]
    %v4568 = vld [vmem:[#allocation7 + $0x54] sm:$0xf]
    %v4569 = vld [vmem:[#allocation7 + $0x58] sm:$0xf]
    %v4570 = vld [vmem:[#allocation7 + $0x5c] sm:$0xf]
    %v4571 = vld [vmem:[#allocation7 + $0x60] sm:$0xf]
    %v4572 = vld [vmem:[#allocation7 + $0x64] sm:$0xf]
    %v4573 = vld [vmem:[#allocation7 + $0x68] sm:$0xf]
    %v4574 = vld [vmem:[#allocation7 + $0x6c] sm:$0xf]
    %v4575 = vld [vmem:[#allocation7 + $0x70] sm:$0xf]
    %v4576 = vld [vmem:[#allocation7 + $0x74] sm:$0xf]
    %v4577 = vld [vmem:[#allocation7 + $0x78] sm:$0xf]
    %v4578 = vld [vmem:[#allocation7 + $0x7c] sm:$0xf]
    %v4579 = vpack.c.bf16 %v4519, %v4519
    %v4580 = vpack.c.bf16 %v4538, %v4538
    %v4581 = vld [vmem:[#allocation7 + $0x80] sm:$0xf]
    %v4582 = vld [vmem:[#allocation7 + $0x84] sm:$0xf]
    %v4583 = vld [vmem:[#allocation7 + $0x88] sm:$0xf]
    %v4584 = vld [vmem:[#allocation7 + $0x8c] sm:$0xf]
    %v4585 = vld [vmem:[#allocation7 + $0x90] sm:$0xf]
    %v4586 = vld [vmem:[#allocation7 + $0x94] sm:$0xf]
    %v4587 = vld [vmem:[#allocation7 + $0x98] sm:$0xf]
    %v4588 = vld [vmem:[#allocation7 + $0x9c] sm:$0xf]
    %v4589 = vld [vmem:[#allocation7 + $0xa0] sm:$0xf]
    %v4590 = vld [vmem:[#allocation7 + $0xa4] sm:$0xf]
    %v4591 = vld [vmem:[#allocation7 + $0xa8] sm:$0xf]
    %v4592 = vld [vmem:[#allocation7 + $0xac] sm:$0xf]
    %v4593 = vld [vmem:[#allocation7 + $0xb0] sm:$0xf]
    %v4594 = vld [vmem:[#allocation7 + $0xb4] sm:$0xf]
    %v4595 = vld [vmem:[#allocation7 + $0xb8] sm:$0xf]
    %v4596 = vld [vmem:[#allocation7 + $0xbc] sm:$0xf]
    %v4597 = vld [vmem:[#allocation7 + $0xc0] sm:$0xf]
    %v4598 = vld [vmem:[#allocation7 + $0xc4] sm:$0xf]
    %v4599 = vld [vmem:[#allocation7 + $0xc8] sm:$0xf]
    %v4600 = vld [vmem:[#allocation7 + $0xcc] sm:$0xf]
    %v4601 = vld [vmem:[#allocation7 + $0xd0] sm:$0xf]
    %v4602 = vld [vmem:[#allocation7 + $0xd4] sm:$0xf]
    %v4603 = vld [vmem:[#allocation7 + $0xd8] sm:$0xf]
    %v4604 = vld [vmem:[#allocation7 + $0xdc] sm:$0xf]
    %v4605 = vld [vmem:[#allocation7 + $0xe0] sm:$0xf]
    %v4606 = vld [vmem:[#allocation7 + $0xe4] sm:$0xf]
    %v4607 = vld [vmem:[#allocation7 + $0xe8] sm:$0xf]
    %v4608 = vld [vmem:[#allocation7 + $0xec] sm:$0xf]
    %v4609 = vld [vmem:[#allocation7 + $0xf0] sm:$0xf]
    %v4610 = vld [vmem:[#allocation7 + $0xf4] sm:$0xf]
    %v4611 = vld [vmem:[#allocation7 + $0xf8] sm:$0xf]
    %v4612 = vld [vmem:[#allocation7 + $0xfc] sm:$0xf]
    %v4645 = vunpack.c.l.b16 %v4581
    %v4646 = vunpack.c.l.b16 %v4582
    %v4647 = vunpack.c.l.b16 %v4583
    %v4648 = vunpack.c.l.b16 %v4584
    %v4649 = vunpack.c.l.b16 %v4585
    %v4650 = vunpack.c.l.b16 %v4586
    %v4651 = vunpack.c.l.b16 %v4587
    %v4652 = vunpack.c.l.b16 %v4588
    %v4653 = vunpack.c.l.b16 %v4589
    %v4654 = vunpack.c.l.b16 %v4590
    %v4655 = vunpack.c.l.b16 %v4591
    %v4656 = vunpack.c.l.b16 %v4592
    %v4657 = vunpack.c.l.b16 %v4593
    %v4658 = vunpack.c.l.b16 %v4594
    %v4659 = vunpack.c.l.b16 %v4595
    %v4660 = vunpack.c.l.b16 %v4596
    %v4661 = vunpack.c.l.b16 %v4597
    %v4662 = vunpack.c.l.b16 %v4598
    %v4663 = vunpack.c.l.b16 %v4599
    %v4664 = vunpack.c.l.b16 %v4600
    %v4665 = vunpack.c.l.b16 %v4601
    %v4666 = vunpack.c.l.b16 %v4602
    %v4667 = vunpack.c.l.b16 %v4603
    %v4668 = vunpack.c.l.b16 %v4604
    %v4669 = vunpack.c.l.b16 %v4605
    %v4670 = vunpack.c.l.b16 %v4606
    %v4671 = vunpack.c.l.b16 %v4607
    %v4672 = vunpack.c.l.b16 %v4608
    %v4673 = vunpack.c.l.b16 %v4609
    %v4674 = vunpack.c.l.b16 %v4610
    %v4675 = vunpack.c.l.b16 %v4611
    %v4676 = vunpack.c.l.b16 %v4612
    %v4677 = vpack.c.b16 %v4646, %v4645
    %v4678 = vpack.c.b16 %v4648, %v4647
    %v4679 = vpack.c.b16 %v4650, %v4649
    %v4680 = vpack.c.b16 %v4652, %v4651
    %v4681 = vpack.c.b16 %v4654, %v4653
    %v4682 = vpack.c.b16 %v4656, %v4655
    %v4683 = vpack.c.b16 %v4658, %v4657
    %v4684 = vpack.c.b16 %v4660, %v4659
    %v4685 = vpack.c.b16 %v4662, %v4661
    %v4686 = vpack.c.b16 %v4664, %v4663
    %v4687 = vpack.c.b16 %v4666, %v4665
    %v4688 = vpack.c.b16 %v4668, %v4667
    %v4689 = vpack.c.b16 %v4670, %v4669
    %v4690 = vpack.c.b16 %v4672, %v4671
    %v4691 = vpack.c.b16 %v4674, %v4673
    %v4692 = vpack.c.b16 %v4676, %v4675
    %4709 = vmatpush.bf16.msra.mxu0 %v4684
    %4710 = vmatpush.bf16.msra.mxu0 %v4683
    %4711 = vmatpush.bf16.msra.mxu0 %v4682
    %4712 = vmatpush.bf16.msra.mxu0 %v4681
    %4713 = vmatpush.bf16.msra.mxu0 %v4680
    %4714 = vmatpush.bf16.msra.mxu0 %v4679
    %4715 = vmatpush.bf16.msra.mxu0 %v4678
    %4716 = vmatpush.bf16.msra.mxu0 %v4677
    %4717 = vmatmul.bf16.gmra.mxu0 %v4579
    %v4718 = vpop.f32.mrf.mxu0
    %v4719 = vadd.f32 0.0, %v4718
    %v4720 = vpop.f32.mrf.mxu0
    %4721 = vdwg.mxu0
    %4722 = vmatpush.bf16.msra.mxu0 %v4692
    %4723 = vmatpush.bf16.msra.mxu0 %v4691
    %4724 = vmatpush.bf16.msra.mxu0 %v4690
    %4725 = vmatpush.bf16.msra.mxu0 %v4689
    %4726 = vmatpush.bf16.msra.mxu0 %v4688
    %4727 = vmatpush.bf16.msra.mxu0 %v4687
    %4728 = vmatpush.bf16.msra.mxu0 %v4686
    %4729 = vmatpush.bf16.msra.mxu0 %v4685
    %4730 = vmatmul.bf16.gmra.mxu0 %v4580
    %v4731 = vpop.f32.mrf.mxu0
    %v4732 = vadd.f32 %v4719, %v4731
    %v4733 = vpop.f32.mrf.mxu0
    %4734 = vdwg.mxu0
    %v4767 = vunpack.c.l.b16 %v4547
    %v4768 = vunpack.c.l.b16 %v4548
    %v4769 = vunpack.c.l.b16 %v4549
    %v4770 = vunpack.c.l.b16 %v4550
    %v4771 = vunpack.c.l.b16 %v4551
    %v4772 = vunpack.c.l.b16 %v4552
    %v4773 = vunpack.c.l.b16 %v4553
    %v4774 = vunpack.c.l.b16 %v4554
    %v4775 = vunpack.c.l.b16 %v4555
    %v4776 = vunpack.c.l.b16 %v4556
    %v4777 = vunpack.c.l.b16 %v4557
    %v4778 = vunpack.c.l.b16 %v4558
    %v4779 = vunpack.c.l.b16 %v4559
    %v4780 = vunpack.c.l.b16 %v4560
    %v4781 = vunpack.c.l.b16 %v4561
    %v4782 = vunpack.c.l.b16 %v4562
    %v4783 = vunpack.c.l.b16 %v4563
    %v4784 = vunpack.c.l.b16 %v4564
    %v4785 = vunpack.c.l.b16 %v4565
    %v4786 = vunpack.c.l.b16 %v4566
    %v4787 = vunpack.c.l.b16 %v4567
    %v4788 = vunpack.c.l.b16 %v4568
    %v4789 = vunpack.c.l.b16 %v4569
    %v4790 = vunpack.c.l.b16 %v4570
    %v4791 = vunpack.c.l.b16 %v4571
    %v4792 = vunpack.c.l.b16 %v4572
    %v4793 = vunpack.c.l.b16 %v4573
    %v4794 = vunpack.c.l.b16 %v4574
    %v4795 = vunpack.c.l.b16 %v4575
    %v4796 = vunpack.c.l.b16 %v4576
    %v4797 = vunpack.c.l.b16 %v4577
    %v4798 = vunpack.c.l.b16 %v4578
    %v4799 = vpack.c.b16 %v4768, %v4767
    %v4800 = vpack.c.b16 %v4770, %v4769
    %v4801 = vpack.c.b16 %v4772, %v4771
    %v4802 = vpack.c.b16 %v4774, %v4773
    %v4803 = vpack.c.b16 %v4776, %v4775
    %v4804 = vpack.c.b16 %v4778, %v4777
    %v4805 = vpack.c.b16 %v4780, %v4779
    %v4806 = vpack.c.b16 %v4782, %v4781
    %v4807 = vpack.c.b16 %v4784, %v4783
    %v4808 = vpack.c.b16 %v4786, %v4785
    %v4809 = vpack.c.b16 %v4788, %v4787
    %v4810 = vpack.c.b16 %v4790, %v4789
    %v4811 = vpack.c.b16 %v4792, %v4791
    %v4812 = vpack.c.b16 %v4794, %v4793
    %v4813 = vpack.c.b16 %v4796, %v4795
    %v4814 = vpack.c.b16 %v4798, %v4797
    %4831 = vmatpush.bf16.msra.mxu0 %v4806
    %4832 = vmatpush.bf16.msra.mxu0 %v4805
    %4833 = vmatpush.bf16.msra.mxu0 %v4804
    %4834 = vmatpush.bf16.msra.mxu0 %v4803
    %4835 = vmatpush.bf16.msra.mxu0 %v4802
    %4836 = vmatpush.bf16.msra.mxu0 %v4801
    %4837 = vmatpush.bf16.msra.mxu0 %v4800
    %4838 = vmatpush.bf16.msra.mxu0 %v4799
    %4839 = vmatmul.bf16.gmra.mxu0 %v4545
    %v4840 = vpop.f32.mrf.mxu0
    %v4841 = vadd.f32 %v4732, %v4840
    %v4842 = vpop.f32.mrf.mxu0
    %4843 = vdwg.mxu0
    %4844 = vmatpush.bf16.msra.mxu0 %v4814
    %4845 = vmatpush.bf16.msra.mxu0 %v4813
    %4846 = vmatpush.bf16.msra.mxu0 %v4812
    %4847 = vmatpush.bf16.msra.mxu0 %v4811
    %4848 = vmatpush.bf16.msra.mxu0 %v4810
    %4849 = vmatpush.bf16.msra.mxu0 %v4809
    %4850 = vmatpush.bf16.msra.mxu0 %v4808
    %4851 = vmatpush.bf16.msra.mxu0 %v4807
    %4852 = vmatmul.bf16.gmra.mxu0 %v4546
    %v4853 = vpop.f32.mrf.mxu0
    %v4854 = vadd.f32 %v4841, %v4853
    %v4855 = vpop.f32.mrf.mxu0
    %4856 = vdwg.mxu0
    %v4857 = vpack.c.bf16 %v4522, %v4522
    %v4858 = vpack.c.bf16 %v4541, %v4541
    %v4859 = vld [vmem:[#allocation7 + $0x100] sm:$0xf]
    %v4860 = vld [vmem:[#allocation7 + $0x104] sm:$0xf]
    %v4861 = vld [vmem:[#allocation7 + $0x108] sm:$0xf]
    %v4862 = vld [vmem:[#allocation7 + $0x10c] sm:$0xf]
    %v4863 = vld [vmem:[#allocation7 + $0x110] sm:$0xf]
    %v4864 = vld [vmem:[#allocation7 + $0x114] sm:$0xf]
    %v4865 = vld [vmem:[#allocation7 + $0x118] sm:$0xf]
    %v4866 = vld [vmem:[#allocation7 + $0x11c] sm:$0xf]
    %v4867 = vld [vmem:[#allocation7 + $0x120] sm:$0xf]
    %v4868 = vld [vmem:[#allocation7 + $0x124] sm:$0xf]
    %v4869 = vld [vmem:[#allocation7 + $0x128] sm:$0xf]
    %v4870 = vld [vmem:[#allocation7 + $0x12c] sm:$0xf]
    %v4871 = vld [vmem:[#allocation7 + $0x130] sm:$0xf]
    %v4872 = vld [vmem:[#allocation7 + $0x134] sm:$0xf]
    %v4873 = vld [vmem:[#allocation7 + $0x138] sm:$0xf]
    %v4874 = vld [vmem:[#allocation7 + $0x13c] sm:$0xf]
    %v4875 = vld [vmem:[#allocation7 + $0x140] sm:$0xf]
    %v4876 = vld [vmem:[#allocation7 + $0x144] sm:$0xf]
    %v4877 = vld [vmem:[#allocation7 + $0x148] sm:$0xf]
    %v4878 = vld [vmem:[#allocation7 + $0x14c] sm:$0xf]
    %v4879 = vld [vmem:[#allocation7 + $0x150] sm:$0xf]
    %v4880 = vld [vmem:[#allocation7 + $0x154] sm:$0xf]
    %v4881 = vld [vmem:[#allocation7 + $0x158] sm:$0xf]
    %v4882 = vld [vmem:[#allocation7 + $0x15c] sm:$0xf]
    %v4883 = vld [vmem:[#allocation7 + $0x160] sm:$0xf]
    %v4884 = vld [vmem:[#allocation7 + $0x164] sm:$0xf]
    %v4885 = vld [vmem:[#allocation7 + $0x168] sm:$0xf]
    %v4886 = vld [vmem:[#allocation7 + $0x16c] sm:$0xf]
    %v4887 = vld [vmem:[#allocation7 + $0x170] sm:$0xf]
    %v4888 = vld [vmem:[#allocation7 + $0x174] sm:$0xf]
    %v4889 = vld [vmem:[#allocation7 + $0x178] sm:$0xf]
    %v4890 = vld [vmem:[#allocation7 + $0x17c] sm:$0xf]
    %v4923 = vunpack.c.l.b16 %v4859
    %v4924 = vunpack.c.l.b16 %v4860
    %v4925 = vunpack.c.l.b16 %v4861
    %v4926 = vunpack.c.l.b16 %v4862
    %v4927 = vunpack.c.l.b16 %v4863
    %v4928 = vunpack.c.l.b16 %v4864
    %v4929 = vunpack.c.l.b16 %v4865
    %v4930 = vunpack.c.l.b16 %v4866
    %v4931 = vunpack.c.l.b16 %v4867
    %v4932 = vunpack.c.l.b16 %v4868
    %v4933 = vunpack.c.l.b16 %v4869
    %v4934 = vunpack.c.l.b16 %v4870
    %v4935 = vunpack.c.l.b16 %v4871
    %v4936 = vunpack.c.l.b16 %v4872
    %v4937 = vunpack.c.l.b16 %v4873
    %v4938 = vunpack.c.l.b16 %v4874
    %v4939 = vunpack.c.l.b16 %v4875
    %v4940 = vunpack.c.l.b16 %v4876
    %v4941 = vunpack.c.l.b16 %v4877
    %v4942 = vunpack.c.l.b16 %v4878
    %v4943 = vunpack.c.l.b16 %v4879
    %v4944 = vunpack.c.l.b16 %v4880
    %v4945 = vunpack.c.l.b16 %v4881
    %v4946 = vunpack.c.l.b16 %v4882
    %v4947 = vunpack.c.l.b16 %v4883
    %v4948 = vunpack.c.l.b16 %v4884
    %v4949 = vunpack.c.l.b16 %v4885
    %v4950 = vunpack.c.l.b16 %v4886
    %v4951 = vunpack.c.l.b16 %v4887
    %v4952 = vunpack.c.l.b16 %v4888
    %v4953 = vunpack.c.l.b16 %v4889
    %v4954 = vunpack.c.l.b16 %v4890
    %v4955 = vpack.c.b16 %v4924, %v4923
    %v4956 = vpack.c.b16 %v4926, %v4925
    %v4957 = vpack.c.b16 %v4928, %v4927
    %v4958 = vpack.c.b16 %v4930, %v4929
    %v4959 = vpack.c.b16 %v4932, %v4931
    %v4960 = vpack.c.b16 %v4934, %v4933
    %v4961 = vpack.c.b16 %v4936, %v4935
    %v4962 = vpack.c.b16 %v4938, %v4937
    %v4963 = vpack.c.b16 %v4940, %v4939
    %v4964 = vpack.c.b16 %v4942, %v4941
    %v4965 = vpack.c.b16 %v4944, %v4943
    %v4966 = vpack.c.b16 %v4946, %v4945
    %v4967 = vpack.c.b16 %v4948, %v4947
    %v4968 = vpack.c.b16 %v4950, %v4949
    %v4969 = vpack.c.b16 %v4952, %v4951
    %v4970 = vpack.c.b16 %v4954, %v4953
    %4987 = vmatpush.bf16.msra.mxu0 %v4962
    %4988 = vmatpush.bf16.msra.mxu0 %v4961
    %4989 = vmatpush.bf16.msra.mxu0 %v4960
    %4990 = vmatpush.bf16.msra.mxu0 %v4959
    %4991 = vmatpush.bf16.msra.mxu0 %v4958
    %4992 = vmatpush.bf16.msra.mxu0 %v4957
    %4993 = vmatpush.bf16.msra.mxu0 %v4956
    %4994 = vmatpush.bf16.msra.mxu0 %v4955
    %4995 = vmatmul.bf16.gmra.mxu0 %v4857
    %v4996 = vpop.f32.mrf.mxu0
    %v4997 = vadd.f32 0.0, %v4996
    %v4998 = vpop.f32.mrf.mxu0
    %4999 = vdwg.mxu0
    %5000 = vmatpush.bf16.msra.mxu0 %v4970
    %5001 = vmatpush.bf16.msra.mxu0 %v4969
    %5002 = vmatpush.bf16.msra.mxu0 %v4968
    %5003 = vmatpush.bf16.msra.mxu0 %v4967
    %5004 = vmatpush.bf16.msra.mxu0 %v4966
    %5005 = vmatpush.bf16.msra.mxu0 %v4965
    %5006 = vmatpush.bf16.msra.mxu0 %v4964
    %5007 = vmatpush.bf16.msra.mxu0 %v4963
    %5008 = vmatmul.bf16.gmra.mxu0 %v4858
    %v5009 = vpop.f32.mrf.mxu0
    %v5010 = vadd.f32 %v4997, %v5009
    %v5011 = vpop.f32.mrf.mxu0
    %5012 = vdwg.mxu0
    %v5013 = vadd.f32 %v4854, %v5010
    %v5014 = vpack.c.bf16 %v4524, %v4524
    %v5015 = vpack.c.bf16 %v4543, %v4543
    %v5016 = vld [vmem:[#allocation7 + $0x180] sm:$0xf]
    %v5017 = vld [vmem:[#allocation7 + $0x184] sm:$0xf]
    %v5018 = vld [vmem:[#allocation7 + $0x188] sm:$0xf]
    %v5019 = vld [vmem:[#allocation7 + $0x18c] sm:$0xf]
    %v5020 = vld [vmem:[#allocation7 + $0x190] sm:$0xf]
    %v5021 = vld [vmem:[#allocation7 + $0x194] sm:$0xf]
    %v5022 = vld [vmem:[#allocation7 + $0x198] sm:$0xf]
    %v5023 = vld [vmem:[#allocation7 + $0x19c] sm:$0xf]
    %v5024 = vld [vmem:[#allocation7 + $0x1a0] sm:$0xf]
    %v5025 = vld [vmem:[#allocation7 + $0x1a4] sm:$0xf]
    %v5026 = vld [vmem:[#allocation7 + $0x1a8] sm:$0xf]
    %v5027 = vld [vmem:[#allocation7 + $0x1ac] sm:$0xf]
    %v5028 = vld [vmem:[#allocation7 + $0x1b0] sm:$0xf]
    %v5029 = vld [vmem:[#allocation7 + $0x1b4] sm:$0xf]
    %v5030 = vld [vmem:[#allocation7 + $0x1b8] sm:$0xf]
    %v5031 = vld [vmem:[#allocation7 + $0x1bc] sm:$0xf]
    %v5032 = vld [vmem:[#allocation7 + $0x1c0] sm:$0xf]
    %v5033 = vld [vmem:[#allocation7 + $0x1c4] sm:$0xf]
    %v5034 = vld [vmem:[#allocation7 + $0x1c8] sm:$0xf]
    %v5035 = vld [vmem:[#allocation7 + $0x1cc] sm:$0xf]
    %v5036 = vld [vmem:[#allocation7 + $0x1d0] sm:$0xf]
    %v5037 = vld [vmem:[#allocation7 + $0x1d4] sm:$0xf]
    %v5038 = vld [vmem:[#allocation7 + $0x1d8] sm:$0xf]
    %v5039 = vld [vmem:[#allocation7 + $0x1dc] sm:$0xf]
    %v5040 = vld [vmem:[#allocation7 + $0x1e0] sm:$0xf]
    %v5041 = vld [vmem:[#allocation7 + $0x1e4] sm:$0xf]
    %v5042 = vld [vmem:[#allocation7 + $0x1e8] sm:$0xf]
    %v5043 = vld [vmem:[#allocation7 + $0x1ec] sm:$0xf]
    %v5044 = vld [vmem:[#allocation7 + $0x1f0] sm:$0xf]
    %v5045 = vld [vmem:[#allocation7 + $0x1f4] sm:$0xf]
    %v5046 = vld [vmem:[#allocation7 + $0x1f8] sm:$0xf]
    %v5047 = vld [vmem:[#allocation7 + $0x1fc] sm:$0xf]
    %v5080 = vunpack.c.l.b16 %v5016
    %v5081 = vunpack.c.l.b16 %v5017
    %v5082 = vunpack.c.l.b16 %v5018
    %v5083 = vunpack.c.l.b16 %v5019
    %v5084 = vunpack.c.l.b16 %v5020
    %v5085 = vunpack.c.l.b16 %v5021
    %v5086 = vunpack.c.l.b16 %v5022
    %v5087 = vunpack.c.l.b16 %v5023
    %v5088 = vunpack.c.l.b16 %v5024
    %v5089 = vunpack.c.l.b16 %v5025
    %v5090 = vunpack.c.l.b16 %v5026
    %v5091 = vunpack.c.l.b16 %v5027
    %v5092 = vunpack.c.l.b16 %v5028
    %v5093 = vunpack.c.l.b16 %v5029
    %v5094 = vunpack.c.l.b16 %v5030
    %v5095 = vunpack.c.l.b16 %v5031
    %v5096 = vunpack.c.l.b16 %v5032
    %v5097 = vunpack.c.l.b16 %v5033
    %v5098 = vunpack.c.l.b16 %v5034
    %v5099 = vunpack.c.l.b16 %v5035
    %v5100 = vunpack.c.l.b16 %v5036
    %v5101 = vunpack.c.l.b16 %v5037
    %v5102 = vunpack.c.l.b16 %v5038
    %v5103 = vunpack.c.l.b16 %v5039
    %v5104 = vunpack.c.l.b16 %v5040
    %v5105 = vunpack.c.l.b16 %v5041
    %v5106 = vunpack.c.l.b16 %v5042
    %v5107 = vunpack.c.l.b16 %v5043
    %v5108 = vunpack.c.l.b16 %v5044
    %v5109 = vunpack.c.l.b16 %v5045
    %v5110 = vunpack.c.l.b16 %v5046
    %v5111 = vunpack.c.l.b16 %v5047
    %v5112 = vpack.c.b16 %v5081, %v5080
    %v5113 = vpack.c.b16 %v5083, %v5082
    %v5114 = vpack.c.b16 %v5085, %v5084
    %v5115 = vpack.c.b16 %v5087, %v5086
    %v5116 = vpack.c.b16 %v5089, %v5088
    %v5117 = vpack.c.b16 %v5091, %v5090
    %v5118 = vpack.c.b16 %v5093, %v5092
    %v5119 = vpack.c.b16 %v5095, %v5094
    %v5120 = vpack.c.b16 %v5097, %v5096
    %v5121 = vpack.c.b16 %v5099, %v5098
    %v5122 = vpack.c.b16 %v5101, %v5100
    %v5123 = vpack.c.b16 %v5103, %v5102
    %v5124 = vpack.c.b16 %v5105, %v5104
    %v5125 = vpack.c.b16 %v5107, %v5106
    %v5126 = vpack.c.b16 %v5109, %v5108
    %v5127 = vpack.c.b16 %v5111, %v5110
    %5144 = vmatpush.bf16.msra.mxu0 %v5119
    %5145 = vmatpush.bf16.msra.mxu0 %v5118
    %5146 = vmatpush.bf16.msra.mxu0 %v5117
    %5147 = vmatpush.bf16.msra.mxu0 %v5116
    %5148 = vmatpush.bf16.msra.mxu0 %v5115
    %5149 = vmatpush.bf16.msra.mxu0 %v5114
    %5150 = vmatpush.bf16.msra.mxu0 %v5113
    %5151 = vmatpush.bf16.msra.mxu0 %v5112
    %5152 = vmatmul.bf16.gmra.mxu0 %v5014
    %v5153 = vpop.f32.mrf.mxu0
    %v5154 = vadd.f32 0.0, %v5153
    %v5155 = vpop.f32.mrf.mxu0
    %5156 = vdwg.mxu0
    %5157 = vmatpush.bf16.msra.mxu0 %v5127
    %5158 = vmatpush.bf16.msra.mxu0 %v5126
    %5159 = vmatpush.bf16.msra.mxu0 %v5125
    %5160 = vmatpush.bf16.msra.mxu0 %v5124
    %5161 = vmatpush.bf16.msra.mxu0 %v5123
    %5162 = vmatpush.bf16.msra.mxu0 %v5122
    %5163 = vmatpush.bf16.msra.mxu0 %v5121
    %5164 = vmatpush.bf16.msra.mxu0 %v5120
    %5165 = vmatmul.bf16.gmra.mxu0 %v5015
    %v5166 = vpop.f32.mrf.mxu0
    %v5167 = vadd.f32 %v5154, %v5166
    %v5168 = vpop.f32.mrf.mxu0
    %5169 = vdwg.mxu0
    %v5170 = vadd.f32 %v5013, %v5167
    %5171 = vst [vmem:[%s13] sm:$0xff] %v5170
    // Predicated region
    $region70: #{_lambda_.1} parent=1 // pred_check
      _
    $region71: #{_lambda_.1} parent=1 // pred_check_branch
      %5173 = sbr.rel (0) target = $region73
    $region72: #{_lambda_.1} parent=1 // pred_region
      _
    $region73: #{_lambda_.1} parent=1 // pred_fallthru
      _
    // Predicated region
    $region74: #{_lambda_.1} parent=1 // pred_check
      _
    $region75: #{_lambda_.1} parent=1 // pred_check_branch
      %5175 = sbr.rel (0) target = $region77
    $region76: #{_lambda_.1} parent=1 // pred_region
      _
    $region77: #{_lambda_.1} parent=1 // pred_fallthru
      _
    %5176 = vsyncpa [#allocation3], 1
    %5177 = vsyncpa [#allocation5], 1
    %5178 = vsyncpa [#allocation8], 1

</llo_original>
